<compile_context>
chip_gen: v5e
topology: v5e:2x2
jax: 0.10.0
libtpu: 0.0.40
codegen_flags: <defaults>
</compile_context>

<pallas_src>
import functools

import jax
import jax.numpy as jnp
import numpy as np
from jax import lax
from jax.experimental import pallas as pl
from jax.experimental.pallas import tpu as pltpu

GROUP_SIZE = 16          # GroupNorm uses out_channels/16 groups -> 16 ch/group
GN_EPS = 1e-5


def _erf(x):
    # Abramowitz & Stegun 7.1.26 rational approximation (|err| < 1.5e-7).
    a1, a2, a3, a4, a5 = 0.254829592, -0.284496736, 1.421413741, -1.453152027, 1.061405429
    p = 0.3275911
    sign = jnp.where(x >= 0.0, 1.0, -1.0)
    ax = jnp.abs(x)
    t = 1.0 / (1.0 + p * ax)
    poly = ((((a5 * t + a4) * t + a3) * t + a2) * t + a1) * t
    return sign * (1.0 - poly * jnp.exp(-ax * ax))


def _gelu(x, exact):
    if exact:
        # PyTorch nn.GELU() default (erf form) -- f32 parity path.
        return 0.5 * x * (1.0 + _erf(x * 0.7071067811865476))
    # tanh-form GELU: 1 EUP tanh + a few VPU FMAs (bf16 perf path; |err|~1e-3).
    c = 0.7978845608028654  # sqrt(2/pi)
    return 0.5 * x * (1.0 + jnp.tanh(c * (x + 0.044715 * (x * x * x))))


def _conv_kernel(x_ref, wc_ref, mask_ref, params_ref, out_ref, *, W, exact_gelu):
    """Processes `bs` samples per grid step (transposed, lane-dense layout).

    x_ref      : (bs, Cin, H*W)   channels on sublanes, H*W on lanes
    wc_ref     : (9, Cout, Cin)   fused depthwise*pointwise weight, per tap
    mask_ref   : (9, 1, H*W)      per-tap boundary mask (zero-padding of SAME conv)
    params_ref : (Cout, 3)        packed [pointwise bias, GN gamma, GN beta]
    out_ref    : (bs, Cout, H*W)  == flattened NCHW output
    """
    bs, Cin, HW = x_ref.shape
    Cout = out_ref.shape[1]
    cs = GROUP_SIZE
    G = Cout // cs
    inv_n = 1.0 / float(cs * HW)

    p = params_ref[...].astype(jnp.float32)            # (Cout, 3)
    bias_g = p[:, 0:1].reshape(G, cs, 1)
    gamma_g = p[:, 1:2].reshape(G, cs, 1)
    beta_g = p[:, 2:3].reshape(G, cs, 1)

    for b in range(bs):
        x = x_ref[b]                                    # (Cin, HW)

        # ---- fused depthwise(3x3,same) + pointwise(1x1) -------------------
        # 9 accumulating K=Cin matmuls; each tap = one XLU roll + one masked
        # multiply (only one tap live at a time).
        acc = None
        for k in range(9):
            ky, kx = k // 3, k % 3
            delta = (ky - 1) * W + (kx - 1)             # flat lane shift
            if delta == 0:
                tap = x                                 # center tap, mask == 1
            else:
                tap = pltpu.roll(x, shift=(-delta) % HW, axis=1) * mask_ref[k]
            part = jnp.dot(wc_ref[k], tap, preferred_element_type=jnp.float32)
            acc = part if acc is None else acc + part   # (Cout, HW) f32

        # ---- GroupNorm (bias folded into the mean offset) + affine + GELU --
        acc_g = acc.reshape(G, cs, HW)
        s1 = jnp.sum(acc_g, axis=2, keepdims=True)                     # (G,cs,1)
        # mean of y = acc + bias  ->  sum(acc) + HW*bias per channel
        mu = jnp.sum(s1 + float(HW) * bias_g, axis=1, keepdims=True) * inv_n  # (G,1,1)
        d = acc_g - (mu - bias_g)                                      # (y - mu)
        s2 = jnp.sum(d * d, axis=2, keepdims=True)                     # (G,cs,1)
        var = jnp.sum(s2, axis=1, keepdims=True) * inv_n               # (G,1,1)
        z = (d * (lax.rsqrt(var + GN_EPS) * gamma_g) + beta_g).reshape(Cout, HW)

        out_ref[b] = _gelu(z, exact_gelu).astype(out_ref.dtype)        # lane-dense store


def _build_tap_masks(H, W, dtype):
    """(9, 1, H*W) validity masks for the 9 taps of a 3x3 SAME conv."""
    HW = H * W
    idx = np.arange(HW)
    row, col = idx // W, idx % W
    masks = np.ones((9, 1, HW), np.float32)
    for k in range(9):
        dy, dx = k // 3 - 1, k % 3 - 1
        valid = np.ones(HW, bool)
        if dy == -1:
            valid &= row >= 1
        elif dy == 1:
            valid &= row <= H - 2
        if dx == -1:
            valid &= col >= 1
        elif dx == 1:
            valid &= col <= W - 2
        masks[k, 0] = valid.astype(np.float32)
    return jnp.asarray(masks, dtype=dtype)


def _pick_num_steps(batch):
    """Single-TC chips (v5e/v6e): one grid step for the whole batch.
    Dual-TC chips (v7x etc.): up to 2 'parallel' steps (one per TensorCore)."""
    try:
        kind = jax.devices()[0].device_kind.lower()
    except Exception:
        kind = ""
    single_tc = any(t in kind for t in
                    ("v5e", "v5 lite", "v5lite", "v6e", "v6 lite", "v6lite"))
    steps = 1 if single_tc else min(batch, 2)
    while steps > 1 and batch % steps:
        steps -= 1
    return max(steps, 1)


@functools.partial(jax.jit,
                   static_argnames=("compute_dtype", "num_steps", "out_dtype"))
def _conv_forward_impl(x_nchw, w_dw, w_pw, b_pw, gamma, beta, *,
                       compute_dtype, num_steps, out_dtype):
    B, Cin, H, W = x_nchw.shape
    Cout = w_pw.shape[0]
    HW = H * W
    bs = B // num_steps

    # NCHW flattened over space; H*W goes on the TPU lane axis (no transpose).
    x_flat = x_nchw.reshape(B, Cin, HW).astype(compute_dtype)

    # Fused per-tap weight: wc[k, o, c] = w_dw[c, k] * w_pw[o, c].
    w_dw_kc = w_dw.reshape(Cin, 9)                      # (Cin, 9), tap k = ky*3+kx
    w_pw_oc = w_pw.reshape(Cout, Cin)                   # (Cout, Cin)
    wc = (jnp.transpose(w_dw_kc)[:, None, :] * w_pw_oc[None, :, :]
          ).astype(compute_dtype)                       # (9, Cout, Cin)

    masks = _build_tap_masks(H, W, compute_dtype)       # (9, 1, HW) constant
    params = jnp.stack([b_pw, gamma, beta], axis=1).astype(jnp.float32)  # (Cout, 3)

    exact_gelu = np.dtype(compute_dtype) == np.dtype(jnp.float32)
    kernel = functools.partial(_conv_kernel, W=W, exact_gelu=exact_gelu)

    out_flat = pl.pallas_call(
        kernel,
        out_shape=jax.ShapeDtypeStruct((B, Cout, HW), out_dtype),
        grid_spec=pl.GridSpec(
            grid=(num_steps,),
            in_specs=[
                pl.BlockSpec((bs, Cin, HW), lambda s: (s, 0, 0)),
                pl.BlockSpec((9, Cout, Cin), lambda s: (0, 0, 0)),
                pl.BlockSpec((9, 1, HW), lambda s: (0, 0, 0)),
                pl.BlockSpec((Cout, 3), lambda s: (0, 0)),
            ],
            out_specs=pl.BlockSpec((bs, Cout, HW), lambda s: (s, 0, 0)),
        ),
        compiler_params=pltpu.CompilerParams(
            dimension_semantics=("parallel",)),
    )(x_flat, wc, masks, params)

    # (B, Cout, H*W) is already NCHW up to a free reshape.
    return out_flat.reshape(B, Cout, H, W)


def conv_forward(x_nchw, w_dw, w_pw, b_pw, gamma, beta,
                 compute_dtype=jnp.bfloat16, num_steps=None,
                 out_dtype=jnp.float32):
    """x_nchw: (B, Cin, H, W); returns (B, Cout, H, W) matching PyTorch."""
    if num_steps is None:
        num_steps = _pick_num_steps(x_nchw.shape[0])
    return _conv_forward_impl(x_nchw, w_dw, w_pw, b_pw, gamma, beta,
                              compute_dtype=compute_dtype,
                              num_steps=int(num_steps), out_dtype=out_dtype)


def _reference(x_nchw, w_dw, w_pw, b_pw, gamma, beta):
    """Pure-JAX reference mirroring the PyTorch module (NCHW in/out)."""
    B, Cin, H, W = x_nchw.shape
    Cout = w_pw.shape[0]
    cs = GROUP_SIZE
    G = Cout // cs

    x = jnp.transpose(x_nchw, (0, 2, 3, 1))
    w_hwio = jnp.transpose(w_dw, (2, 3, 1, 0))                 # (3,3,1,Cin)
    dw = lax.conv_general_dilated(
        x, w_hwio, window_strides=(1, 1), padding=((1, 1), (1, 1)),
        dimension_numbers=("NHWC", "HWIO", "NHWC"),
        feature_group_count=Cin)
    pw = jnp.einsum("bhwc,oc->bhwo", dw, w_pw.reshape(Cout, Cin)) + b_pw

    r = pw.reshape(B, H, W, G, cs)
    mu = r.mean(axis=(1, 2, 4), keepdims=True)
    var = ((r - mu) ** 2).mean(axis=(1, 2, 4), keepdims=True)
    rn = ((r - mu) * lax.rsqrt(var + GN_EPS)).reshape(B, H, W, Cout)
    rn = rn * gamma + beta
    out = jax.nn.gelu(rn, approximate=False)
    return jnp.transpose(out, (0, 3, 1, 2))


if __name__ == "__main__":
    B, Cin, Cout, H, W = 2, 16, 32, 16, 16

    key = jax.random.PRNGKey(0)
    kx_, k1, k2, k3, k4, k5 = jax.random.split(key, 6)

    x = jax.random.normal(kx_, (B, Cin, H, W), jnp.float32)
    w_dw = jax.random.normal(k1, (Cin, 1, 3, 3), jnp.float32) * 0.3   # depthwise, bias=False
    w_pw = jax.random.normal(k2, (Cout, Cin, 1, 1), jnp.float32) * 0.3
    b_pw = jax.random.normal(k3, (Cout,), jnp.float32) * 0.1
    gamma = 1.0 + jax.random.normal(k4, (Cout,), jnp.float32) * 0.1   # GroupNorm weight
    beta = jax.random.normal(k5, (Cout,), jnp.float32) * 0.1          # GroupNorm bias

    ref = jax.block_until_ready(_reference(x, w_dw, w_pw, b_pw, gamma, beta))

    # f32 compute path (exact erf GELU), both grid layouts:
    #   num_steps=1 -> whole batch in one step (v5e/v6e style)
    #   num_steps=2 -> one sample per parallel step (v7x style)
    for steps in (1, 2):
        out_f32 = jax.block_until_ready(
            conv_forward(x, w_dw, w_pw, b_pw, gamma, beta,
                         compute_dtype=jnp.float32, num_steps=steps))
        np.testing.assert_allclose(np.asarray(out_f32), np.asarray(ref),
                                   rtol=1e-4, atol=1e-4)

    # bf16 MXU perf path (tanh GELU on EUP), step count auto-picked for this chip.
    out_bf16 = jax.block_until_ready(
        conv_forward(x, w_dw, w_pw, b_pw, gamma, beta))
    np.testing.assert_allclose(np.asarray(out_bf16), np.asarray(ref),
                               rtol=2e-2, atol=2e-2)

    print("KERNEL_OK")
</pallas_src>

<mosaic_0001>
module attributes {stable_mosaic.version = 11 : i64} {
  func.func @_conv_kernel(%arg0: i32, %arg1: memref<2x16x256xf32, #tpu.memory_space<vmem>>, %arg2: memref<9x32x16xf32, #tpu.memory_space<vmem>>, %arg3: memref<9x1x256xf32, #tpu.memory_space<vmem>>, %arg4: memref<32x3xf32, #tpu.memory_space<vmem>>, %arg5: memref<2x32x256xf32, #tpu.memory_space<vmem>>) attributes {dimension_semantics = [#tpu.dimension_semantics<parallel>], iteration_bounds = array<i64: 1>, scalar_prefetch = 0 : i64, scratch_operands = 0 : i64, tpu.core_type = #tpu.core_type<tc>, window_params = [{transform_indices = @transform_0, window_bounds = array<i64: 2, 16, 256>}, {pipeline_mode = #tpu.pipeline_mode<synchronous>, transform_indices = @transform_1, window_bounds = array<i64: 9, 32, 16>}, {pipeline_mode = #tpu.pipeline_mode<synchronous>, transform_indices = @transform_2, window_bounds = array<i64: 9, 1, 256>}, {pipeline_mode = #tpu.pipeline_mode<synchronous>, transform_indices = @transform_3, window_bounds = array<i64: 32, 3>}, {transform_indices = @transform_4, window_bounds = array<i64: 2, 32, 256>}]} {
    %c0 = arith.constant 0 : index
    %c0_0 = arith.constant 0 : index
    %0 = vector.load %arg4[%c0, %c0_0] : memref<32x3xf32, #tpu.memory_space<vmem>>, vector<32x3xf32>
    %1 = vector.extract_strided_slice %0 {offsets = [0, 0], sizes = [32, 1], strides = [1, 1]} : vector<32x3xf32> to vector<32x1xf32>
    %2 = vector.shape_cast %1 : vector<32x1xf32> to vector<2x16x1xf32>
    %3 = vector.extract_strided_slice %0 {offsets = [0, 1], sizes = [32, 1], strides = [1, 1]} : vector<32x3xf32> to vector<32x1xf32>
    %4 = vector.shape_cast %3 : vector<32x1xf32> to vector<2x16x1xf32>
    %5 = vector.extract_strided_slice %0 {offsets = [0, 2], sizes = [32, 1], strides = [1, 1]} : vector<32x3xf32> to vector<32x1xf32>
    %6 = vector.shape_cast %5 : vector<32x1xf32> to vector<2x16x1xf32>
    %c0_1 = arith.constant 0 : index
    %c0_2 = arith.constant 0 : index
    %c0_3 = arith.constant 0 : index
    %7 = vector.load %arg1[%c0_1, %c0_2, %c0_3] : memref<2x16x256xf32, #tpu.memory_space<vmem>>, vector<1x16x256xf32>
    %8 = vector.shape_cast %7 : vector<1x16x256xf32> to vector<16x256xf32>
    %c17_i32 = arith.constant 17 : i32
    %9 = tpu.dynamic_rotate %8 by %c17_i32 dim 1 : vector<16x256xf32>, i32 -> vector<16x256xf32>
    %c0_4 = arith.constant 0 : index
    %c0_5 = arith.constant 0 : index
    %c0_6 = arith.constant 0 : index
    %10 = vector.load %arg3[%c0_4, %c0_5, %c0_6] : memref<9x1x256xf32, #tpu.memory_space<vmem>>, vector<1x1x256xf32>
    %11 = vector.shape_cast %10 : vector<1x1x256xf32> to vector<1x256xf32>
    %12 = vector.broadcast %11 : vector<1x256xf32> to vector<16x256xf32>
    %13 = arith.mulf %9, %12 : vector<16x256xf32>
    %c0_7 = arith.constant 0 : index
    %c0_8 = arith.constant 0 : index
    %c0_9 = arith.constant 0 : index
    %14 = vector.load %arg2[%c0_7, %c0_8, %c0_9] : memref<9x32x16xf32, #tpu.memory_space<vmem>>, vector<1x32x16xf32>
    %15 = vector.shape_cast %14 : vector<1x32x16xf32> to vector<32x16xf32>
    %cst = arith.constant dense<0.000000e+00> : vector<32x256xf32>
    %16 = tpu.matmul %15, %13, %cst {dimension_numbers = #tpu.dot_dimension_numbers<[1], [0], [0], [1], [0, 0, 1, 1], [], []>} : vector<32x16xf32>, vector<16x256xf32>, vector<32x256xf32> -> vector<32x256xf32>
    %c16_i32 = arith.constant 16 : i32
    %17 = tpu.dynamic_rotate %8 by %c16_i32 dim 1 : vector<16x256xf32>, i32 -> vector<16x256xf32>
    %c1 = arith.constant 1 : index
    %c0_10 = arith.constant 0 : index
    %c0_11 = arith.constant 0 : index
    %18 = vector.load %arg3[%c1, %c0_10, %c0_11] : memref<9x1x256xf32, #tpu.memory_space<vmem>>, vector<1x1x256xf32>
    %19 = vector.shape_cast %18 : vector<1x1x256xf32> to vector<1x256xf32>
    %20 = vector.broadcast %19 : vector<1x256xf32> to vector<16x256xf32>
    %21 = arith.mulf %17, %20 : vector<16x256xf32>
    %c1_12 = arith.constant 1 : index
    %c0_13 = arith.constant 0 : index
    %c0_14 = arith.constant 0 : index
    %22 = vector.load %arg2[%c1_12, %c0_13, %c0_14] : memref<9x32x16xf32, #tpu.memory_space<vmem>>, vector<1x32x16xf32>
    %23 = vector.shape_cast %22 : vector<1x32x16xf32> to vector<32x16xf32>
    %cst_15 = arith.constant dense<0.000000e+00> : vector<32x256xf32>
    %24 = tpu.matmul %23, %21, %cst_15 {dimension_numbers = #tpu.dot_dimension_numbers<[1], [0], [0], [1], [0, 0, 1, 1], [], []>} : vector<32x16xf32>, vector<16x256xf32>, vector<32x256xf32> -> vector<32x256xf32>
    %25 = arith.addf %16, %24 : vector<32x256xf32>
    %c15_i32 = arith.constant 15 : i32
    %26 = tpu.dynamic_rotate %8 by %c15_i32 dim 1 : vector<16x256xf32>, i32 -> vector<16x256xf32>
    %c2 = arith.constant 2 : index
    %c0_16 = arith.constant 0 : index
    %c0_17 = arith.constant 0 : index
    %27 = vector.load %arg3[%c2, %c0_16, %c0_17] : memref<9x1x256xf32, #tpu.memory_space<vmem>>, vector<1x1x256xf32>
    %28 = vector.shape_cast %27 : vector<1x1x256xf32> to vector<1x256xf32>
    %29 = vector.broadcast %28 : vector<1x256xf32> to vector<16x256xf32>
    %30 = arith.mulf %26, %29 : vector<16x256xf32>
    %c2_18 = arith.constant 2 : index
    %c0_19 = arith.constant 0 : index
    %c0_20 = arith.constant 0 : index
    %31 = vector.load %arg2[%c2_18, %c0_19, %c0_20] : memref<9x32x16xf32, #tpu.memory_space<vmem>>, vector<1x32x16xf32>
    %32 = vector.shape_cast %31 : vector<1x32x16xf32> to vector<32x16xf32>
    %cst_21 = arith.constant dense<0.000000e+00> : vector<32x256xf32>
    %33 = tpu.matmul %32, %30, %cst_21 {dimension_numbers = #tpu.dot_dimension_numbers<[1], [0], [0], [1], [0, 0, 1, 1], [], []>} : vector<32x16xf32>, vector<16x256xf32>, vector<32x256xf32> -> vector<32x256xf32>
    %34 = arith.addf %25, %33 : vector<32x256xf32>
    %c1_i32 = arith.constant 1 : i32
    %35 = tpu.dynamic_rotate %8 by %c1_i32 dim 1 : vector<16x256xf32>, i32 -> vector<16x256xf32>
    %c3 = arith.constant 3 : index
    %c0_22 = arith.constant 0 : index
    %c0_23 = arith.constant 0 : index
    %36 = vector.load %arg3[%c3, %c0_22, %c0_23] : memref<9x1x256xf32, #tpu.memory_space<vmem>>, vector<1x1x256xf32>
    %37 = vector.shape_cast %36 : vector<1x1x256xf32> to vector<1x256xf32>
    %38 = vector.broadcast %37 : vector<1x256xf32> to vector<16x256xf32>
    %39 = arith.mulf %35, %38 : vector<16x256xf32>
    %c3_24 = arith.constant 3 : index
    %c0_25 = arith.constant 0 : index
    %c0_26 = arith.constant 0 : index
    %40 = vector.load %arg2[%c3_24, %c0_25, %c0_26] : memref<9x32x16xf32, #tpu.memory_space<vmem>>, vector<1x32x16xf32>
    %41 = vector.shape_cast %40 : vector<1x32x16xf32> to vector<32x16xf32>
    %cst_27 = arith.constant dense<0.000000e+00> : vector<32x256xf32>
    %42 = tpu.matmul %41, %39, %cst_27 {dimension_numbers = #tpu.dot_dimension_numbers<[1], [0], [0], [1], [0, 0, 1, 1], [], []>} : vector<32x16xf32>, vector<16x256xf32>, vector<32x256xf32> -> vector<32x256xf32>
    %43 = arith.addf %34, %42 : vector<32x256xf32>
    %c4 = arith.constant 4 : index
    %c0_28 = arith.constant 0 : index
    %c0_29 = arith.constant 0 : index
    %44 = vector.load %arg2[%c4, %c0_28, %c0_29] : memref<9x32x16xf32, #tpu.memory_space<vmem>>, vector<1x32x16xf32>
    %45 = vector.shape_cast %44 : vector<1x32x16xf32> to vector<32x16xf32>
    %cst_30 = arith.constant dense<0.000000e+00> : vector<32x256xf32>
    %46 = tpu.matmul %45, %8, %cst_30 {dimension_numbers = #tpu.dot_dimension_numbers<[1], [0], [0], [1], [0, 0, 1, 1], [], []>} : vector<32x16xf32>, vector<16x256xf32>, vector<32x256xf32> -> vector<32x256xf32>
    %47 = arith.addf %43, %46 : vector<32x256xf32>
    %c255_i32 = arith.constant 255 : i32
    %48 = tpu.dynamic_rotate %8 by %c255_i32 dim 1 : vector<16x256xf32>, i32 -> vector<16x256xf32>
    %c5 = arith.constant 5 : index
    %c0_31 = arith.constant 0 : index
    %c0_32 = arith.constant 0 : index
    %49 = vector.load %arg3[%c5, %c0_31, %c0_32] : memref<9x1x256xf32, #tpu.memory_space<vmem>>, vector<1x1x256xf32>
    %50 = vector.shape_cast %49 : vector<1x1x256xf32> to vector<1x256xf32>
    %51 = vector.broadcast %50 : vector<1x256xf32> to vector<16x256xf32>
    %52 = arith.mulf %48, %51 : vector<16x256xf32>
    %c5_33 = arith.constant 5 : index
    %c0_34 = arith.constant 0 : index
    %c0_35 = arith.constant 0 : index
    %53 = vector.load %arg2[%c5_33, %c0_34, %c0_35] : memref<9x32x16xf32, #tpu.memory_space<vmem>>, vector<1x32x16xf32>
    %54 = vector.shape_cast %53 : vector<1x32x16xf32> to vector<32x16xf32>
    %cst_36 = arith.constant dense<0.000000e+00> : vector<32x256xf32>
    %55 = tpu.matmul %54, %52, %cst_36 {dimension_numbers = #tpu.dot_dimension_numbers<[1], [0], [0], [1], [0, 0, 1, 1], [], []>} : vector<32x16xf32>, vector<16x256xf32>, vector<32x256xf32> -> vector<32x256xf32>
    %56 = arith.addf %47, %55 : vector<32x256xf32>
    %c241_i32 = arith.constant 241 : i32
    %57 = tpu.dynamic_rotate %8 by %c241_i32 dim 1 : vector<16x256xf32>, i32 -> vector<16x256xf32>
    %c6 = arith.constant 6 : index
    %c0_37 = arith.constant 0 : index
    %c0_38 = arith.constant 0 : index
    %58 = vector.load %arg3[%c6, %c0_37, %c0_38] : memref<9x1x256xf32, #tpu.memory_space<vmem>>, vector<1x1x256xf32>
    %59 = vector.shape_cast %58 : vector<1x1x256xf32> to vector<1x256xf32>
    %60 = vector.broadcast %59 : vector<1x256xf32> to vector<16x256xf32>
    %61 = arith.mulf %57, %60 : vector<16x256xf32>
    %c6_39 = arith.constant 6 : index
    %c0_40 = arith.constant 0 : index
    %c0_41 = arith.constant 0 : index
    %62 = vector.load %arg2[%c6_39, %c0_40, %c0_41] : memref<9x32x16xf32, #tpu.memory_space<vmem>>, vector<1x32x16xf32>
    %63 = vector.shape_cast %62 : vector<1x32x16xf32> to vector<32x16xf32>
    %cst_42 = arith.constant dense<0.000000e+00> : vector<32x256xf32>
    %64 = tpu.matmul %63, %61, %cst_42 {dimension_numbers = #tpu.dot_dimension_numbers<[1], [0], [0], [1], [0, 0, 1, 1], [], []>} : vector<32x16xf32>, vector<16x256xf32>, vector<32x256xf32> -> vector<32x256xf32>
    %65 = arith.addf %56, %64 : vector<32x256xf32>
    %c240_i32 = arith.constant 240 : i32
    %66 = tpu.dynamic_rotate %8 by %c240_i32 dim 1 : vector<16x256xf32>, i32 -> vector<16x256xf32>
    %c7 = arith.constant 7 : index
    %c0_43 = arith.constant 0 : index
    %c0_44 = arith.constant 0 : index
    %67 = vector.load %arg3[%c7, %c0_43, %c0_44] : memref<9x1x256xf32, #tpu.memory_space<vmem>>, vector<1x1x256xf32>
    %68 = vector.shape_cast %67 : vector<1x1x256xf32> to vector<1x256xf32>
    %69 = vector.broadcast %68 : vector<1x256xf32> to vector<16x256xf32>
    %70 = arith.mulf %66, %69 : vector<16x256xf32>
    %c7_45 = arith.constant 7 : index
    %c0_46 = arith.constant 0 : index
    %c0_47 = arith.constant 0 : index
    %71 = vector.load %arg2[%c7_45, %c0_46, %c0_47] : memref<9x32x16xf32, #tpu.memory_space<vmem>>, vector<1x32x16xf32>
    %72 = vector.shape_cast %71 : vector<1x32x16xf32> to vector<32x16xf32>
    %cst_48 = arith.constant dense<0.000000e+00> : vector<32x256xf32>
    %73 = tpu.matmul %72, %70, %cst_48 {dimension_numbers = #tpu.dot_dimension_numbers<[1], [0], [0], [1], [0, 0, 1, 1], [], []>} : vector<32x16xf32>, vector<16x256xf32>, vector<32x256xf32> -> vector<32x256xf32>
    %74 = arith.addf %65, %73 : vector<32x256xf32>
    %c239_i32 = arith.constant 239 : i32
    %75 = tpu.dynamic_rotate %8 by %c239_i32 dim 1 : vector<16x256xf32>, i32 -> vector<16x256xf32>
    %c8 = arith.constant 8 : index
    %c0_49 = arith.constant 0 : index
    %c0_50 = arith.constant 0 : index
    %76 = vector.load %arg3[%c8, %c0_49, %c0_50] : memref<9x1x256xf32, #tpu.memory_space<vmem>>, vector<1x1x256xf32>
    %77 = vector.shape_cast %76 : vector<1x1x256xf32> to vector<1x256xf32>
    %78 = vector.broadcast %77 : vector<1x256xf32> to vector<16x256xf32>
    %79 = arith.mulf %75, %78 : vector<16x256xf32>
    %c8_51 = arith.constant 8 : index
    %c0_52 = arith.constant 0 : index
    %c0_53 = arith.constant 0 : index
    %80 = vector.load %arg2[%c8_51, %c0_52, %c0_53] : memref<9x32x16xf32, #tpu.memory_space<vmem>>, vector<1x32x16xf32>
    %81 = vector.shape_cast %80 : vector<1x32x16xf32> to vector<32x16xf32>
    %cst_54 = arith.constant dense<0.000000e+00> : vector<32x256xf32>
    %82 = tpu.matmul %81, %79, %cst_54 {dimension_numbers = #tpu.dot_dimension_numbers<[1], [0], [0], [1], [0, 0, 1, 1], [], []>} : vector<32x16xf32>, vector<16x256xf32>, vector<32x256xf32> -> vector<32x256xf32>
    %83 = arith.addf %74, %82 : vector<32x256xf32>
    %84 = vector.shape_cast %83 : vector<32x256xf32> to vector<2x16x256xf32>
    %cst_55 = arith.constant dense<0.000000e+00> : vector<2x16xf32>
    %85 = vector.multi_reduction <add>, %84, %cst_55 [2] : vector<2x16x256xf32> to vector<2x16xf32>
    %86 = vector.shape_cast %85 : vector<2x16xf32> to vector<2x16x1xf32>
    %cst_56 = arith.constant 2.560000e+02 : f32
    %87 = vector.broadcast %cst_56 : f32 to vector<2x16x1xf32>
    %88 = arith.mulf %87, %2 : vector<2x16x1xf32>
    %89 = arith.addf %86, %88 : vector<2x16x1xf32>
    %cst_57 = arith.constant dense<0.000000e+00> : vector<2x1xf32>
    %90 = vector.multi_reduction <add>, %89, %cst_57 [1] : vector<2x16x1xf32> to vector<2x1xf32>
    %91 = vector.shape_cast %90 : vector<2x1xf32> to vector<2x1x1xf32>
    %cst_58 = arith.constant 2.44140625E-4 : f32
    %92 = vector.broadcast %cst_58 : f32 to vector<2x1x1xf32>
    %93 = arith.mulf %91, %92 : vector<2x1x1xf32>
    %94 = vector.broadcast %93 : vector<2x1x1xf32> to vector<2x16x1xf32>
    %95 = arith.subf %94, %2 : vector<2x16x1xf32>
    %96 = vector.broadcast %95 : vector<2x16x1xf32> to vector<2x16x256xf32>
    %97 = arith.subf %84, %96 : vector<2x16x256xf32>
    %98 = arith.mulf %97, %97 : vector<2x16x256xf32>
    %cst_59 = arith.constant dense<0.000000e+00> : vector<2x16xf32>
    %99 = vector.multi_reduction <add>, %98, %cst_59 [2] : vector<2x16x256xf32> to vector<2x16xf32>
    %100 = vector.shape_cast %99 : vector<2x16xf32> to vector<2x16x1xf32>
    %cst_60 = arith.constant dense<0.000000e+00> : vector<2x1xf32>
    %101 = vector.multi_reduction <add>, %100, %cst_60 [1] : vector<2x16x1xf32> to vector<2x1xf32>
    %102 = vector.shape_cast %101 : vector<2x1xf32> to vector<2x1x1xf32>
    %cst_61 = arith.constant 2.44140625E-4 : f32
    %103 = vector.broadcast %cst_61 : f32 to vector<2x1x1xf32>
    %104 = arith.mulf %102, %103 : vector<2x1x1xf32>
    %cst_62 = arith.constant 9.99999974E-6 : f32
    %105 = vector.broadcast %cst_62 : f32 to vector<2x1x1xf32>
    %106 = arith.addf %104, %105 : vector<2x1x1xf32>
    %107 = math.rsqrt %106 : vector<2x1x1xf32>
    %108 = vector.broadcast %107 : vector<2x1x1xf32> to vector<2x16x1xf32>
    %109 = arith.mulf %108, %4 : vector<2x16x1xf32>
    %110 = vector.broadcast %109 : vector<2x16x1xf32> to vector<2x16x256xf32>
    %111 = arith.mulf %97, %110 : vector<2x16x256xf32>
    %112 = vector.broadcast %6 : vector<2x16x1xf32> to vector<2x16x256xf32>
    %113 = arith.addf %111, %112 : vector<2x16x256xf32>
    %114 = vector.shape_cast %113 : vector<2x16x256xf32> to vector<32x256xf32>
    %cst_63 = arith.constant 5.000000e-01 : f32
    %115 = vector.broadcast %cst_63 : f32 to vector<32x256xf32>
    %116 = arith.mulf %115, %114 : vector<32x256xf32>
    %cst_64 = arith.constant 0.707106769 : f32
    %117 = vector.broadcast %cst_64 : f32 to vector<32x256xf32>
    %118 = arith.mulf %114, %117 : vector<32x256xf32>
    %cst_65 = arith.constant 0.000000e+00 : f32
    %119 = vector.broadcast %cst_65 : f32 to vector<32x256xf32>
    %120 = arith.cmpf oge, %118, %119 : vector<32x256xf32>
    %cst_66 = arith.constant 1.000000e+00 : f32
    %cst_67 = arith.constant -1.000000e+00 : f32
    %121 = vector.broadcast %cst_66 : f32 to vector<32x256xf32>
    %122 = vector.broadcast %cst_67 : f32 to vector<32x256xf32>
    %123 = arith.select %120, %121, %122 : vector<32x256xi1>, vector<32x256xf32>
    %124 = math.absf %118 : vector<32x256xf32>
    %cst_68 = arith.constant 0.327591091 : f32
    %125 = vector.broadcast %cst_68 : f32 to vector<32x256xf32>
    %126 = arith.mulf %125, %124 : vector<32x256xf32>
    %cst_69 = arith.constant 1.000000e+00 : f32
    %127 = vector.broadcast %cst_69 : f32 to vector<32x256xf32>
    %128 = arith.addf %127, %126 : vector<32x256xf32>
    %cst_70 = arith.constant 1.000000e+00 : f32
    %129 = vector.broadcast %cst_70 : f32 to vector<32x256xf32>
    %130 = arith.divf %129, %128 : vector<32x256xf32>
    %cst_71 = arith.constant 1.06140542 : f32
    %131 = vector.broadcast %cst_71 : f32 to vector<32x256xf32>
    %132 = arith.mulf %131, %130 : vector<32x256xf32>
    %cst_72 = arith.constant -1.45315206 : f32
    %133 = vector.broadcast %cst_72 : f32 to vector<32x256xf32>
    %134 = arith.addf %132, %133 : vector<32x256xf32>
    %135 = arith.mulf %134, %130 : vector<32x256xf32>
    %cst_73 = arith.constant 1.42141378 : f32
    %136 = vector.broadcast %cst_73 : f32 to vector<32x256xf32>
    %137 = arith.addf %135, %136 : vector<32x256xf32>
    %138 = arith.mulf %137, %130 : vector<32x256xf32>
    %cst_74 = arith.constant -0.284496725 : f32
    %139 = vector.broadcast %cst_74 : f32 to vector<32x256xf32>
    %140 = arith.addf %138, %139 : vector<32x256xf32>
    %141 = arith.mulf %140, %130 : vector<32x256xf32>
    %cst_75 = arith.constant 0.254829586 : f32
    %142 = vector.broadcast %cst_75 : f32 to vector<32x256xf32>
    %143 = arith.addf %141, %142 : vector<32x256xf32>
    %144 = arith.mulf %143, %130 : vector<32x256xf32>
    %cst_76 = arith.constant 0.000000e+00 : f32
    %145 = vector.broadcast %cst_76 : f32 to vector<32x256xf32>
    %146 = arith.subf %145, %124 : vector<32x256xf32>
    %147 = arith.mulf %146, %124 : vector<32x256xf32>
    %148 = math.exp %147 : vector<32x256xf32>
    %149 = arith.mulf %144, %148 : vector<32x256xf32>
    %cst_77 = arith.constant 1.000000e+00 : f32
    %150 = vector.broadcast %cst_77 : f32 to vector<32x256xf32>
    %151 = arith.subf %150, %149 : vector<32x256xf32>
    %152 = arith.mulf %123, %151 : vector<32x256xf32>
    %cst_78 = arith.constant 1.000000e+00 : f32
    %153 = vector.broadcast %cst_78 : f32 to vector<32x256xf32>
    %154 = arith.addf %153, %152 : vector<32x256xf32>
    %155 = arith.mulf %116, %154 : vector<32x256xf32>
    %c0_79 = arith.constant 0 : index
    %c0_80 = arith.constant 0 : index
    %c0_81 = arith.constant 0 : index
    %156 = vector.load %arg5[%c0_79, %c0_80, %c0_81] : memref<2x32x256xf32, #tpu.memory_space<vmem>>, vector<1x32x256xf32>
    %157 = vector.shape_cast %156 : vector<1x32x256xf32> to vector<32x256xf32>
    %158 = vector.shape_cast %155 : vector<32x256xf32> to vector<1x32x256xf32>
    tpu.vector_store %arg5[%c0_79, %c0_80, %c0_81], %158 {strides = array<i32>} : memref<2x32x256xf32, #tpu.memory_space<vmem>>, vector<1x32x256xf32>,
    %c1_82 = arith.constant 1 : index
    %c0_83 = arith.constant 0 : index
    %c0_84 = arith.constant 0 : index
    %159 = vector.load %arg1[%c1_82, %c0_83, %c0_84] : memref<2x16x256xf32, #tpu.memory_space<vmem>>, vector<1x16x256xf32>
    %160 = vector.shape_cast %159 : vector<1x16x256xf32> to vector<16x256xf32>
    %c17_i32_85 = arith.constant 17 : i32
    %161 = tpu.dynamic_rotate %160 by %c17_i32_85 dim 1 : vector<16x256xf32>, i32 -> vector<16x256xf32>
    %c0_86 = arith.constant 0 : index
    %c0_87 = arith.constant 0 : index
    %c0_88 = arith.constant 0 : index
    %162 = vector.load %arg3[%c0_86, %c0_87, %c0_88] : memref<9x1x256xf32, #tpu.memory_space<vmem>>, vector<1x1x256xf32>
    %163 = vector.shape_cast %162 : vector<1x1x256xf32> to vector<1x256xf32>
    %164 = vector.broadcast %163 : vector<1x256xf32> to vector<16x256xf32>
    %165 = arith.mulf %161, %164 : vector<16x256xf32>
    %c0_89 = arith.constant 0 : index
    %c0_90 = arith.constant 0 : index
    %c0_91 = arith.constant 0 : index
    %166 = vector.load %arg2[%c0_89, %c0_90, %c0_91] : memref<9x32x16xf32, #tpu.memory_space<vmem>>, vector<1x32x16xf32>
    %167 = vector.shape_cast %166 : vector<1x32x16xf32> to vector<32x16xf32>
    %cst_92 = arith.constant dense<0.000000e+00> : vector<32x256xf32>
    %168 = tpu.matmul %167, %165, %cst_92 {dimension_numbers = #tpu.dot_dimension_numbers<[1], [0], [0], [1], [0, 0, 1, 1], [], []>} : vector<32x16xf32>, vector<16x256xf32>, vector<32x256xf32> -> vector<32x256xf32>
    %c16_i32_93 = arith.constant 16 : i32
    %169 = tpu.dynamic_rotate %160 by %c16_i32_93 dim 1 : vector<16x256xf32>, i32 -> vector<16x256xf32>
    %c1_94 = arith.constant 1 : index
    %c0_95 = arith.constant 0 : index
    %c0_96 = arith.constant 0 : index
    %170 = vector.load %arg3[%c1_94, %c0_95, %c0_96] : memref<9x1x256xf32, #tpu.memory_space<vmem>>, vector<1x1x256xf32>
    %171 = vector.shape_cast %170 : vector<1x1x256xf32> to vector<1x256xf32>
    %172 = vector.broadcast %171 : vector<1x256xf32> to vector<16x256xf32>
    %173 = arith.mulf %169, %172 : vector<16x256xf32>
    %c1_97 = arith.constant 1 : index
    %c0_98 = arith.constant 0 : index
    %c0_99 = arith.constant 0 : index
    %174 = vector.load %arg2[%c1_97, %c0_98, %c0_99] : memref<9x32x16xf32, #tpu.memory_space<vmem>>, vector<1x32x16xf32>
    %175 = vector.shape_cast %174 : vector<1x32x16xf32> to vector<32x16xf32>
    %cst_100 = arith.constant dense<0.000000e+00> : vector<32x256xf32>
    %176 = tpu.matmul %175, %173, %cst_100 {dimension_numbers = #tpu.dot_dimension_numbers<[1], [0], [0], [1], [0, 0, 1, 1], [], []>} : vector<32x16xf32>, vector<16x256xf32>, vector<32x256xf32> -> vector<32x256xf32>
    %177 = arith.addf %168, %176 : vector<32x256xf32>
    %c15_i32_101 = arith.constant 15 : i32
    %178 = tpu.dynamic_rotate %160 by %c15_i32_101 dim 1 : vector<16x256xf32>, i32 -> vector<16x256xf32>
    %c2_102 = arith.constant 2 : index
    %c0_103 = arith.constant 0 : index
    %c0_104 = arith.constant 0 : index
    %179 = vector.load %arg3[%c2_102, %c0_103, %c0_104] : memref<9x1x256xf32, #tpu.memory_space<vmem>>, vector<1x1x256xf32>
    %180 = vector.shape_cast %179 : vector<1x1x256xf32> to vector<1x256xf32>
    %181 = vector.broadcast %180 : vector<1x256xf32> to vector<16x256xf32>
    %182 = arith.mulf %178, %181 : vector<16x256xf32>
    %c2_105 = arith.constant 2 : index
    %c0_106 = arith.constant 0 : index
    %c0_107 = arith.constant 0 : index
    %183 = vector.load %arg2[%c2_105, %c0_106, %c0_107] : memref<9x32x16xf32, #tpu.memory_space<vmem>>, vector<1x32x16xf32>
    %184 = vector.shape_cast %183 : vector<1x32x16xf32> to vector<32x16xf32>
    %cst_108 = arith.constant dense<0.000000e+00> : vector<32x256xf32>
    %185 = tpu.matmul %184, %182, %cst_108 {dimension_numbers = #tpu.dot_dimension_numbers<[1], [0], [0], [1], [0, 0, 1, 1], [], []>} : vector<32x16xf32>, vector<16x256xf32>, vector<32x256xf32> -> vector<32x256xf32>
    %186 = arith.addf %177, %185 : vector<32x256xf32>
    %c1_i32_109 = arith.constant 1 : i32
    %187 = tpu.dynamic_rotate %160 by %c1_i32_109 dim 1 : vector<16x256xf32>, i32 -> vector<16x256xf32>
    %c3_110 = arith.constant 3 : index
    %c0_111 = arith.constant 0 : index
    %c0_112 = arith.constant 0 : index
    %188 = vector.load %arg3[%c3_110, %c0_111, %c0_112] : memref<9x1x256xf32, #tpu.memory_space<vmem>>, vector<1x1x256xf32>
    %189 = vector.shape_cast %188 : vector<1x1x256xf32> to vector<1x256xf32>
    %190 = vector.broadcast %189 : vector<1x256xf32> to vector<16x256xf32>
    %191 = arith.mulf %187, %190 : vector<16x256xf32>
    %c3_113 = arith.constant 3 : index
    %c0_114 = arith.constant 0 : index
    %c0_115 = arith.constant 0 : index
    %192 = vector.load %arg2[%c3_113, %c0_114, %c0_115] : memref<9x32x16xf32, #tpu.memory_space<vmem>>, vector<1x32x16xf32>
    %193 = vector.shape_cast %192 : vector<1x32x16xf32> to vector<32x16xf32>
    %cst_116 = arith.constant dense<0.000000e+00> : vector<32x256xf32>
    %194 = tpu.matmul %193, %191, %cst_116 {dimension_numbers = #tpu.dot_dimension_numbers<[1], [0], [0], [1], [0, 0, 1, 1], [], []>} : vector<32x16xf32>, vector<16x256xf32>, vector<32x256xf32> -> vector<32x256xf32>
    %195 = arith.addf %186, %194 : vector<32x256xf32>
    %c4_117 = arith.constant 4 : index
    %c0_118 = arith.constant 0 : index
    %c0_119 = arith.constant 0 : index
    %196 = vector.load %arg2[%c4_117, %c0_118, %c0_119] : memref<9x32x16xf32, #tpu.memory_space<vmem>>, vector<1x32x16xf32>
    %197 = vector.shape_cast %196 : vector<1x32x16xf32> to vector<32x16xf32>
    %cst_120 = arith.constant dense<0.000000e+00> : vector<32x256xf32>
    %198 = tpu.matmul %197, %160, %cst_120 {dimension_numbers = #tpu.dot_dimension_numbers<[1], [0], [0], [1], [0, 0, 1, 1], [], []>} : vector<32x16xf32>, vector<16x256xf32>, vector<32x256xf32> -> vector<32x256xf32>
    %199 = arith.addf %195, %198 : vector<32x256xf32>
    %c255_i32_121 = arith.constant 255 : i32
    %200 = tpu.dynamic_rotate %160 by %c255_i32_121 dim 1 : vector<16x256xf32>, i32 -> vector<16x256xf32>
    %c5_122 = arith.constant 5 : index
    %c0_123 = arith.constant 0 : index
    %c0_124 = arith.constant 0 : index
    %201 = vector.load %arg3[%c5_122, %c0_123, %c0_124] : memref<9x1x256xf32, #tpu.memory_space<vmem>>, vector<1x1x256xf32>
    %202 = vector.shape_cast %201 : vector<1x1x256xf32> to vector<1x256xf32>
    %203 = vector.broadcast %202 : vector<1x256xf32> to vector<16x256xf32>
    %204 = arith.mulf %200, %203 : vector<16x256xf32>
    %c5_125 = arith.constant 5 : index
    %c0_126 = arith.constant 0 : index
    %c0_127 = arith.constant 0 : index
    %205 = vector.load %arg2[%c5_125, %c0_126, %c0_127] : memref<9x32x16xf32, #tpu.memory_space<vmem>>, vector<1x32x16xf32>
    %206 = vector.shape_cast %205 : vector<1x32x16xf32> to vector<32x16xf32>
    %cst_128 = arith.constant dense<0.000000e+00> : vector<32x256xf32>
    %207 = tpu.matmul %206, %204, %cst_128 {dimension_numbers = #tpu.dot_dimension_numbers<[1], [0], [0], [1], [0, 0, 1, 1], [], []>} : vector<32x16xf32>, vector<16x256xf32>, vector<32x256xf32> -> vector<32x256xf32>
    %208 = arith.addf %199, %207 : vector<32x256xf32>
    %c241_i32_129 = arith.constant 241 : i32
    %209 = tpu.dynamic_rotate %160 by %c241_i32_129 dim 1 : vector<16x256xf32>, i32 -> vector<16x256xf32>
    %c6_130 = arith.constant 6 : index
    %c0_131 = arith.constant 0 : index
    %c0_132 = arith.constant 0 : index
    %210 = vector.load %arg3[%c6_130, %c0_131, %c0_132] : memref<9x1x256xf32, #tpu.memory_space<vmem>>, vector<1x1x256xf32>
    %211 = vector.shape_cast %210 : vector<1x1x256xf32> to vector<1x256xf32>
    %212 = vector.broadcast %211 : vector<1x256xf32> to vector<16x256xf32>
    %213 = arith.mulf %209, %212 : vector<16x256xf32>
    %c6_133 = arith.constant 6 : index
    %c0_134 = arith.constant 0 : index
    %c0_135 = arith.constant 0 : index
    %214 = vector.load %arg2[%c6_133, %c0_134, %c0_135] : memref<9x32x16xf32, #tpu.memory_space<vmem>>, vector<1x32x16xf32>
    %215 = vector.shape_cast %214 : vector<1x32x16xf32> to vector<32x16xf32>
    %cst_136 = arith.constant dense<0.000000e+00> : vector<32x256xf32>
    %216 = tpu.matmul %215, %213, %cst_136 {dimension_numbers = #tpu.dot_dimension_numbers<[1], [0], [0], [1], [0, 0, 1, 1], [], []>} : vector<32x16xf32>, vector<16x256xf32>, vector<32x256xf32> -> vector<32x256xf32>
    %217 = arith.addf %208, %216 : vector<32x256xf32>
    %c240_i32_137 = arith.constant 240 : i32
    %218 = tpu.dynamic_rotate %160 by %c240_i32_137 dim 1 : vector<16x256xf32>, i32 -> vector<16x256xf32>
    %c7_138 = arith.constant 7 : index
    %c0_139 = arith.constant 0 : index
    %c0_140 = arith.constant 0 : index
    %219 = vector.load %arg3[%c7_138, %c0_139, %c0_140] : memref<9x1x256xf32, #tpu.memory_space<vmem>>, vector<1x1x256xf32>
    %220 = vector.shape_cast %219 : vector<1x1x256xf32> to vector<1x256xf32>
    %221 = vector.broadcast %220 : vector<1x256xf32> to vector<16x256xf32>
    %222 = arith.mulf %218, %221 : vector<16x256xf32>
    %c7_141 = arith.constant 7 : index
    %c0_142 = arith.constant 0 : index
    %c0_143 = arith.constant 0 : index
    %223 = vector.load %arg2[%c7_141, %c0_142, %c0_143] : memref<9x32x16xf32, #tpu.memory_space<vmem>>, vector<1x32x16xf32>
    %224 = vector.shape_cast %223 : vector<1x32x16xf32> to vector<32x16xf32>
    %cst_144 = arith.constant dense<0.000000e+00> : vector<32x256xf32>
    %225 = tpu.matmul %224, %222, %cst_144 {dimension_numbers = #tpu.dot_dimension_numbers<[1], [0], [0], [1], [0, 0, 1, 1], [], []>} : vector<32x16xf32>, vector<16x256xf32>, vector<32x256xf32> -> vector<32x256xf32>
    %226 = arith.addf %217, %225 : vector<32x256xf32>
    %c239_i32_145 = arith.constant 239 : i32
    %227 = tpu.dynamic_rotate %160 by %c239_i32_145 dim 1 : vector<16x256xf32>, i32 -> vector<16x256xf32>
    %c8_146 = arith.constant 8 : index
    %c0_147 = arith.constant 0 : index
    %c0_148 = arith.constant 0 : index
    %228 = vector.load %arg3[%c8_146, %c0_147, %c0_148] : memref<9x1x256xf32, #tpu.memory_space<vmem>>, vector<1x1x256xf32>
    %229 = vector.shape_cast %228 : vector<1x1x256xf32> to vector<1x256xf32>
    %230 = vector.broadcast %229 : vector<1x256xf32> to vector<16x256xf32>
    %231 = arith.mulf %227, %230 : vector<16x256xf32>
    %c8_149 = arith.constant 8 : index
    %c0_150 = arith.constant 0 : index
    %c0_151 = arith.constant 0 : index
    %232 = vector.load %arg2[%c8_149, %c0_150, %c0_151] : memref<9x32x16xf32, #tpu.memory_space<vmem>>, vector<1x32x16xf32>
    %233 = vector.shape_cast %232 : vector<1x32x16xf32> to vector<32x16xf32>
    %cst_152 = arith.constant dense<0.000000e+00> : vector<32x256xf32>
    %234 = tpu.matmul %233, %231, %cst_152 {dimension_numbers = #tpu.dot_dimension_numbers<[1], [0], [0], [1], [0, 0, 1, 1], [], []>} : vector<32x16xf32>, vector<16x256xf32>, vector<32x256xf32> -> vector<32x256xf32>
    %235 = arith.addf %226, %234 : vector<32x256xf32>
    %236 = vector.shape_cast %235 : vector<32x256xf32> to vector<2x16x256xf32>
    %cst_153 = arith.constant dense<0.000000e+00> : vector<2x16xf32>
    %237 = vector.multi_reduction <add>, %236, %cst_153 [2] : vector<2x16x256xf32> to vector<2x16xf32>
    %238 = vector.shape_cast %237 : vector<2x16xf32> to vector<2x16x1xf32>
    %cst_154 = arith.constant 2.560000e+02 : f32
    %239 = vector.broadcast %cst_154 : f32 to vector<2x16x1xf32>
    %240 = arith.mulf %239, %2 : vector<2x16x1xf32>
    %241 = arith.addf %238, %240 : vector<2x16x1xf32>
    %cst_155 = arith.constant dense<0.000000e+00> : vector<2x1xf32>
    %242 = vector.multi_reduction <add>, %241, %cst_155 [1] : vector<2x16x1xf32> to vector<2x1xf32>
    %243 = vector.shape_cast %242 : vector<2x1xf32> to vector<2x1x1xf32>
    %cst_156 = arith.constant 2.44140625E-4 : f32
    %244 = vector.broadcast %cst_156 : f32 to vector<2x1x1xf32>
    %245 = arith.mulf %243, %244 : vector<2x1x1xf32>
    %246 = vector.broadcast %245 : vector<2x1x1xf32> to vector<2x16x1xf32>
    %247 = arith.subf %246, %2 : vector<2x16x1xf32>
    %248 = vector.broadcast %247 : vector<2x16x1xf32> to vector<2x16x256xf32>
    %249 = arith.subf %236, %248 : vector<2x16x256xf32>
    %250 = arith.mulf %249, %249 : vector<2x16x256xf32>
    %cst_157 = arith.constant dense<0.000000e+00> : vector<2x16xf32>
    %251 = vector.multi_reduction <add>, %250, %cst_157 [2] : vector<2x16x256xf32> to vector<2x16xf32>
    %252 = vector.shape_cast %251 : vector<2x16xf32> to vector<2x16x1xf32>
    %cst_158 = arith.constant dense<0.000000e+00> : vector<2x1xf32>
    %253 = vector.multi_reduction <add>, %252, %cst_158 [1] : vector<2x16x1xf32> to vector<2x1xf32>
    %254 = vector.shape_cast %253 : vector<2x1xf32> to vector<2x1x1xf32>
    %cst_159 = arith.constant 2.44140625E-4 : f32
    %255 = vector.broadcast %cst_159 : f32 to vector<2x1x1xf32>
    %256 = arith.mulf %254, %255 : vector<2x1x1xf32>
    %cst_160 = arith.constant 9.99999974E-6 : f32
    %257 = vector.broadcast %cst_160 : f32 to vector<2x1x1xf32>
    %258 = arith.addf %256, %257 : vector<2x1x1xf32>
    %259 = math.rsqrt %258 : vector<2x1x1xf32>
    %260 = vector.broadcast %259 : vector<2x1x1xf32> to vector<2x16x1xf32>
    %261 = arith.mulf %260, %4 : vector<2x16x1xf32>
    %262 = vector.broadcast %261 : vector<2x16x1xf32> to vector<2x16x256xf32>
    %263 = arith.mulf %249, %262 : vector<2x16x256xf32>
    %264 = vector.broadcast %6 : vector<2x16x1xf32> to vector<2x16x256xf32>
    %265 = arith.addf %263, %264 : vector<2x16x256xf32>
    %266 = vector.shape_cast %265 : vector<2x16x256xf32> to vector<32x256xf32>
    %cst_161 = arith.constant 5.000000e-01 : f32
    %267 = vector.broadcast %cst_161 : f32 to vector<32x256xf32>
    %268 = arith.mulf %267, %266 : vector<32x256xf32>
    %cst_162 = arith.constant 0.707106769 : f32
    %269 = vector.broadcast %cst_162 : f32 to vector<32x256xf32>
    %270 = arith.mulf %266, %269 : vector<32x256xf32>
    %cst_163 = arith.constant 0.000000e+00 : f32
    %271 = vector.broadcast %cst_163 : f32 to vector<32x256xf32>
    %272 = arith.cmpf oge, %270, %271 : vector<32x256xf32>
    %cst_164 = arith.constant 1.000000e+00 : f32
    %cst_165 = arith.constant -1.000000e+00 : f32
    %273 = vector.broadcast %cst_164 : f32 to vector<32x256xf32>
    %274 = vector.broadcast %cst_165 : f32 to vector<32x256xf32>
    %275 = arith.select %272, %273, %274 : vector<32x256xi1>, vector<32x256xf32>
    %276 = math.absf %270 : vector<32x256xf32>
    %cst_166 = arith.constant 0.327591091 : f32
    %277 = vector.broadcast %cst_166 : f32 to vector<32x256xf32>
    %278 = arith.mulf %277, %276 : vector<32x256xf32>
    %cst_167 = arith.constant 1.000000e+00 : f32
    %279 = vector.broadcast %cst_167 : f32 to vector<32x256xf32>
    %280 = arith.addf %279, %278 : vector<32x256xf32>
    %cst_168 = arith.constant 1.000000e+00 : f32
    %281 = vector.broadcast %cst_168 : f32 to vector<32x256xf32>
    %282 = arith.divf %281, %280 : vector<32x256xf32>
    %cst_169 = arith.constant 1.06140542 : f32
    %283 = vector.broadcast %cst_169 : f32 to vector<32x256xf32>
    %284 = arith.mulf %283, %282 : vector<32x256xf32>
    %cst_170 = arith.constant -1.45315206 : f32
    %285 = vector.broadcast %cst_170 : f32 to vector<32x256xf32>
    %286 = arith.addf %284, %285 : vector<32x256xf32>
    %287 = arith.mulf %286, %282 : vector<32x256xf32>
    %cst_171 = arith.constant 1.42141378 : f32
    %288 = vector.broadcast %cst_171 : f32 to vector<32x256xf32>
    %289 = arith.addf %287, %288 : vector<32x256xf32>
    %290 = arith.mulf %289, %282 : vector<32x256xf32>
    %cst_172 = arith.constant -0.284496725 : f32
    %291 = vector.broadcast %cst_172 : f32 to vector<32x256xf32>
    %292 = arith.addf %290, %291 : vector<32x256xf32>
    %293 = arith.mulf %292, %282 : vector<32x256xf32>
    %cst_173 = arith.constant 0.254829586 : f32
    %294 = vector.broadcast %cst_173 : f32 to vector<32x256xf32>
    %295 = arith.addf %293, %294 : vector<32x256xf32>
    %296 = arith.mulf %295, %282 : vector<32x256xf32>
    %cst_174 = arith.constant 0.000000e+00 : f32
    %297 = vector.broadcast %cst_174 : f32 to vector<32x256xf32>
    %298 = arith.subf %297, %276 : vector<32x256xf32>
    %299 = arith.mulf %298, %276 : vector<32x256xf32>
    %300 = math.exp %299 : vector<32x256xf32>
    %301 = arith.mulf %296, %300 : vector<32x256xf32>
    %cst_175 = arith.constant 1.000000e+00 : f32
    %302 = vector.broadcast %cst_175 : f32 to vector<32x256xf32>
    %303 = arith.subf %302, %301 : vector<32x256xf32>
    %304 = arith.mulf %275, %303 : vector<32x256xf32>
    %cst_176 = arith.constant 1.000000e+00 : f32
    %305 = vector.broadcast %cst_176 : f32 to vector<32x256xf32>
    %306 = arith.addf %305, %304 : vector<32x256xf32>
    %307 = arith.mulf %268, %306 : vector<32x256xf32>
    %c1_177 = arith.constant 1 : index
    %c0_178 = arith.constant 0 : index
    %c0_179 = arith.constant 0 : index
    %308 = vector.load %arg5[%c1_177, %c0_178, %c0_179] : memref<2x32x256xf32, #tpu.memory_space<vmem>>, vector<1x32x256xf32>
    %309 = vector.shape_cast %308 : vector<1x32x256xf32> to vector<32x256xf32>
    %310 = vector.shape_cast %307 : vector<32x256xf32> to vector<1x32x256xf32>
    tpu.vector_store %arg5[%c1_177, %c0_178, %c0_179], %310 {strides = array<i32>} : memref<2x32x256xf32, #tpu.memory_space<vmem>>, vector<1x32x256xf32>,
    return
  }
  func.func @transform_0(%arg0: i32) -> (i32, i32, i32) {
    %c0_i32 = arith.constant 0 : i32
    %c0_i32_0 = arith.constant 0 : i32
    %c0_i32_1 = arith.constant 0 : i32
    return %arg0, %c0_i32, %c0_i32_0 : i32, i32, i32
  }
  func.func @transform_1(%arg0: i32) -> (i32, i32, i32) {
    %c0_i32 = arith.constant 0 : i32
    %c0_i32_0 = arith.constant 0 : i32
    %c0_i32_1 = arith.constant 0 : i32
    %c0_i32_2 = arith.constant 0 : i32
    return %c0_i32, %c0_i32_0, %c0_i32_1 : i32, i32, i32
  }
  func.func @transform_2(%arg0: i32) -> (i32, i32, i32) {
    %c0_i32 = arith.constant 0 : i32
    %c0_i32_0 = arith.constant 0 : i32
    %c0_i32_1 = arith.constant 0 : i32
    %c0_i32_2 = arith.constant 0 : i32
    return %c0_i32, %c0_i32_0, %c0_i32_1 : i32, i32, i32
  }
  func.func @transform_3(%arg0: i32) -> (i32, i32) {
    %c0_i32 = arith.constant 0 : i32
    %c0_i32_0 = arith.constant 0 : i32
    %c0_i32_1 = arith.constant 0 : i32
    return %c0_i32, %c0_i32_0 : i32, i32
  }
  func.func @transform_4(%arg0: i32) -> (i32, i32, i32) {
    %c0_i32 = arith.constant 0 : i32
    %c0_i32_0 = arith.constant 0 : i32
    %c0_i32_1 = arith.constant 0 : i32
    return %arg0, %c0_i32, %c0_i32_0 : i32, i32, i32
  }
}

</mosaic_0001>

<llo_original>
// kernel: _conv_forward_impl.1
$region0: #{_conv_forward_impl.1}
  #allocation0 [shape = 'u32[]', space=smem, size = 0x4, offset = 0x4, fixed_abs, tag = 'smem constant byte address 0x4 - core index']
  #allocation1 [shape = 'u32[72,128]{1,0:T(1,128)}', space=vmem, size = 0x9000, scoped, tag = 'internal scratch']
  %s0 = inlined_call_operand.vmem [shape: f32[2,16,256], index: 0, kind: input, shape index: {}]
  %s1 = inlined_call_operand.vmem [shape: f32[9,32,16], index: 1, kind: input, shape index: {}]
  %s2 = inlined_call_operand.vmem [shape: f32[9,1,256], index: 2, kind: input, shape index: {}]
  %s3 = inlined_call_operand.vmem [shape: f32[32,3], index: 3, kind: input, shape index: {}]
  %s4 = inlined_call_operand.vmem [shape: f32[2,32,256], index: 4, kind: output, shape index: {}]
  %s5 = sld [smem:[#allocation0]]
  $region26: #{_conv_forward_impl.1} parent=0
    _
  %s7 = ssub.s32 1, %s5
  %s8 = scalar_select 0, %s7, %s5
  // Predicated region
  $region2: #{_conv_forward_impl.1} parent=0 // pred_check
    _
  $region3: #{_conv_forward_impl.1} parent=0 // pred_check_branch
    %10 = sbr.rel (0) target = $region5
  $region4: #{_conv_forward_impl.1} parent=0 // pred_region
    _
  $region5: #{_conv_forward_impl.1} parent=0 // pred_fallthru
    _
  // Predicated region
  $region6: #{_conv_forward_impl.1} parent=0 // pred_check
    _
  $region7: #{_conv_forward_impl.1} parent=0 // pred_check_branch
    %12 = sbr.rel (0) target = $region9
  $region8: #{_conv_forward_impl.1} parent=0 // pred_region
    _
  $region9: #{_conv_forward_impl.1} parent=0 // pred_fallthru
    _
  // Predicated region
  $region10: #{_conv_forward_impl.1} parent=0 // pred_check
    _
  $region11: #{_conv_forward_impl.1} parent=0 // pred_check_branch
    %14 = sbr.rel (0) target = $region13
  $region12: #{_conv_forward_impl.1} parent=0 // pred_region
    _
  $region13: #{_conv_forward_impl.1} parent=0 // pred_fallthru
    _
  // Predicated region
  $region14: #{_conv_forward_impl.1} parent=0 // pred_check
    _
  $region15: #{_conv_forward_impl.1} parent=0 // pred_check_branch
    %16 = sbr.rel (0) target = $region17
  $region16: #{_conv_forward_impl.1} parent=0 // pred_region
    _
  $region17: #{_conv_forward_impl.1} parent=0 // pred_fallthru
    _
  %v17 = vld [vmem:[%s3] sm:$0xff]
  %v18 = vld [vmem:[%s3 + $0x8] sm:$0xff]
  %v19 = vld [vmem:[%s3 + $0x10] sm:$0xff]
  %v20 = vld [vmem:[%s3 + $0x18] sm:$0xff]
  %v21 = vld [vmem:[%s0] sm:$0xff]
  %v22 = vld [vmem:[%s0 + $0x8] sm:$0xff]
  %v23 = vld [vmem:[%s0 + $0x10] sm:$0xff]
  %v24 = vld [vmem:[%s0 + $0x18] sm:$0xff]
  %25 = vrot.lane.b32.xlu0 %v21, 17
  %v26 = vpop.permute.xlu0 %25
  %27 = vrot.lane.b32.xlu0 %v23, 17
  %v28 = vpop.permute.xlu0 %27
  %29 = vrot.lane.b32.xlu0 %v22, 17
  %v30 = vpop.permute.xlu0 %29
  %31 = vrot.lane.b32.xlu0 %v24, 17
  %v32 = vpop.permute.xlu0 %31
  %v33 = vlaneseq
  %v34 = vand.u32 %v33, 127
  %vm35 = vcmp.lt.s32.totalorder %v34, 17
  %v36 = vsel %vm35, %v26, %v30
  %v37 = vsel %vm35, %v28, %v32
  %v38 = vsel %vm35, %v30, %v26
  %v39 = vsel %vm35, %v32, %v28
  %v40 = vld [vmem:[%s2] sm:$0x3]
  %v42 = vperm.slane %v40, 0
  %v43 = vperm.slane %v40, 1
  %v46 = vmul.f32 %v38, %v42
  %v47 = vmul.f32 %v36, %v43
  %v48 = vmul.f32 %v39, %v42
  %v49 = vmul.f32 %v37, %v43
  %v50 = vld [vmem:[%s1] sm:$0xff]
  %v51 = vld [vmem:[%s1 + $0x8] sm:$0xff]
  %v52 = vld [vmem:[%s1 + $0x10] sm:$0xff]
  %v53 = vld [vmem:[%s1 + $0x18] sm:$0xff]
  %54 = vrot.lane.b32.xlu0 %v21, 16
  %v55 = vpop.permute.xlu0 %54
  %56 = vrot.lane.b32.xlu0 %v23, 16
  %v57 = vpop.permute.xlu0 %56
  %58 = vrot.lane.b32.xlu0 %v22, 16
  %v59 = vpop.permute.xlu0 %58
  %60 = vrot.lane.b32.xlu0 %v24, 16
  %v61 = vpop.permute.xlu0 %60
  %vm62 = vcmp.lt.s32.totalorder %v34, 16
  %v63 = vsel %vm62, %v55, %v59
  %v64 = vsel %vm62, %v57, %v61
  %v65 = vsel %vm62, %v59, %v55
  %v66 = vsel %vm62, %v61, %v57
  %s67 = scalar_lea.vmem %s2, 2
  %v68 = vld [vmem:[%s67] sm:$0x3]
  %v70 = vperm.slane %v68, 0
  %v71 = vperm.slane %v68, 1
  %v74 = vmul.f32 %v65, %v70
  %v75 = vmul.f32 %v63, %v71
  %v76 = vmul.f32 %v66, %v70
  %v77 = vmul.f32 %v64, %v71
  %s78 = scalar_lea.vmem %s1, 32
  %v79 = vld [vmem:[%s78] sm:$0xff]
  %v80 = vld [vmem:[%s78 + $0x8] sm:$0xff]
  %v81 = vld [vmem:[%s78 + $0x10] sm:$0xff]
  %v82 = vld [vmem:[%s78 + $0x18] sm:$0xff]
  %vm83 = vcmask 130048
  %v85 = vsel %vm83, %v79, 0
  %v88 = vsel %vm83, %v80, 0
  %v91 = vsel %vm83, %v81, 0
  %v94 = vsel %vm83, %v82, 0
  %96 = vmatpush.msra.mxu0 0.0
  %97 = vmatpush.msra.mxu0 0.0
  %98 = vmatpush.msra.mxu0 0.0
  %99 = vmatpush.msra.mxu0 0.0
  %100 = vmatpush.msra.mxu0 0.0
  %101 = vmatpush.msra.mxu0 0.0
  %102 = vmatpush.msra.mxu0 0.0
  %103 = vmatpush.msra.mxu0 0.0
  %104 = vmatpush.msra.mxu0 0.0
  %105 = vmatpush.msra.mxu0 0.0
  %106 = vmatpush.msra.mxu0 0.0
  %107 = vmatpush.msra.mxu0 0.0
  %108 = vmatpush.msra.mxu0 0.0
  %109 = vmatpush.msra.mxu0 0.0
  %110 = vmatpush.msra.mxu0 %v76
  %111 = vmatpush.msra.mxu0 %v74
  %112 = vmatmul.f32.gmra.mxu0 %v85
  %v113 = vpop.f32.mrf.mxu0
  %v114 = vadd.f32 0.0, %v113
  %115 = vmatmul.f32.gmra.mxu0 %v88
  %v116 = vpop.f32.mrf.mxu0
  %v117 = vadd.f32 0.0, %v116
  %118 = vmatmul.f32.gmra.mxu0 %v91
  %v119 = vpop.f32.mrf.mxu0
  %v120 = vadd.f32 0.0, %v119
  %121 = vmatmul.f32.gmra.mxu0 %v94
  %v122 = vpop.f32.mrf.mxu0
  %v123 = vadd.f32 0.0, %v122
  %124 = vdwg.mxu0
  %125 = vmatpush.msra.mxu0 0.0
  %126 = vmatpush.msra.mxu0 0.0
  %127 = vmatpush.msra.mxu0 0.0
  %128 = vmatpush.msra.mxu0 0.0
  %129 = vmatpush.msra.mxu0 0.0
  %130 = vmatpush.msra.mxu0 0.0
  %131 = vmatpush.msra.mxu0 0.0
  %132 = vmatpush.msra.mxu0 0.0
  %133 = vmatpush.msra.mxu0 0.0
  %134 = vmatpush.msra.mxu0 0.0
  %135 = vmatpush.msra.mxu0 0.0
  %136 = vmatpush.msra.mxu0 0.0
  %137 = vmatpush.msra.mxu0 0.0
  %138 = vmatpush.msra.mxu0 0.0
  %139 = vmatpush.msra.mxu0 %v77
  %140 = vmatpush.msra.mxu0 %v75
  %141 = vmatmul.f32.gmra.mxu0 %v85
  %v142 = vpop.f32.mrf.mxu0
  %v143 = vadd.f32 0.0, %v142
  %144 = vmatmul.f32.gmra.mxu0 %v88
  %v145 = vpop.f32.mrf.mxu0
  %v146 = vadd.f32 0.0, %v145
  %147 = vmatmul.f32.gmra.mxu0 %v91
  %v148 = vpop.f32.mrf.mxu0
  %v149 = vadd.f32 0.0, %v148
  %150 = vmatmul.f32.gmra.mxu0 %v94
  %v151 = vpop.f32.mrf.mxu0
  %v152 = vadd.f32 0.0, %v151
  %153 = vdwg.mxu0
  %v155 = vsel %vm83, %v50, 0
  %v158 = vsel %vm83, %v51, 0
  %v161 = vsel %vm83, %v52, 0
  %v164 = vsel %vm83, %v53, 0
  %166 = vmatpush.msra.mxu0 0.0
  %167 = vmatpush.msra.mxu0 0.0
  %168 = vmatpush.msra.mxu0 0.0
  %169 = vmatpush.msra.mxu0 0.0
  %170 = vmatpush.msra.mxu0 0.0
  %171 = vmatpush.msra.mxu0 0.0
  %172 = vmatpush.msra.mxu0 0.0
  %173 = vmatpush.msra.mxu0 0.0
  %174 = vmatpush.msra.mxu0 0.0
  %175 = vmatpush.msra.mxu0 0.0
  %176 = vmatpush.msra.mxu0 0.0
  %177 = vmatpush.msra.mxu0 0.0
  %178 = vmatpush.msra.mxu0 0.0
  %179 = vmatpush.msra.mxu0 0.0
  %180 = vmatpush.msra.mxu0 %v48
  %181 = vmatpush.msra.mxu0 %v46
  %182 = vmatmul.f32.gmra.mxu0 %v155
  %v183 = vpop.f32.mrf.mxu0
  %v184 = vadd.f32 %v114, %v183
  %185 = vmatmul.f32.gmra.mxu0 %v158
  %v186 = vpop.f32.mrf.mxu0
  %v187 = vadd.f32 %v117, %v186
  %188 = vmatmul.f32.gmra.mxu0 %v161
  %v189 = vpop.f32.mrf.mxu0
  %v190 = vadd.f32 %v120, %v189
  %191 = vmatmul.f32.gmra.mxu0 %v164
  %v192 = vpop.f32.mrf.mxu0
  %v193 = vadd.f32 %v123, %v192
  %194 = vdwg.mxu0
  %195 = vmatpush.msra.mxu0 0.0
  %196 = vmatpush.msra.mxu0 0.0
  %197 = vmatpush.msra.mxu0 0.0
  %198 = vmatpush.msra.mxu0 0.0
  %199 = vmatpush.msra.mxu0 0.0
  %200 = vmatpush.msra.mxu0 0.0
  %201 = vmatpush.msra.mxu0 0.0
  %202 = vmatpush.msra.mxu0 0.0
  %203 = vmatpush.msra.mxu0 0.0
  %204 = vmatpush.msra.mxu0 0.0
  %205 = vmatpush.msra.mxu0 0.0
  %206 = vmatpush.msra.mxu0 0.0
  %207 = vmatpush.msra.mxu0 0.0
  %208 = vmatpush.msra.mxu0 0.0
  %209 = vmatpush.msra.mxu0 %v49
  %210 = vmatpush.msra.mxu0 %v47
  %211 = vmatmul.f32.gmra.mxu0 %v155
  %v212 = vpop.f32.mrf.mxu0
  %v213 = vadd.f32 %v143, %v212
  %214 = vmatmul.f32.gmra.mxu0 %v158
  %v215 = vpop.f32.mrf.mxu0
  %v216 = vadd.f32 %v146, %v215
  %217 = vmatmul.f32.gmra.mxu0 %v161
  %v218 = vpop.f32.mrf.mxu0
  %v219 = vadd.f32 %v149, %v218
  %220 = vmatmul.f32.gmra.mxu0 %v164
  %v221 = vpop.f32.mrf.mxu0
  %v222 = vadd.f32 %v152, %v221
  %223 = vdwg.mxu0
  %224 = vrot.lane.b32.xlu0 %v21, 15
  %v225 = vpop.permute.xlu0 %224
  %226 = vrot.lane.b32.xlu0 %v23, 15
  %v227 = vpop.permute.xlu0 %226
  %228 = vrot.lane.b32.xlu0 %v22, 15
  %v229 = vpop.permute.xlu0 %228
  %230 = vrot.lane.b32.xlu0 %v24, 15
  %v231 = vpop.permute.xlu0 %230
  %vm232 = vcmp.lt.s32.totalorder %v34, 15
  %v233 = vsel %vm232, %v225, %v229
  %v234 = vsel %vm232, %v227, %v231
  %v235 = vsel %vm232, %v229, %v225
  %v236 = vsel %vm232, %v231, %v227
  %s237 = scalar_lea.vmem %s2, 4
  %v238 = vld [vmem:[%s237] sm:$0x3]
  %v240 = vperm.slane %v238, 0
  %v241 = vperm.slane %v238, 1
  %v244 = vmul.f32 %v235, %v240
  %v245 = vmul.f32 %v233, %v241
  %v246 = vmul.f32 %v236, %v240
  %v247 = vmul.f32 %v234, %v241
  %s248 = scalar_lea.vmem %s1, 64
  %v249 = vld [vmem:[%s248] sm:$0xff]
  %v250 = vld [vmem:[%s248 + $0x8] sm:$0xff]
  %v251 = vld [vmem:[%s248 + $0x10] sm:$0xff]
  %v252 = vld [vmem:[%s248 + $0x18] sm:$0xff]
  %v254 = vsel %vm83, %v249, 0
  %v257 = vsel %vm83, %v250, 0
  %v260 = vsel %vm83, %v251, 0
  %v263 = vsel %vm83, %v252, 0
  %265 = vmatpush.msra.mxu0 0.0
  %266 = vmatpush.msra.mxu0 0.0
  %267 = vmatpush.msra.mxu0 0.0
  %268 = vmatpush.msra.mxu0 0.0
  %269 = vmatpush.msra.mxu0 0.0
  %270 = vmatpush.msra.mxu0 0.0
  %271 = vmatpush.msra.mxu0 0.0
  %272 = vmatpush.msra.mxu0 0.0
  %273 = vmatpush.msra.mxu0 0.0
  %274 = vmatpush.msra.mxu0 0.0
  %275 = vmatpush.msra.mxu0 0.0
  %276 = vmatpush.msra.mxu0 0.0
  %277 = vmatpush.msra.mxu0 0.0
  %278 = vmatpush.msra.mxu0 0.0
  %279 = vmatpush.msra.mxu0 %v246
  %280 = vmatpush.msra.mxu0 %v244
  %281 = vmatmul.f32.gmra.mxu0 %v254
  %v282 = vpop.f32.mrf.mxu0
  %v283 = vadd.f32 0.0, %v282
  %284 = vmatmul.f32.gmra.mxu0 %v257
  %v285 = vpop.f32.mrf.mxu0
  %v286 = vadd.f32 0.0, %v285
  %287 = vmatmul.f32.gmra.mxu0 %v260
  %v288 = vpop.f32.mrf.mxu0
  %v289 = vadd.f32 0.0, %v288
  %290 = vmatmul.f32.gmra.mxu0 %v263
  %v291 = vpop.f32.mrf.mxu0
  %v292 = vadd.f32 0.0, %v291
  %293 = vdwg.mxu0
  %294 = vmatpush.msra.mxu0 0.0
  %295 = vmatpush.msra.mxu0 0.0
  %296 = vmatpush.msra.mxu0 0.0
  %297 = vmatpush.msra.mxu0 0.0
  %298 = vmatpush.msra.mxu0 0.0
  %299 = vmatpush.msra.mxu0 0.0
  %300 = vmatpush.msra.mxu0 0.0
  %301 = vmatpush.msra.mxu0 0.0
  %302 = vmatpush.msra.mxu0 0.0
  %303 = vmatpush.msra.mxu0 0.0
  %304 = vmatpush.msra.mxu0 0.0
  %305 = vmatpush.msra.mxu0 0.0
  %306 = vmatpush.msra.mxu0 0.0
  %307 = vmatpush.msra.mxu0 0.0
  %308 = vmatpush.msra.mxu0 %v247
  %309 = vmatpush.msra.mxu0 %v245
  %310 = vmatmul.f32.gmra.mxu0 %v254
  %v311 = vpop.f32.mrf.mxu0
  %v312 = vadd.f32 0.0, %v311
  %313 = vmatmul.f32.gmra.mxu0 %v257
  %v314 = vpop.f32.mrf.mxu0
  %v315 = vadd.f32 0.0, %v314
  %316 = vmatmul.f32.gmra.mxu0 %v260
  %v317 = vpop.f32.mrf.mxu0
  %v318 = vadd.f32 0.0, %v317
  %319 = vmatmul.f32.gmra.mxu0 %v263
  %v320 = vpop.f32.mrf.mxu0
  %v321 = vadd.f32 0.0, %v320
  %322 = vdwg.mxu0
  %v323 = vadd.f32 %v184, %v283
  %v324 = vadd.f32 %v213, %v312
  %v325 = vadd.f32 %v187, %v286
  %v326 = vadd.f32 %v216, %v315
  %v327 = vadd.f32 %v190, %v289
  %v328 = vadd.f32 %v219, %v318
  %v329 = vadd.f32 %v193, %v292
  %v330 = vadd.f32 %v222, %v321
  %331 = vrot.lane.b32.xlu0 %v21, 1
  %v332 = vpop.permute.xlu0 %331
  %333 = vrot.lane.b32.xlu0 %v23, 1
  %v334 = vpop.permute.xlu0 %333
  %335 = vrot.lane.b32.xlu0 %v22, 1
  %v336 = vpop.permute.xlu0 %335
  %337 = vrot.lane.b32.xlu0 %v24, 1
  %v338 = vpop.permute.xlu0 %337
  %vm339 = vcmp.lt.s32.totalorder %v34, 1
  %v340 = vsel %vm339, %v332, %v336
  %v341 = vsel %vm339, %v334, %v338
  %v342 = vsel %vm339, %v336, %v332
  %v343 = vsel %vm339, %v338, %v334
  %s344 = scalar_lea.vmem %s2, 6
  %v345 = vld [vmem:[%s344] sm:$0x3]
  %v347 = vperm.slane %v345, 0
  %v348 = vperm.slane %v345, 1
  %v351 = vmul.f32 %v342, %v347
  %v352 = vmul.f32 %v340, %v348
  %v353 = vmul.f32 %v343, %v347
  %v354 = vmul.f32 %v341, %v348
  %s355 = scalar_lea.vmem %s1, 96
  %v356 = vld [vmem:[%s355] sm:$0xff]
  %v357 = vld [vmem:[%s355 + $0x8] sm:$0xff]
  %v358 = vld [vmem:[%s355 + $0x10] sm:$0xff]
  %v359 = vld [vmem:[%s355 + $0x18] sm:$0xff]
  %v361 = vsel %vm83, %v356, 0
  %v364 = vsel %vm83, %v357, 0
  %v367 = vsel %vm83, %v358, 0
  %v370 = vsel %vm83, %v359, 0
  %372 = vmatpush.msra.mxu0 0.0
  %373 = vmatpush.msra.mxu0 0.0
  %374 = vmatpush.msra.mxu0 0.0
  %375 = vmatpush.msra.mxu0 0.0
  %376 = vmatpush.msra.mxu0 0.0
  %377 = vmatpush.msra.mxu0 0.0
  %378 = vmatpush.msra.mxu0 0.0
  %379 = vmatpush.msra.mxu0 0.0
  %380 = vmatpush.msra.mxu0 0.0
  %381 = vmatpush.msra.mxu0 0.0
  %382 = vmatpush.msra.mxu0 0.0
  %383 = vmatpush.msra.mxu0 0.0
  %384 = vmatpush.msra.mxu0 0.0
  %385 = vmatpush.msra.mxu0 0.0
  %386 = vmatpush.msra.mxu0 %v353
  %387 = vmatpush.msra.mxu0 %v351
  %388 = vmatmul.f32.gmra.mxu0 %v361
  %v389 = vpop.f32.mrf.mxu0
  %v390 = vadd.f32 0.0, %v389
  %391 = vmatmul.f32.gmra.mxu0 %v364
  %v392 = vpop.f32.mrf.mxu0
  %v393 = vadd.f32 0.0, %v392
  %394 = vmatmul.f32.gmra.mxu0 %v367
  %v395 = vpop.f32.mrf.mxu0
  %v396 = vadd.f32 0.0, %v395
  %397 = vmatmul.f32.gmra.mxu0 %v370
  %v398 = vpop.f32.mrf.mxu0
  %v399 = vadd.f32 0.0, %v398
  %400 = vdwg.mxu0
  %401 = vmatpush.msra.mxu0 0.0
  %402 = vmatpush.msra.mxu0 0.0
  %403 = vmatpush.msra.mxu0 0.0
  %404 = vmatpush.msra.mxu0 0.0
  %405 = vmatpush.msra.mxu0 0.0
  %406 = vmatpush.msra.mxu0 0.0
  %407 = vmatpush.msra.mxu0 0.0
  %408 = vmatpush.msra.mxu0 0.0
  %409 = vmatpush.msra.mxu0 0.0
  %410 = vmatpush.msra.mxu0 0.0
  %411 = vmatpush.msra.mxu0 0.0
  %412 = vmatpush.msra.mxu0 0.0
  %413 = vmatpush.msra.mxu0 0.0
  %414 = vmatpush.msra.mxu0 0.0
  %415 = vmatpush.msra.mxu0 %v354
  %416 = vmatpush.msra.mxu0 %v352
  %417 = vmatmul.f32.gmra.mxu0 %v361
  %v418 = vpop.f32.mrf.mxu0
  %v419 = vadd.f32 0.0, %v418
  %420 = vmatmul.f32.gmra.mxu0 %v364
  %v421 = vpop.f32.mrf.mxu0
  %v422 = vadd.f32 0.0, %v421
  %423 = vmatmul.f32.gmra.mxu0 %v367
  %v424 = vpop.f32.mrf.mxu0
  %v425 = vadd.f32 0.0, %v424
  %426 = vmatmul.f32.gmra.mxu0 %v370
  %v427 = vpop.f32.mrf.mxu0
  %v428 = vadd.f32 0.0, %v427
  %429 = vdwg.mxu0
  %v430 = vadd.f32 %v323, %v390
  %v431 = vadd.f32 %v324, %v419
  %v432 = vadd.f32 %v325, %v393
  %v433 = vadd.f32 %v326, %v422
  %v434 = vadd.f32 %v327, %v396
  %v435 = vadd.f32 %v328, %v425
  %v436 = vadd.f32 %v329, %v399
  %v437 = vadd.f32 %v330, %v428
  %s438 = scalar_lea.vmem %s1, 128
  %v439 = vld [vmem:[%s438] sm:$0xff]
  %v440 = vld [vmem:[%s438 + $0x8] sm:$0xff]
  %v441 = vld [vmem:[%s438 + $0x10] sm:$0xff]
  %v442 = vld [vmem:[%s438 + $0x18] sm:$0xff]
  %v444 = vsel %vm83, %v439, 0
  %v447 = vsel %vm83, %v440, 0
  %v450 = vsel %vm83, %v441, 0
  %v453 = vsel %vm83, %v442, 0
  %455 = vmatpush.msra.mxu0 0.0
  %456 = vmatpush.msra.mxu0 0.0
  %457 = vmatpush.msra.mxu0 0.0
  %458 = vmatpush.msra.mxu0 0.0
  %459 = vmatpush.msra.mxu0 0.0
  %460 = vmatpush.msra.mxu0 0.0
  %461 = vmatpush.msra.mxu0 0.0
  %462 = vmatpush.msra.mxu0 0.0
  %463 = vmatpush.msra.mxu0 0.0
  %464 = vmatpush.msra.mxu0 0.0
  %465 = vmatpush.msra.mxu0 0.0
  %466 = vmatpush.msra.mxu0 0.0
  %467 = vmatpush.msra.mxu0 0.0
  %468 = vmatpush.msra.mxu0 0.0
  %469 = vmatpush.msra.mxu0 %v23
  %470 = vmatpush.msra.mxu0 %v21
  %471 = vmatmul.f32.gmra.mxu0 %v444
  %v472 = vpop.f32.mrf.mxu0
  %v473 = vadd.f32 0.0, %v472
  %474 = vmatmul.f32.gmra.mxu0 %v447
  %v475 = vpop.f32.mrf.mxu0
  %v476 = vadd.f32 0.0, %v475
  %477 = vmatmul.f32.gmra.mxu0 %v450
  %v478 = vpop.f32.mrf.mxu0
  %v479 = vadd.f32 0.0, %v478
  %480 = vmatmul.f32.gmra.mxu0 %v453
  %v481 = vpop.f32.mrf.mxu0
  %v482 = vadd.f32 0.0, %v481
  %483 = vdwg.mxu0
  %484 = vmatpush.msra.mxu0 0.0
  %485 = vmatpush.msra.mxu0 0.0
  %486 = vmatpush.msra.mxu0 0.0
  %487 = vmatpush.msra.mxu0 0.0
  %488 = vmatpush.msra.mxu0 0.0
  %489 = vmatpush.msra.mxu0 0.0
  %490 = vmatpush.msra.mxu0 0.0
  %491 = vmatpush.msra.mxu0 0.0
  %492 = vmatpush.msra.mxu0 0.0
  %493 = vmatpush.msra.mxu0 0.0
  %494 = vmatpush.msra.mxu0 0.0
  %495 = vmatpush.msra.mxu0 0.0
  %496 = vmatpush.msra.mxu0 0.0
  %497 = vmatpush.msra.mxu0 0.0
  %498 = vmatpush.msra.mxu0 %v24
  %499 = vmatpush.msra.mxu0 %v22
  %500 = vmatmul.f32.gmra.mxu0 %v444
  %v501 = vpop.f32.mrf.mxu0
  %v502 = vadd.f32 0.0, %v501
  %503 = vmatmul.f32.gmra.mxu0 %v447
  %v504 = vpop.f32.mrf.mxu0
  %v505 = vadd.f32 0.0, %v504
  %506 = vmatmul.f32.gmra.mxu0 %v450
  %v507 = vpop.f32.mrf.mxu0
  %v508 = vadd.f32 0.0, %v507
  %509 = vmatmul.f32.gmra.mxu0 %v453
  %v510 = vpop.f32.mrf.mxu0
  %v511 = vadd.f32 0.0, %v510
  %512 = vdwg.mxu0
  %v513 = vadd.f32 %v430, %v473
  %v514 = vadd.f32 %v431, %v502
  %v515 = vadd.f32 %v432, %v476
  %v516 = vadd.f32 %v433, %v505
  %v517 = vadd.f32 %v434, %v479
  %v518 = vadd.f32 %v435, %v508
  %v519 = vadd.f32 %v436, %v482
  %v520 = vadd.f32 %v437, %v511
  %521 = vrot.lane.b32.xlu0 %v21, 127
  %v522 = vpop.permute.xlu0 %521
  %523 = vrot.lane.b32.xlu0 %v23, 127
  %v524 = vpop.permute.xlu0 %523
  %525 = vrot.lane.b32.xlu0 %v22, 127
  %v526 = vpop.permute.xlu0 %525
  %527 = vrot.lane.b32.xlu0 %v24, 127
  %v528 = vpop.permute.xlu0 %527
  %vm529 = vcmp.lt.s32.totalorder %v34, 127
  %v530 = vsel %vm529, %v522, %v526
  %v531 = vsel %vm529, %v524, %v528
  %v532 = vsel %vm529, %v526, %v522
  %v533 = vsel %vm529, %v528, %v524
  %s534 = scalar_lea.vmem %s2, 10
  %v535 = vld [vmem:[%s534] sm:$0x3]
  %v537 = vperm.slane %v535, 0
  %v538 = vperm.slane %v535, 1
  %v541 = vmul.f32 %v530, %v537
  %v542 = vmul.f32 %v532, %v538
  %v543 = vmul.f32 %v531, %v537
  %v544 = vmul.f32 %v533, %v538
  %s545 = scalar_lea.vmem %s1, 160
  %v546 = vld [vmem:[%s545] sm:$0xff]
  %v547 = vld [vmem:[%s545 + $0x8] sm:$0xff]
  %v548 = vld [vmem:[%s545 + $0x10] sm:$0xff]
  %v549 = vld [vmem:[%s545 + $0x18] sm:$0xff]
  %v551 = vsel %vm83, %v546, 0
  %v554 = vsel %vm83, %v547, 0
  %v557 = vsel %vm83, %v548, 0
  %v560 = vsel %vm83, %v549, 0
  %562 = vmatpush.msra.mxu0 0.0
  %563 = vmatpush.msra.mxu0 0.0
  %564 = vmatpush.msra.mxu0 0.0
  %565 = vmatpush.msra.mxu0 0.0
  %566 = vmatpush.msra.mxu0 0.0
  %567 = vmatpush.msra.mxu0 0.0
  %568 = vmatpush.msra.mxu0 0.0
  %569 = vmatpush.msra.mxu0 0.0
  %570 = vmatpush.msra.mxu0 0.0
  %571 = vmatpush.msra.mxu0 0.0
  %572 = vmatpush.msra.mxu0 0.0
  %573 = vmatpush.msra.mxu0 0.0
  %574 = vmatpush.msra.mxu0 0.0
  %575 = vmatpush.msra.mxu0 0.0
  %576 = vmatpush.msra.mxu0 %v543
  %577 = vmatpush.msra.mxu0 %v541
  %578 = vmatmul.f32.gmra.mxu0 %v551
  %v579 = vpop.f32.mrf.mxu0
  %v580 = vadd.f32 0.0, %v579
  %581 = vmatmul.f32.gmra.mxu0 %v554
  %v582 = vpop.f32.mrf.mxu0
  %v583 = vadd.f32 0.0, %v582
  %584 = vmatmul.f32.gmra.mxu0 %v557
  %v585 = vpop.f32.mrf.mxu0
  %v586 = vadd.f32 0.0, %v585
  %587 = vmatmul.f32.gmra.mxu0 %v560
  %v588 = vpop.f32.mrf.mxu0
  %v589 = vadd.f32 0.0, %v588
  %590 = vdwg.mxu0
  %591 = vmatpush.msra.mxu0 0.0
  %592 = vmatpush.msra.mxu0 0.0
  %593 = vmatpush.msra.mxu0 0.0
  %594 = vmatpush.msra.mxu0 0.0
  %595 = vmatpush.msra.mxu0 0.0
  %596 = vmatpush.msra.mxu0 0.0
  %597 = vmatpush.msra.mxu0 0.0
  %598 = vmatpush.msra.mxu0 0.0
  %599 = vmatpush.msra.mxu0 0.0
  %600 = vmatpush.msra.mxu0 0.0
  %601 = vmatpush.msra.mxu0 0.0
  %602 = vmatpush.msra.mxu0 0.0
  %603 = vmatpush.msra.mxu0 0.0
  %604 = vmatpush.msra.mxu0 0.0
  %605 = vmatpush.msra.mxu0 %v544
  %606 = vmatpush.msra.mxu0 %v542
  %607 = vmatmul.f32.gmra.mxu0 %v551
  %v608 = vpop.f32.mrf.mxu0
  %v609 = vadd.f32 0.0, %v608
  %610 = vmatmul.f32.gmra.mxu0 %v554
  %v611 = vpop.f32.mrf.mxu0
  %v612 = vadd.f32 0.0, %v611
  %613 = vmatmul.f32.gmra.mxu0 %v557
  %v614 = vpop.f32.mrf.mxu0
  %v615 = vadd.f32 0.0, %v614
  %616 = vmatmul.f32.gmra.mxu0 %v560
  %v617 = vpop.f32.mrf.mxu0
  %v618 = vadd.f32 0.0, %v617
  %619 = vdwg.mxu0
  %v620 = vadd.f32 %v513, %v580
  %v621 = vadd.f32 %v514, %v609
  %v622 = vadd.f32 %v515, %v583
  %v623 = vadd.f32 %v516, %v612
  %v624 = vadd.f32 %v517, %v586
  %v625 = vadd.f32 %v518, %v615
  %v626 = vadd.f32 %v519, %v589
  %v627 = vadd.f32 %v520, %v618
  %628 = vrot.lane.b32.xlu0 %v21, 113
  %v629 = vpop.permute.xlu0 %628
  %630 = vrot.lane.b32.xlu0 %v23, 113
  %v631 = vpop.permute.xlu0 %630
  %632 = vrot.lane.b32.xlu0 %v22, 113
  %v633 = vpop.permute.xlu0 %632
  %634 = vrot.lane.b32.xlu0 %v24, 113
  %v635 = vpop.permute.xlu0 %634
  %vm636 = vcmp.lt.s32.totalorder %v34, 113
  %v637 = vsel %vm636, %v629, %v633
  %v638 = vsel %vm636, %v631, %v635
  %v639 = vsel %vm636, %v633, %v629
  %v640 = vsel %vm636, %v635, %v631
  %s641 = scalar_lea.vmem %s2, 12
  %v642 = vld [vmem:[%s641] sm:$0x3]
  %v644 = vperm.slane %v642, 0
  %v645 = vperm.slane %v642, 1
  %v648 = vmul.f32 %v637, %v644
  %v649 = vmul.f32 %v639, %v645
  %v650 = vmul.f32 %v638, %v644
  %v651 = vmul.f32 %v640, %v645
  %s652 = scalar_lea.vmem %s1, 192
  %v653 = vld [vmem:[%s652] sm:$0xff]
  %v654 = vld [vmem:[%s652 + $0x8] sm:$0xff]
  %v655 = vld [vmem:[%s652 + $0x10] sm:$0xff]
  %v656 = vld [vmem:[%s652 + $0x18] sm:$0xff]
  %v658 = vsel %vm83, %v653, 0
  %v661 = vsel %vm83, %v654, 0
  %v664 = vsel %vm83, %v655, 0
  %v667 = vsel %vm83, %v656, 0
  %669 = vmatpush.msra.mxu0 0.0
  %670 = vmatpush.msra.mxu0 0.0
  %671 = vmatpush.msra.mxu0 0.0
  %672 = vmatpush.msra.mxu0 0.0
  %673 = vmatpush.msra.mxu0 0.0
  %674 = vmatpush.msra.mxu0 0.0
  %675 = vmatpush.msra.mxu0 0.0
  %676 = vmatpush.msra.mxu0 0.0
  %677 = vmatpush.msra.mxu0 0.0
  %678 = vmatpush.msra.mxu0 0.0
  %679 = vmatpush.msra.mxu0 0.0
  %680 = vmatpush.msra.mxu0 0.0
  %681 = vmatpush.msra.mxu0 0.0
  %682 = vmatpush.msra.mxu0 0.0
  %683 = vmatpush.msra.mxu0 %v650
  %684 = vmatpush.msra.mxu0 %v648
  %685 = vmatmul.f32.gmra.mxu0 %v658
  %v686 = vpop.f32.mrf.mxu0
  %v687 = vadd.f32 0.0, %v686
  %688 = vmatmul.f32.gmra.mxu0 %v661
  %v689 = vpop.f32.mrf.mxu0
  %v690 = vadd.f32 0.0, %v689
  %691 = vmatmul.f32.gmra.mxu0 %v664
  %v692 = vpop.f32.mrf.mxu0
  %v693 = vadd.f32 0.0, %v692
  %694 = vmatmul.f32.gmra.mxu0 %v667
  %v695 = vpop.f32.mrf.mxu0
  %v696 = vadd.f32 0.0, %v695
  %697 = vdwg.mxu0
  %698 = vmatpush.msra.mxu0 0.0
  %699 = vmatpush.msra.mxu0 0.0
  %700 = vmatpush.msra.mxu0 0.0
  %701 = vmatpush.msra.mxu0 0.0
  %702 = vmatpush.msra.mxu0 0.0
  %703 = vmatpush.msra.mxu0 0.0
  %704 = vmatpush.msra.mxu0 0.0
  %705 = vmatpush.msra.mxu0 0.0
  %706 = vmatpush.msra.mxu0 0.0
  %707 = vmatpush.msra.mxu0 0.0
  %708 = vmatpush.msra.mxu0 0.0
  %709 = vmatpush.msra.mxu0 0.0
  %710 = vmatpush.msra.mxu0 0.0
  %711 = vmatpush.msra.mxu0 0.0
  %712 = vmatpush.msra.mxu0 %v651
  %713 = vmatpush.msra.mxu0 %v649
  %714 = vmatmul.f32.gmra.mxu0 %v658
  %v715 = vpop.f32.mrf.mxu0
  %v716 = vadd.f32 0.0, %v715
  %717 = vmatmul.f32.gmra.mxu0 %v661
  %v718 = vpop.f32.mrf.mxu0
  %v719 = vadd.f32 0.0, %v718
  %720 = vmatmul.f32.gmra.mxu0 %v664
  %v721 = vpop.f32.mrf.mxu0
  %v722 = vadd.f32 0.0, %v721
  %723 = vmatmul.f32.gmra.mxu0 %v667
  %v724 = vpop.f32.mrf.mxu0
  %v725 = vadd.f32 0.0, %v724
  %726 = vdwg.mxu0
  %v727 = vadd.f32 %v620, %v687
  %v728 = vadd.f32 %v621, %v716
  %v729 = vadd.f32 %v622, %v690
  %v730 = vadd.f32 %v623, %v719
  %v731 = vadd.f32 %v624, %v693
  %v732 = vadd.f32 %v625, %v722
  %v733 = vadd.f32 %v626, %v696
  %v734 = vadd.f32 %v627, %v725
  %735 = vrot.lane.b32.xlu0 %v21, 112
  %v736 = vpop.permute.xlu0 %735
  %737 = vrot.lane.b32.xlu0 %v23, 112
  %v738 = vpop.permute.xlu0 %737
  %739 = vrot.lane.b32.xlu0 %v22, 112
  %v740 = vpop.permute.xlu0 %739
  %741 = vrot.lane.b32.xlu0 %v24, 112
  %v742 = vpop.permute.xlu0 %741
  %vm743 = vcmp.lt.s32.totalorder %v34, 112
  %v744 = vsel %vm743, %v736, %v740
  %v745 = vsel %vm743, %v738, %v742
  %v746 = vsel %vm743, %v740, %v736
  %v747 = vsel %vm743, %v742, %v738
  %s748 = scalar_lea.vmem %s2, 14
  %v749 = vld [vmem:[%s748] sm:$0x3]
  %v751 = vperm.slane %v749, 0
  %v752 = vperm.slane %v749, 1
  %v755 = vmul.f32 %v744, %v751
  %v756 = vmul.f32 %v746, %v752
  %v757 = vmul.f32 %v745, %v751
  %v758 = vmul.f32 %v747, %v752
  %s759 = scalar_lea.vmem %s1, 224
  %v760 = vld [vmem:[%s759] sm:$0xff]
  %v761 = vld [vmem:[%s759 + $0x8] sm:$0xff]
  %v762 = vld [vmem:[%s759 + $0x10] sm:$0xff]
  %v763 = vld [vmem:[%s759 + $0x18] sm:$0xff]
  %v765 = vsel %vm83, %v760, 0
  %v768 = vsel %vm83, %v761, 0
  %v771 = vsel %vm83, %v762, 0
  %v774 = vsel %vm83, %v763, 0
  %776 = vmatpush.msra.mxu0 0.0
  %777 = vmatpush.msra.mxu0 0.0
  %778 = vmatpush.msra.mxu0 0.0
  %779 = vmatpush.msra.mxu0 0.0
  %780 = vmatpush.msra.mxu0 0.0
  %781 = vmatpush.msra.mxu0 0.0
  %782 = vmatpush.msra.mxu0 0.0
  %783 = vmatpush.msra.mxu0 0.0
  %784 = vmatpush.msra.mxu0 0.0
  %785 = vmatpush.msra.mxu0 0.0
  %786 = vmatpush.msra.mxu0 0.0
  %787 = vmatpush.msra.mxu0 0.0
  %788 = vmatpush.msra.mxu0 0.0
  %789 = vmatpush.msra.mxu0 0.0
  %790 = vmatpush.msra.mxu0 %v757
  %791 = vmatpush.msra.mxu0 %v755
  %792 = vmatmul.f32.gmra.mxu0 %v765
  %v793 = vpop.f32.mrf.mxu0
  %v794 = vadd.f32 0.0, %v793
  %795 = vmatmul.f32.gmra.mxu0 %v768
  %v796 = vpop.f32.mrf.mxu0
  %v797 = vadd.f32 0.0, %v796
  %798 = vmatmul.f32.gmra.mxu0 %v771
  %v799 = vpop.f32.mrf.mxu0
  %v800 = vadd.f32 0.0, %v799
  %801 = vmatmul.f32.gmra.mxu0 %v774
  %v802 = vpop.f32.mrf.mxu0
  %v803 = vadd.f32 0.0, %v802
  %804 = vdwg.mxu0
  %805 = vmatpush.msra.mxu0 0.0
  %806 = vmatpush.msra.mxu0 0.0
  %807 = vmatpush.msra.mxu0 0.0
  %808 = vmatpush.msra.mxu0 0.0
  %809 = vmatpush.msra.mxu0 0.0
  %810 = vmatpush.msra.mxu0 0.0
  %811 = vmatpush.msra.mxu0 0.0
  %812 = vmatpush.msra.mxu0 0.0
  %813 = vmatpush.msra.mxu0 0.0
  %814 = vmatpush.msra.mxu0 0.0
  %815 = vmatpush.msra.mxu0 0.0
  %816 = vmatpush.msra.mxu0 0.0
  %817 = vmatpush.msra.mxu0 0.0
  %818 = vmatpush.msra.mxu0 0.0
  %819 = vmatpush.msra.mxu0 %v758
  %820 = vmatpush.msra.mxu0 %v756
  %821 = vmatmul.f32.gmra.mxu0 %v765
  %v822 = vpop.f32.mrf.mxu0
  %v823 = vadd.f32 0.0, %v822
  %824 = vmatmul.f32.gmra.mxu0 %v768
  %v825 = vpop.f32.mrf.mxu0
  %v826 = vadd.f32 0.0, %v825
  %827 = vmatmul.f32.gmra.mxu0 %v771
  %v828 = vpop.f32.mrf.mxu0
  %v829 = vadd.f32 0.0, %v828
  %830 = vmatmul.f32.gmra.mxu0 %v774
  %v831 = vpop.f32.mrf.mxu0
  %v832 = vadd.f32 0.0, %v831
  %833 = vdwg.mxu0
  %v834 = vadd.f32 %v727, %v794
  %v835 = vadd.f32 %v728, %v823
  %v836 = vadd.f32 %v729, %v797
  %v837 = vadd.f32 %v730, %v826
  %v838 = vadd.f32 %v731, %v800
  %v839 = vadd.f32 %v732, %v829
  %v840 = vadd.f32 %v733, %v803
  %v841 = vadd.f32 %v734, %v832
  %842 = vrot.lane.b32.xlu0 %v21, 111
  %v843 = vpop.permute.xlu0 %842
  %844 = vrot.lane.b32.xlu0 %v23, 111
  %v845 = vpop.permute.xlu0 %844
  %846 = vrot.lane.b32.xlu0 %v22, 111
  %v847 = vpop.permute.xlu0 %846
  %848 = vrot.lane.b32.xlu0 %v24, 111
  %v849 = vpop.permute.xlu0 %848
  %vm850 = vcmp.lt.s32.totalorder %v34, 111
  %v851 = vsel %vm850, %v843, %v847
  %v852 = vsel %vm850, %v845, %v849
  %v853 = vsel %vm850, %v847, %v843
  %v854 = vsel %vm850, %v849, %v845
  %s855 = scalar_lea.vmem %s2, 16
  %v856 = vld [vmem:[%s855] sm:$0x3]
  %v858 = vperm.slane %v856, 0
  %v859 = vperm.slane %v856, 1
  %v862 = vmul.f32 %v851, %v858
  %v863 = vmul.f32 %v853, %v859
  %v864 = vmul.f32 %v852, %v858
  %v865 = vmul.f32 %v854, %v859
  %s866 = scalar_lea.vmem %s1, 256
  %v867 = vld [vmem:[%s866] sm:$0xff]
  %v868 = vld [vmem:[%s866 + $0x8] sm:$0xff]
  %v869 = vld [vmem:[%s866 + $0x10] sm:$0xff]
  %v870 = vld [vmem:[%s866 + $0x18] sm:$0xff]
  %v872 = vsel %vm83, %v867, 0
  %v875 = vsel %vm83, %v868, 0
  %v878 = vsel %vm83, %v869, 0
  %v881 = vsel %vm83, %v870, 0
  %883 = vmatpush.msra.mxu0 0.0
  %884 = vmatpush.msra.mxu0 0.0
  %885 = vmatpush.msra.mxu0 0.0
  %886 = vmatpush.msra.mxu0 0.0
  %887 = vmatpush.msra.mxu0 0.0
  %888 = vmatpush.msra.mxu0 0.0
  %889 = vmatpush.msra.mxu0 0.0
  %890 = vmatpush.msra.mxu0 0.0
  %891 = vmatpush.msra.mxu0 0.0
  %892 = vmatpush.msra.mxu0 0.0
  %893 = vmatpush.msra.mxu0 0.0
  %894 = vmatpush.msra.mxu0 0.0
  %895 = vmatpush.msra.mxu0 0.0
  %896 = vmatpush.msra.mxu0 0.0
  %897 = vmatpush.msra.mxu0 %v864
  %898 = vmatpush.msra.mxu0 %v862
  %899 = vmatmul.f32.gmra.mxu0 %v872
  %v900 = vpop.f32.mrf.mxu0
  %v901 = vadd.f32 0.0, %v900
  %902 = vmatmul.f32.gmra.mxu0 %v875
  %v903 = vpop.f32.mrf.mxu0
  %v904 = vadd.f32 0.0, %v903
  %905 = vmatmul.f32.gmra.mxu0 %v878
  %v906 = vpop.f32.mrf.mxu0
  %v907 = vadd.f32 0.0, %v906
  %908 = vmatmul.f32.gmra.mxu0 %v881
  %v909 = vpop.f32.mrf.mxu0
  %v910 = vadd.f32 0.0, %v909
  %911 = vdwg.mxu0
  %912 = vmatpush.msra.mxu0 0.0
  %913 = vmatpush.msra.mxu0 0.0
  %914 = vmatpush.msra.mxu0 0.0
  %915 = vmatpush.msra.mxu0 0.0
  %916 = vmatpush.msra.mxu0 0.0
  %917 = vmatpush.msra.mxu0 0.0
  %918 = vmatpush.msra.mxu0 0.0
  %919 = vmatpush.msra.mxu0 0.0
  %920 = vmatpush.msra.mxu0 0.0
  %921 = vmatpush.msra.mxu0 0.0
  %922 = vmatpush.msra.mxu0 0.0
  %923 = vmatpush.msra.mxu0 0.0
  %924 = vmatpush.msra.mxu0 0.0
  %925 = vmatpush.msra.mxu0 0.0
  %926 = vmatpush.msra.mxu0 %v865
  %927 = vmatpush.msra.mxu0 %v863
  %928 = vmatmul.f32.gmra.mxu0 %v872
  %v929 = vpop.f32.mrf.mxu0
  %v930 = vadd.f32 0.0, %v929
  %931 = vmatmul.f32.gmra.mxu0 %v875
  %v932 = vpop.f32.mrf.mxu0
  %v933 = vadd.f32 0.0, %v932
  %934 = vmatmul.f32.gmra.mxu0 %v878
  %v935 = vpop.f32.mrf.mxu0
  %v936 = vadd.f32 0.0, %v935
  %937 = vmatmul.f32.gmra.mxu0 %v881
  %v938 = vpop.f32.mrf.mxu0
  %v939 = vadd.f32 0.0, %v938
  %940 = vdwg.mxu0
  %v941 = vadd.f32 %v834, %v901
  %v942 = vadd.f32 %v835, %v930
  %v943 = vadd.f32 %v836, %v904
  %v944 = vadd.f32 %v837, %v933
  %v945 = vadd.f32 %v838, %v907
  %v946 = vadd.f32 %v839, %v936
  %v947 = vadd.f32 %v840, %v910
  %v948 = vadd.f32 %v841, %v939
  %v949 = vadd.f32 %v941, %v942
  %950 = vadd.xlane.f32.xlu0 %v949
  %v951 = vpop.xlane.xlu0 %950
  %v952 = vadd.f32 %v943, %v944
  %953 = vadd.xlane.f32.xlu0 %v952
  %v954 = vpop.xlane.xlu0 %953
  %v955 = vadd.f32 %v945, %v946
  %956 = vadd.xlane.f32.xlu0 %v955
  %v957 = vpop.xlane.xlu0 %956
  %v958 = vadd.f32 %v947, %v948
  %959 = vadd.xlane.f32.xlu0 %v958
  %v960 = vpop.xlane.xlu0 %959
  %v961 = vmul.f32 %v17, 256.0
  %v962 = vmul.f32 %v18, 256.0
  %v963 = vmul.f32 %v19, 256.0
  %v964 = vmul.f32 %v20, 256.0
  %v965 = vadd.f32 %v951, %v961
  %v966 = vadd.f32 %v954, %v962
  %v967 = vadd.f32 %v957, %v963
  %v968 = vadd.f32 %v960, %v964
  %vm969 = vcmask 7168
  %v970 = vsel %vm969, %v965, 0.0
  %v971 = vsel %vm969, %v966, 0.0
  %v972 = vadd.f32 %v970, %v971
  %v973 = vrot.slane %v972, 4
  %v974 = vadd.f32 %v972, %v973
  %v975 = vrot.slane %v974, 2
  %v976 = vadd.f32 %v974, %v975
  %v977 = vrot.slane %v976, 1
  %v978 = vadd.f32 %v976, %v977
  %v979 = vsel %vm969, %v967, 0.0
  %v980 = vsel %vm969, %v968, 0.0
  %v981 = vadd.f32 %v979, %v980
  %v982 = vrot.slane %v981, 4
  %v983 = vadd.f32 %v981, %v982
  %v984 = vrot.slane %v983, 2
  %v985 = vadd.f32 %v983, %v984
  %v986 = vrot.slane %v985, 1
  %v987 = vadd.f32 %v985, %v986
  %v988 = vmul.f32 %v978, 0.00024414063
  %v989 = vmul.f32 %v987, 0.00024414063
  %v990 = vsub.f32 %v988, %v17
  %v991 = vsub.f32 %v988, %v18
  %v992 = vsub.f32 %v989, %v19
  %v993 = vsub.f32 %v989, %v20
  %995 = vset.pattern.permute.xlu0 0
  %996 = vperm.xlu0 %995, %v990
  %v997 = vpop.permute.xlu0 %996
  %1000 = vset.pattern.permute.xlu0 0
  %1001 = vperm.xlu0 %1000, %v991
  %v1002 = vpop.permute.xlu0 %1001
  %1005 = vset.pattern.permute.xlu0 0
  %1006 = vperm.xlu0 %1005, %v992
  %v1007 = vpop.permute.xlu0 %1006
  %1010 = vset.pattern.permute.xlu0 0
  %1011 = vperm.xlu0 %1010, %v993
  %v1012 = vpop.permute.xlu0 %1011
  %v1014 = vsub.f32 %v941, %v997
  %v1015 = vsub.f32 %v942, %v997
  %v1016 = vsub.f32 %v943, %v1002
  %v1017 = vsub.f32 %v944, %v1002
  %v1018 = vsub.f32 %v945, %v1007
  %v1019 = vsub.f32 %v946, %v1007
  %v1020 = vsub.f32 %v947, %v1012
  %v1021 = vsub.f32 %v948, %v1012
  %v1022 = vmul.f32 %v1014, %v1014
  %v1023 = vmul.f32 %v1015, %v1015
  %v1024 = vmul.f32 %v1016, %v1016
  %v1025 = vmul.f32 %v1017, %v1017
  %v1026 = vmul.f32 %v1018, %v1018
  %v1027 = vmul.f32 %v1019, %v1019
  %v1028 = vmul.f32 %v1020, %v1020
  %v1029 = vmul.f32 %v1021, %v1021
  %v1030 = vadd.f32 %v1022, %v1023
  %1031 = vadd.xlane.f32.xlu0 %v1030
  %v1032 = vpop.xlane.xlu0 %1031
  %v1033 = vadd.f32 %v1024, %v1025
  %1034 = vadd.xlane.f32.xlu0 %v1033
  %v1035 = vpop.xlane.xlu0 %1034
  %v1036 = vadd.f32 %v1026, %v1027
  %1037 = vadd.xlane.f32.xlu0 %v1036
  %v1038 = vpop.xlane.xlu0 %1037
  %v1039 = vadd.f32 %v1028, %v1029
  %1040 = vadd.xlane.f32.xlu0 %v1039
  %v1041 = vpop.xlane.xlu0 %1040
  %v1042 = vadd.f32 %v1032, %v1035
  %v1043 = vrot.slane %v1042, 4
  %v1044 = vadd.f32 %v1042, %v1043
  %v1045 = vrot.slane %v1044, 2
  %v1046 = vadd.f32 %v1044, %v1045
  %v1047 = vrot.slane %v1046, 1
  %v1048 = vadd.f32 %v1046, %v1047
  %v1049 = vadd.f32 %v1038, %v1041
  %v1050 = vrot.slane %v1049, 4
  %v1051 = vadd.f32 %v1049, %v1050
  %v1052 = vrot.slane %v1051, 2
  %v1053 = vadd.f32 %v1051, %v1052
  %v1054 = vrot.slane %v1053, 1
  %v1055 = vadd.f32 %v1053, %v1054
  %v1056 = vmul.f32 %v1048, 0.00024414063
  %v1057 = vmul.f32 %v1055, 0.00024414063
  %v1058 = vadd.f32 %v1056, 1e-05
  %v1059 = vadd.f32 %v1057, 1e-05
  %v1060 = vrsqrt.pop %v1058
  %v1061 = vmul.f32 %v1060, %v1058
  %v1062 = vmul.f32 %v1061, %v1060
  %v1063 = vmul.f32 0.5, %v1062
  %v1064 = vsub.f32 1.5, %v1063
  %v1065 = vmul.f32 %v1060, %v1064
  %vm1066 = vweird.f32 %v1058
  %vm1067 = vweird.f32 %v1060
  %vm1068 = vmor %vm1066, %vm1067
  %v1069 = vsel %vm1068, %v1060, %v1065
  %v1070 = vrsqrt.pop %v1059
  %v1071 = vmul.f32 %v1070, %v1059
  %v1072 = vmul.f32 %v1071, %v1070
  %v1073 = vmul.f32 0.5, %v1072
  %v1074 = vsub.f32 1.5, %v1073
  %v1075 = vmul.f32 %v1070, %v1074
  %vm1076 = vweird.f32 %v1059
  %vm1077 = vweird.f32 %v1070
  %vm1078 = vmor %vm1076, %vm1077
  %v1079 = vsel %vm1078, %v1070, %v1075
  %v1080 = vmul.f32 %v1069, %v17
  %v1081 = vmul.f32 %v1069, %v18
  %v1082 = vmul.f32 %v1079, %v19
  %v1083 = vmul.f32 %v1079, %v20
  %1085 = vset.pattern.permute.xlu0 1
  %1086 = vperm.xlu0 %1085, %v1080
  %v1087 = vpop.permute.xlu0 %1086
  %1090 = vset.pattern.permute.xlu0 1
  %1091 = vperm.xlu0 %1090, %v1081
  %v1092 = vpop.permute.xlu0 %1091
  %1095 = vset.pattern.permute.xlu0 1
  %1096 = vperm.xlu0 %1095, %v1082
  %v1097 = vpop.permute.xlu0 %1096
  %1100 = vset.pattern.permute.xlu0 1
  %1101 = vperm.xlu0 %1100, %v1083
  %v1102 = vpop.permute.xlu0 %1101
  %v1104 = vmul.f32 %v1014, %v1087
  %v1105 = vmul.f32 %v1015, %v1087
  %v1106 = vmul.f32 %v1016, %v1092
  %v1107 = vmul.f32 %v1017, %v1092
  %v1108 = vmul.f32 %v1018, %v1097
  %v1109 = vmul.f32 %v1019, %v1097
  %v1110 = vmul.f32 %v1020, %v1102
  %v1111 = vmul.f32 %v1021, %v1102
  %1113 = vset.pattern.permute.xlu0 2
  %1114 = vperm.xlu0 %1113, %v17
  %v1115 = vpop.permute.xlu0 %1114
  %1118 = vset.pattern.permute.xlu0 2
  %1119 = vperm.xlu0 %1118, %v18
  %v1120 = vpop.permute.xlu0 %1119
  %1123 = vset.pattern.permute.xlu0 2
  %1124 = vperm.xlu0 %1123, %v19
  %v1125 = vpop.permute.xlu0 %1124
  %1128 = vset.pattern.permute.xlu0 2
  %1129 = vperm.xlu0 %1128, %v20
  %v1130 = vpop.permute.xlu0 %1129
  %v1132 = vadd.f32 %v1104, %v1115
  %v1133 = vadd.f32 %v1105, %v1115
  %v1134 = vadd.f32 %v1106, %v1120
  %v1135 = vadd.f32 %v1107, %v1120
  %v1136 = vadd.f32 %v1108, %v1125
  %v1137 = vadd.f32 %v1109, %v1125
  %v1138 = vadd.f32 %v1110, %v1130
  %v1139 = vadd.f32 %v1111, %v1130
  %v1140 = vmul.f32 %v1132, 0.5
  %v1141 = vmul.f32 %v1133, 0.5
  %v1142 = vmul.f32 %v1134, 0.5
  %v1143 = vmul.f32 %v1135, 0.5
  %v1144 = vmul.f32 %v1136, 0.5
  %v1145 = vmul.f32 %v1137, 0.5
  %v1146 = vmul.f32 %v1138, 0.5
  %v1147 = vmul.f32 %v1139, 0.5
  %v1148 = vmul.f32 %v1132, 0.70710677
  %v1149 = vmul.f32 %v1133, 0.70710677
  %v1150 = vmul.f32 %v1134, 0.70710677
  %v1151 = vmul.f32 %v1135, 0.70710677
  %v1152 = vmul.f32 %v1136, 0.70710677
  %v1153 = vmul.f32 %v1137, 0.70710677
  %v1154 = vmul.f32 %v1138, 0.70710677
  %v1155 = vmul.f32 %v1139, 0.70710677
  %vm1156 = vcmp.ge.f32.partialorder %v1148, 0.0
  %vm1157 = vcmp.ge.f32.partialorder %v1149, 0.0
  %vm1158 = vcmp.ge.f32.partialorder %v1150, 0.0
  %vm1159 = vcmp.ge.f32.partialorder %v1151, 0.0
  %vm1160 = vcmp.ge.f32.partialorder %v1152, 0.0
  %vm1161 = vcmp.ge.f32.partialorder %v1153, 0.0
  %vm1162 = vcmp.ge.f32.partialorder %v1154, 0.0
  %vm1163 = vcmp.ge.f32.partialorder %v1155, 0.0
  %v1164 = vsel %vm1156, 1.0, -1.0
  %v1165 = vsel %vm1157, 1.0, -1.0
  %v1166 = vsel %vm1158, 1.0, -1.0
  %v1167 = vsel %vm1159, 1.0, -1.0
  %v1168 = vsel %vm1160, 1.0, -1.0
  %v1169 = vsel %vm1161, 1.0, -1.0
  %v1170 = vsel %vm1162, 1.0, -1.0
  %v1171 = vsel %vm1163, 1.0, -1.0
  %v1172 = vand.u32 2147483647, %v1148
  %v1173 = vand.u32 2147483647, %v1149
  %v1174 = vand.u32 2147483647, %v1150
  %v1175 = vand.u32 2147483647, %v1151
  %v1176 = vand.u32 2147483647, %v1152
  %v1177 = vand.u32 2147483647, %v1153
  %v1178 = vand.u32 2147483647, %v1154
  %v1179 = vand.u32 2147483647, %v1155
  %v1180 = vmul.f32 %v1172, 0.3275911
  %v1181 = vmul.f32 %v1173, 0.3275911
  %v1182 = vmul.f32 %v1174, 0.3275911
  %v1183 = vmul.f32 %v1175, 0.3275911
  %v1184 = vmul.f32 %v1176, 0.3275911
  %v1185 = vmul.f32 %v1177, 0.3275911
  %v1186 = vmul.f32 %v1178, 0.3275911
  %v1187 = vmul.f32 %v1179, 0.3275911
  %v1188 = vadd.f32 %v1180, 1.0
  %v1189 = vadd.f32 %v1181, 1.0
  %v1190 = vadd.f32 %v1182, 1.0
  %v1191 = vadd.f32 %v1183, 1.0
  %v1192 = vadd.f32 %v1184, 1.0
  %v1193 = vadd.f32 %v1185, 1.0
  %v1194 = vadd.f32 %v1186, 1.0
  %v1195 = vadd.f32 %v1187, 1.0
  %v1196 = vrcp.pop %v1188
  %v1197 = vmul.f32 %v1188, %v1196
  %v1198 = vsub.f32 1.0, %v1197
  %v1199 = vmul.f32 %v1196, %v1198
  %v1200 = vadd.f32 %v1196, %v1199
  %vm1201 = vweird.f32 %v1188
  %vm1202 = vweird.f32 %v1196
  %vm1203 = vmor %vm1201, %vm1202
  %v1204 = vsel %vm1203, %v1196, %v1200
  %v1205 = vand.u32 2147483647, %v1188
  %vm1206 = vcmp.eq.f32.partialorder %v1205, 8.507059e+37
  %v1207 = vand.u32 %v1188, 2147483648
  %v1208 = vor.u32 1.1754944e-38, %v1207
  %v1209 = vsel %vm1206, %v1208, %v1204
  %v1210 = vmul.f32 1.0, %v1209
  %v1211 = vrcp.pop %v1189
  %v1212 = vmul.f32 %v1189, %v1211
  %v1213 = vsub.f32 1.0, %v1212
  %v1214 = vmul.f32 %v1211, %v1213
  %v1215 = vadd.f32 %v1211, %v1214
  %vm1216 = vweird.f32 %v1189
  %vm1217 = vweird.f32 %v1211
  %vm1218 = vmor %vm1216, %vm1217
  %v1219 = vsel %vm1218, %v1211, %v1215
  %v1220 = vand.u32 2147483647, %v1189
  %vm1221 = vcmp.eq.f32.partialorder %v1220, 8.507059e+37
  %v1222 = vand.u32 %v1189, 2147483648
  %v1223 = vor.u32 1.1754944e-38, %v1222
  %v1224 = vsel %vm1221, %v1223, %v1219
  %v1225 = vmul.f32 1.0, %v1224
  %v1226 = vrcp.pop %v1190
  %v1227 = vmul.f32 %v1190, %v1226
  %v1228 = vsub.f32 1.0, %v1227
  %v1229 = vmul.f32 %v1226, %v1228
  %v1230 = vadd.f32 %v1226, %v1229
  %vm1231 = vweird.f32 %v1190
  %vm1232 = vweird.f32 %v1226
  %vm1233 = vmor %vm1231, %vm1232
  %v1234 = vsel %vm1233, %v1226, %v1230
  %v1235 = vand.u32 2147483647, %v1190
  %vm1236 = vcmp.eq.f32.partialorder %v1235, 8.507059e+37
  %v1237 = vand.u32 %v1190, 2147483648
  %v1238 = vor.u32 1.1754944e-38, %v1237
  %v1239 = vsel %vm1236, %v1238, %v1234
  %v1240 = vmul.f32 1.0, %v1239
  %v1241 = vrcp.pop %v1191
  %v1242 = vmul.f32 %v1191, %v1241
  %v1243 = vsub.f32 1.0, %v1242
  %v1244 = vmul.f32 %v1241, %v1243
  %v1245 = vadd.f32 %v1241, %v1244
  %vm1246 = vweird.f32 %v1191
  %vm1247 = vweird.f32 %v1241
  %vm1248 = vmor %vm1246, %vm1247
  %v1249 = vsel %vm1248, %v1241, %v1245
  %v1250 = vand.u32 2147483647, %v1191
  %vm1251 = vcmp.eq.f32.partialorder %v1250, 8.507059e+37
  %v1252 = vand.u32 %v1191, 2147483648
  %v1253 = vor.u32 1.1754944e-38, %v1252
  %v1254 = vsel %vm1251, %v1253, %v1249
  %v1255 = vmul.f32 1.0, %v1254
  %v1256 = vrcp.pop %v1192
  %v1257 = vmul.f32 %v1192, %v1256
  %v1258 = vsub.f32 1.0, %v1257
  %v1259 = vmul.f32 %v1256, %v1258
  %v1260 = vadd.f32 %v1256, %v1259
  %vm1261 = vweird.f32 %v1192
  %vm1262 = vweird.f32 %v1256
  %vm1263 = vmor %vm1261, %vm1262
  %v1264 = vsel %vm1263, %v1256, %v1260
  %v1265 = vand.u32 2147483647, %v1192
  %vm1266 = vcmp.eq.f32.partialorder %v1265, 8.507059e+37
  %v1267 = vand.u32 %v1192, 2147483648
  %v1268 = vor.u32 1.1754944e-38, %v1267
  %v1269 = vsel %vm1266, %v1268, %v1264
  %v1270 = vmul.f32 1.0, %v1269
  %v1271 = vrcp.pop %v1193
  %v1272 = vmul.f32 %v1193, %v1271
  %v1273 = vsub.f32 1.0, %v1272
  %v1274 = vmul.f32 %v1271, %v1273
  %v1275 = vadd.f32 %v1271, %v1274
  %vm1276 = vweird.f32 %v1193
  %vm1277 = vweird.f32 %v1271
  %vm1278 = vmor %vm1276, %vm1277
  %v1279 = vsel %vm1278, %v1271, %v1275
  %v1280 = vand.u32 2147483647, %v1193
  %vm1281 = vcmp.eq.f32.partialorder %v1280, 8.507059e+37
  %v1282 = vand.u32 %v1193, 2147483648
  %v1283 = vor.u32 1.1754944e-38, %v1282
  %v1284 = vsel %vm1281, %v1283, %v1279
  %v1285 = vmul.f32 1.0, %v1284
  %v1286 = vrcp.pop %v1194
  %v1287 = vmul.f32 %v1194, %v1286
  %v1288 = vsub.f32 1.0, %v1287
  %v1289 = vmul.f32 %v1286, %v1288
  %v1290 = vadd.f32 %v1286, %v1289
  %vm1291 = vweird.f32 %v1194
  %vm1292 = vweird.f32 %v1286
  %vm1293 = vmor %vm1291, %vm1292
  %v1294 = vsel %vm1293, %v1286, %v1290
  %v1295 = vand.u32 2147483647, %v1194
  %vm1296 = vcmp.eq.f32.partialorder %v1295, 8.507059e+37
  %v1297 = vand.u32 %v1194, 2147483648
  %v1298 = vor.u32 1.1754944e-38, %v1297
  %v1299 = vsel %vm1296, %v1298, %v1294
  %v1300 = vmul.f32 1.0, %v1299
  %v1301 = vrcp.pop %v1195
  %v1302 = vmul.f32 %v1195, %v1301
  %v1303 = vsub.f32 1.0, %v1302
  %v1304 = vmul.f32 %v1301, %v1303
  %v1305 = vadd.f32 %v1301, %v1304
  %vm1306 = vweird.f32 %v1195
  %vm1307 = vweird.f32 %v1301
  %vm1308 = vmor %vm1306, %vm1307
  %v1309 = vsel %vm1308, %v1301, %v1305
  %v1310 = vand.u32 2147483647, %v1195
  %vm1311 = vcmp.eq.f32.partialorder %v1310, 8.507059e+37
  %v1312 = vand.u32 %v1195, 2147483648
  %v1313 = vor.u32 1.1754944e-38, %v1312
  %v1314 = vsel %vm1311, %v1313, %v1309
  %v1315 = vmul.f32 1.0, %v1314
  %v1316 = vmul.f32 %v1210, 1.0614054
  %v1317 = vmul.f32 %v1225, 1.0614054
  %v1318 = vmul.f32 %v1240, 1.0614054
  %v1319 = vmul.f32 %v1255, 1.0614054
  %v1320 = vmul.f32 %v1270, 1.0614054
  %v1321 = vmul.f32 %v1285, 1.0614054
  %v1322 = vmul.f32 %v1300, 1.0614054
  %v1323 = vmul.f32 %v1315, 1.0614054
  %v1324 = vadd.f32 %v1316, -1.4531521
  %v1325 = vadd.f32 %v1317, -1.4531521
  %v1326 = vadd.f32 %v1318, -1.4531521
  %v1327 = vadd.f32 %v1319, -1.4531521
  %v1328 = vadd.f32 %v1320, -1.4531521
  %v1329 = vadd.f32 %v1321, -1.4531521
  %v1330 = vadd.f32 %v1322, -1.4531521
  %v1331 = vadd.f32 %v1323, -1.4531521
  %v1332 = vmul.f32 %v1324, %v1210
  %v1333 = vmul.f32 %v1325, %v1225
  %v1334 = vmul.f32 %v1326, %v1240
  %v1335 = vmul.f32 %v1327, %v1255
  %v1336 = vmul.f32 %v1328, %v1270
  %v1337 = vmul.f32 %v1329, %v1285
  %v1338 = vmul.f32 %v1330, %v1300
  %v1339 = vmul.f32 %v1331, %v1315
  %v1340 = vadd.f32 %v1332, 1.4214138
  %v1341 = vadd.f32 %v1333, 1.4214138
  %v1342 = vadd.f32 %v1334, 1.4214138
  %v1343 = vadd.f32 %v1335, 1.4214138
  %v1344 = vadd.f32 %v1336, 1.4214138
  %v1345 = vadd.f32 %v1337, 1.4214138
  %v1346 = vadd.f32 %v1338, 1.4214138
  %v1347 = vadd.f32 %v1339, 1.4214138
  %v1348 = vmul.f32 %v1340, %v1210
  %v1349 = vmul.f32 %v1341, %v1225
  %v1350 = vmul.f32 %v1342, %v1240
  %v1351 = vmul.f32 %v1343, %v1255
  %v1352 = vmul.f32 %v1344, %v1270
  %v1353 = vmul.f32 %v1345, %v1285
  %v1354 = vmul.f32 %v1346, %v1300
  %v1355 = vmul.f32 %v1347, %v1315
  %v1356 = vadd.f32 %v1348, -0.28449672
  %v1357 = vadd.f32 %v1349, -0.28449672
  %v1358 = vadd.f32 %v1350, -0.28449672
  %v1359 = vadd.f32 %v1351, -0.28449672
  %v1360 = vadd.f32 %v1352, -0.28449672
  %v1361 = vadd.f32 %v1353, -0.28449672
  %v1362 = vadd.f32 %v1354, -0.28449672
  %v1363 = vadd.f32 %v1355, -0.28449672
  %v1364 = vmul.f32 %v1356, %v1210
  %v1365 = vmul.f32 %v1357, %v1225
  %v1366 = vmul.f32 %v1358, %v1240
  %v1367 = vmul.f32 %v1359, %v1255
  %v1368 = vmul.f32 %v1360, %v1270
  %v1369 = vmul.f32 %v1361, %v1285
  %v1370 = vmul.f32 %v1362, %v1300
  %v1371 = vmul.f32 %v1363, %v1315
  %v1372 = vadd.f32 %v1364, 0.2548296
  %v1373 = vadd.f32 %v1365, 0.2548296
  %v1374 = vadd.f32 %v1366, 0.2548296
  %v1375 = vadd.f32 %v1367, 0.2548296
  %v1376 = vadd.f32 %v1368, 0.2548296
  %v1377 = vadd.f32 %v1369, 0.2548296
  %v1378 = vadd.f32 %v1370, 0.2548296
  %v1379 = vadd.f32 %v1371, 0.2548296
  %v1380 = vmul.f32 %v1372, %v1210
  %v1381 = vmul.f32 %v1373, %v1225
  %v1382 = vmul.f32 %v1374, %v1240
  %v1383 = vmul.f32 %v1375, %v1255
  %v1384 = vmul.f32 %v1376, %v1270
  %v1385 = vmul.f32 %v1377, %v1285
  %v1386 = vmul.f32 %v1378, %v1300
  %v1387 = vmul.f32 %v1379, %v1315
  %v1388 = vsub.f32 0.0, %v1172
  %v1389 = vsub.f32 0.0, %v1173
  %v1390 = vsub.f32 0.0, %v1174
  %v1391 = vsub.f32 0.0, %v1175
  %v1392 = vsub.f32 0.0, %v1176
  %v1393 = vsub.f32 0.0, %v1177
  %v1394 = vsub.f32 0.0, %v1178
  %v1395 = vsub.f32 0.0, %v1179
  %v1396 = vmul.f32 %v1388, %v1172
  %v1397 = vmul.f32 %v1389, %v1173
  %v1398 = vmul.f32 %v1390, %v1174
  %v1399 = vmul.f32 %v1391, %v1175
  %v1400 = vmul.f32 %v1392, %v1176
  %v1401 = vmul.f32 %v1393, %v1177
  %v1402 = vmul.f32 %v1394, %v1178
  %v1403 = vmul.f32 %v1395, %v1179
  %v1404 = vmul.f32 %v1396, 1.442695
  %v1405 = vpow.pop %v1404
  %v1406 = vmul.f32 %v1397, 1.442695
  %v1407 = vpow.pop %v1406
  %v1408 = vmul.f32 %v1398, 1.442695
  %v1409 = vpow.pop %v1408
  %v1410 = vmul.f32 %v1399, 1.442695
  %v1411 = vpow.pop %v1410
  %v1412 = vmul.f32 %v1400, 1.442695
  %v1413 = vpow.pop %v1412
  %v1414 = vmul.f32 %v1401, 1.442695
  %v1415 = vpow.pop %v1414
  %v1416 = vmul.f32 %v1402, 1.442695
  %v1417 = vpow.pop %v1416
  %v1418 = vmul.f32 %v1403, 1.442695
  %v1419 = vpow.pop %v1418
  %v1420 = vmul.f32 %v1380, %v1405
  %v1421 = vmul.f32 %v1381, %v1407
  %v1422 = vmul.f32 %v1382, %v1409
  %v1423 = vmul.f32 %v1383, %v1411
  %v1424 = vmul.f32 %v1384, %v1413
  %v1425 = vmul.f32 %v1385, %v1415
  %v1426 = vmul.f32 %v1386, %v1417
  %v1427 = vmul.f32 %v1387, %v1419
  %v1428 = vsub.f32 1.0, %v1420
  %v1429 = vsub.f32 1.0, %v1421
  %v1430 = vsub.f32 1.0, %v1422
  %v1431 = vsub.f32 1.0, %v1423
  %v1432 = vsub.f32 1.0, %v1424
  %v1433 = vsub.f32 1.0, %v1425
  %v1434 = vsub.f32 1.0, %v1426
  %v1435 = vsub.f32 1.0, %v1427
  %v1436 = vmul.f32 %v1164, %v1428
  %v1437 = vmul.f32 %v1165, %v1429
  %v1438 = vmul.f32 %v1166, %v1430
  %v1439 = vmul.f32 %v1167, %v1431
  %v1440 = vmul.f32 %v1168, %v1432
  %v1441 = vmul.f32 %v1169, %v1433
  %v1442 = vmul.f32 %v1170, %v1434
  %v1443 = vmul.f32 %v1171, %v1435
  %v1444 = vadd.f32 %v1436, 1.0
  %v1445 = vadd.f32 %v1437, 1.0
  %v1446 = vadd.f32 %v1438, 1.0
  %v1447 = vadd.f32 %v1439, 1.0
  %v1448 = vadd.f32 %v1440, 1.0
  %v1449 = vadd.f32 %v1441, 1.0
  %v1450 = vadd.f32 %v1442, 1.0
  %v1451 = vadd.f32 %v1443, 1.0
  %v1452 = vmul.f32 %v1140, %v1444
  %v1453 = vmul.f32 %v1141, %v1445
  %v1454 = vmul.f32 %v1142, %v1446
  %v1455 = vmul.f32 %v1143, %v1447
  %v1456 = vmul.f32 %v1144, %v1448
  %v1457 = vmul.f32 %v1145, %v1449
  %v1458 = vmul.f32 %v1146, %v1450
  %v1459 = vmul.f32 %v1147, %v1451
  %1460 = vst [vmem:[%s4] sm:$0xff] %v1452
  %1461 = vst [vmem:[%s4 + $0x8] sm:$0xff] %v1453
  %1462 = vst [vmem:[%s4 + $0x10] sm:$0xff] %v1454
  %1463 = vst [vmem:[%s4 + $0x18] sm:$0xff] %v1455
  %1464 = vst [vmem:[%s4 + $0x20] sm:$0xff] %v1456
  %1465 = vst [vmem:[%s4 + $0x28] sm:$0xff] %v1457
  %1466 = vst [vmem:[%s4 + $0x30] sm:$0xff] %v1458
  %1467 = vst [vmem:[%s4 + $0x38] sm:$0xff] %v1459
  %s1468 = scalar_lea.vmem %s0, 32
  %v1469 = vld [vmem:[%s1468] sm:$0xff]
  %v1470 = vld [vmem:[%s1468 + $0x8] sm:$0xff]
  %v1471 = vld [vmem:[%s1468 + $0x10] sm:$0xff]
  %v1472 = vld [vmem:[%s1468 + $0x18] sm:$0xff]
  %1473 = vrot.lane.b32.xlu0 %v1469, 17
  %v1474 = vpop.permute.xlu0 %1473
  %1475 = vrot.lane.b32.xlu0 %v1471, 17
  %v1476 = vpop.permute.xlu0 %1475
  %1477 = vrot.lane.b32.xlu0 %v1470, 17
  %v1478 = vpop.permute.xlu0 %1477
  %1479 = vrot.lane.b32.xlu0 %v1472, 17
  %v1480 = vpop.permute.xlu0 %1479
  %v1481 = vsel %vm35, %v1474, %v1478
  %v1482 = vsel %vm35, %v1476, %v1480
  %v1483 = vsel %vm35, %v1478, %v1474
  %v1484 = vsel %vm35, %v1480, %v1476
  %v1485 = vld [vmem:[%s2] sm:$0x3]
  %v1487 = vperm.slane %v1485, 0
  %v1488 = vperm.slane %v1485, 1
  %v1491 = vmul.f32 %v1483, %v1487
  %v1492 = vmul.f32 %v1481, %v1488
  %v1493 = vmul.f32 %v1484, %v1487
  %v1494 = vmul.f32 %v1482, %v1488
  %v1495 = vld [vmem:[%s1] sm:$0xff]
  %v1496 = vld [vmem:[%s1 + $0x8] sm:$0xff]
  %v1497 = vld [vmem:[%s1 + $0x10] sm:$0xff]
  %v1498 = vld [vmem:[%s1 + $0x18] sm:$0xff]
  %1499 = vrot.lane.b32.xlu0 %v1469, 16
  %v1500 = vpop.permute.xlu0 %1499
  %1501 = vrot.lane.b32.xlu0 %v1471, 16
  %v1502 = vpop.permute.xlu0 %1501
  %1503 = vrot.lane.b32.xlu0 %v1470, 16
  %v1504 = vpop.permute.xlu0 %1503
  %1505 = vrot.lane.b32.xlu0 %v1472, 16
  %v1506 = vpop.permute.xlu0 %1505
  %v1507 = vsel %vm62, %v1500, %v1504
  %v1508 = vsel %vm62, %v1502, %v1506
  %v1509 = vsel %vm62, %v1504, %v1500
  %v1510 = vsel %vm62, %v1506, %v1502
  %v1511 = vld [vmem:[%s67] sm:$0x3]
  %v1513 = vperm.slane %v1511, 0
  %v1514 = vperm.slane %v1511, 1
  %v1517 = vmul.f32 %v1509, %v1513
  %v1518 = vmul.f32 %v1507, %v1514
  %v1519 = vmul.f32 %v1510, %v1513
  %v1520 = vmul.f32 %v1508, %v1514
  %v1521 = vld [vmem:[%s78] sm:$0xff]
  %v1522 = vld [vmem:[%s78 + $0x8] sm:$0xff]
  %v1523 = vld [vmem:[%s78 + $0x10] sm:$0xff]
  %v1524 = vld [vmem:[%s78 + $0x18] sm:$0xff]
  %v1526 = vsel %vm83, %v1521, 0
  %v1529 = vsel %vm83, %v1522, 0
  %v1532 = vsel %vm83, %v1523, 0
  %v1535 = vsel %vm83, %v1524, 0
  %1537 = vmatpush.msra.mxu0 0.0
  %1538 = vmatpush.msra.mxu0 0.0
  %1539 = vmatpush.msra.mxu0 0.0
  %1540 = vmatpush.msra.mxu0 0.0
  %1541 = vmatpush.msra.mxu0 0.0
  %1542 = vmatpush.msra.mxu0 0.0
  %1543 = vmatpush.msra.mxu0 0.0
  %1544 = vmatpush.msra.mxu0 0.0
  %1545 = vmatpush.msra.mxu0 0.0
  %1546 = vmatpush.msra.mxu0 0.0
  %1547 = vmatpush.msra.mxu0 0.0
  %1548 = vmatpush.msra.mxu0 0.0
  %1549 = vmatpush.msra.mxu0 0.0
  %1550 = vmatpush.msra.mxu0 0.0
  %1551 = vmatpush.msra.mxu0 %v1519
  %1552 = vmatpush.msra.mxu0 %v1517
  %1553 = vmatmul.f32.gmra.mxu0 %v1526
  %v1554 = vpop.f32.mrf.mxu0
  %v1555 = vadd.f32 0.0, %v1554
  %1556 = vmatmul.f32.gmra.mxu0 %v1529
  %v1557 = vpop.f32.mrf.mxu0
  %v1558 = vadd.f32 0.0, %v1557
  %1559 = vmatmul.f32.gmra.mxu0 %v1532
  %v1560 = vpop.f32.mrf.mxu0
  %v1561 = vadd.f32 0.0, %v1560
  %1562 = vmatmul.f32.gmra.mxu0 %v1535
  %v1563 = vpop.f32.mrf.mxu0
  %v1564 = vadd.f32 0.0, %v1563
  %1565 = vdwg.mxu0
  %1566 = vmatpush.msra.mxu0 0.0
  %1567 = vmatpush.msra.mxu0 0.0
  %1568 = vmatpush.msra.mxu0 0.0
  %1569 = vmatpush.msra.mxu0 0.0
  %1570 = vmatpush.msra.mxu0 0.0
  %1571 = vmatpush.msra.mxu0 0.0
  %1572 = vmatpush.msra.mxu0 0.0
  %1573 = vmatpush.msra.mxu0 0.0
  %1574 = vmatpush.msra.mxu0 0.0
  %1575 = vmatpush.msra.mxu0 0.0
  %1576 = vmatpush.msra.mxu0 0.0
  %1577 = vmatpush.msra.mxu0 0.0
  %1578 = vmatpush.msra.mxu0 0.0
  %1579 = vmatpush.msra.mxu0 0.0
  %1580 = vmatpush.msra.mxu0 %v1520
  %1581 = vmatpush.msra.mxu0 %v1518
  %1582 = vmatmul.f32.gmra.mxu0 %v1526
  %v1583 = vpop.f32.mrf.mxu0
  %v1584 = vadd.f32 0.0, %v1583
  %1585 = vmatmul.f32.gmra.mxu0 %v1529
  %v1586 = vpop.f32.mrf.mxu0
  %v1587 = vadd.f32 0.0, %v1586
  %1588 = vmatmul.f32.gmra.mxu0 %v1532
  %v1589 = vpop.f32.mrf.mxu0
  %v1590 = vadd.f32 0.0, %v1589
  %1591 = vmatmul.f32.gmra.mxu0 %v1535
  %v1592 = vpop.f32.mrf.mxu0
  %v1593 = vadd.f32 0.0, %v1592
  %1594 = vdwg.mxu0
  %v1596 = vsel %vm83, %v1495, 0
  %v1599 = vsel %vm83, %v1496, 0
  %v1602 = vsel %vm83, %v1497, 0
  %v1605 = vsel %vm83, %v1498, 0
  %1607 = vmatpush.msra.mxu0 0.0
  %1608 = vmatpush.msra.mxu0 0.0
  %1609 = vmatpush.msra.mxu0 0.0
  %1610 = vmatpush.msra.mxu0 0.0
  %1611 = vmatpush.msra.mxu0 0.0
  %1612 = vmatpush.msra.mxu0 0.0
  %1613 = vmatpush.msra.mxu0 0.0
  %1614 = vmatpush.msra.mxu0 0.0
  %1615 = vmatpush.msra.mxu0 0.0
  %1616 = vmatpush.msra.mxu0 0.0
  %1617 = vmatpush.msra.mxu0 0.0
  %1618 = vmatpush.msra.mxu0 0.0
  %1619 = vmatpush.msra.mxu0 0.0
  %1620 = vmatpush.msra.mxu0 0.0
  %1621 = vmatpush.msra.mxu0 %v1493
  %1622 = vmatpush.msra.mxu0 %v1491
  %1623 = vmatmul.f32.gmra.mxu0 %v1596
  %v1624 = vpop.f32.mrf.mxu0
  %v1625 = vadd.f32 %v1555, %v1624
  %1626 = vmatmul.f32.gmra.mxu0 %v1599
  %v1627 = vpop.f32.mrf.mxu0
  %v1628 = vadd.f32 %v1558, %v1627
  %1629 = vmatmul.f32.gmra.mxu0 %v1602
  %v1630 = vpop.f32.mrf.mxu0
  %v1631 = vadd.f32 %v1561, %v1630
  %1632 = vmatmul.f32.gmra.mxu0 %v1605
  %v1633 = vpop.f32.mrf.mxu0
  %v1634 = vadd.f32 %v1564, %v1633
  %1635 = vdwg.mxu0
  %1636 = vmatpush.msra.mxu0 0.0
  %1637 = vmatpush.msra.mxu0 0.0
  %1638 = vmatpush.msra.mxu0 0.0
  %1639 = vmatpush.msra.mxu0 0.0
  %1640 = vmatpush.msra.mxu0 0.0
  %1641 = vmatpush.msra.mxu0 0.0
  %1642 = vmatpush.msra.mxu0 0.0
  %1643 = vmatpush.msra.mxu0 0.0
  %1644 = vmatpush.msra.mxu0 0.0
  %1645 = vmatpush.msra.mxu0 0.0
  %1646 = vmatpush.msra.mxu0 0.0
  %1647 = vmatpush.msra.mxu0 0.0
  %1648 = vmatpush.msra.mxu0 0.0
  %1649 = vmatpush.msra.mxu0 0.0
  %1650 = vmatpush.msra.mxu0 %v1494
  %1651 = vmatpush.msra.mxu0 %v1492
  %1652 = vmatmul.f32.gmra.mxu0 %v1596
  %v1653 = vpop.f32.mrf.mxu0
  %v1654 = vadd.f32 %v1584, %v1653
  %1655 = vmatmul.f32.gmra.mxu0 %v1599
  %v1656 = vpop.f32.mrf.mxu0
  %v1657 = vadd.f32 %v1587, %v1656
  %1658 = vmatmul.f32.gmra.mxu0 %v1602
  %v1659 = vpop.f32.mrf.mxu0
  %v1660 = vadd.f32 %v1590, %v1659
  %1661 = vmatmul.f32.gmra.mxu0 %v1605
  %v1662 = vpop.f32.mrf.mxu0
  %v1663 = vadd.f32 %v1593, %v1662
  %1664 = vdwg.mxu0
  %1665 = vrot.lane.b32.xlu0 %v1469, 15
  %v1666 = vpop.permute.xlu0 %1665
  %1667 = vrot.lane.b32.xlu0 %v1471, 15
  %v1668 = vpop.permute.xlu0 %1667
  %1669 = vrot.lane.b32.xlu0 %v1470, 15
  %v1670 = vpop.permute.xlu0 %1669
  %1671 = vrot.lane.b32.xlu0 %v1472, 15
  %v1672 = vpop.permute.xlu0 %1671
  %v1673 = vsel %vm232, %v1666, %v1670
  %v1674 = vsel %vm232, %v1668, %v1672
  %v1675 = vsel %vm232, %v1670, %v1666
  %v1676 = vsel %vm232, %v1672, %v1668
  %v1677 = vld [vmem:[%s237] sm:$0x3]
  %v1679 = vperm.slane %v1677, 0
  %v1680 = vperm.slane %v1677, 1
  %v1683 = vmul.f32 %v1675, %v1679
  %v1684 = vmul.f32 %v1673, %v1680
  %v1685 = vmul.f32 %v1676, %v1679
  %v1686 = vmul.f32 %v1674, %v1680
  %v1687 = vld [vmem:[%s248] sm:$0xff]
  %v1688 = vld [vmem:[%s248 + $0x8] sm:$0xff]
  %v1689 = vld [vmem:[%s248 + $0x10] sm:$0xff]
  %v1690 = vld [vmem:[%s248 + $0x18] sm:$0xff]
  %v1692 = vsel %vm83, %v1687, 0
  %v1695 = vsel %vm83, %v1688, 0
  %v1698 = vsel %vm83, %v1689, 0
  %v1701 = vsel %vm83, %v1690, 0
  %1703 = vmatpush.msra.mxu0 0.0
  %1704 = vmatpush.msra.mxu0 0.0
  %1705 = vmatpush.msra.mxu0 0.0
  %1706 = vmatpush.msra.mxu0 0.0
  %1707 = vmatpush.msra.mxu0 0.0
  %1708 = vmatpush.msra.mxu0 0.0
  %1709 = vmatpush.msra.mxu0 0.0
  %1710 = vmatpush.msra.mxu0 0.0
  %1711 = vmatpush.msra.mxu0 0.0
  %1712 = vmatpush.msra.mxu0 0.0
  %1713 = vmatpush.msra.mxu0 0.0
  %1714 = vmatpush.msra.mxu0 0.0
  %1715 = vmatpush.msra.mxu0 0.0
  %1716 = vmatpush.msra.mxu0 0.0
  %1717 = vmatpush.msra.mxu0 %v1685
  %1718 = vmatpush.msra.mxu0 %v1683
  %1719 = vmatmul.f32.gmra.mxu0 %v1692
  %v1720 = vpop.f32.mrf.mxu0
  %v1721 = vadd.f32 0.0, %v1720
  %1722 = vmatmul.f32.gmra.mxu0 %v1695
  %v1723 = vpop.f32.mrf.mxu0
  %v1724 = vadd.f32 0.0, %v1723
  %1725 = vmatmul.f32.gmra.mxu0 %v1698
  %v1726 = vpop.f32.mrf.mxu0
  %v1727 = vadd.f32 0.0, %v1726
  %1728 = vmatmul.f32.gmra.mxu0 %v1701
  %v1729 = vpop.f32.mrf.mxu0
  %v1730 = vadd.f32 0.0, %v1729
  %1731 = vdwg.mxu0
  %1732 = vmatpush.msra.mxu0 0.0
  %1733 = vmatpush.msra.mxu0 0.0
  %1734 = vmatpush.msra.mxu0 0.0
  %1735 = vmatpush.msra.mxu0 0.0
  %1736 = vmatpush.msra.mxu0 0.0
  %1737 = vmatpush.msra.mxu0 0.0
  %1738 = vmatpush.msra.mxu0 0.0
  %1739 = vmatpush.msra.mxu0 0.0
  %1740 = vmatpush.msra.mxu0 0.0
  %1741 = vmatpush.msra.mxu0 0.0
  %1742 = vmatpush.msra.mxu0 0.0
  %1743 = vmatpush.msra.mxu0 0.0
  %1744 = vmatpush.msra.mxu0 0.0
  %1745 = vmatpush.msra.mxu0 0.0
  %1746 = vmatpush.msra.mxu0 %v1686
  %1747 = vmatpush.msra.mxu0 %v1684
  %1748 = vmatmul.f32.gmra.mxu0 %v1692
  %v1749 = vpop.f32.mrf.mxu0
  %v1750 = vadd.f32 0.0, %v1749
  %1751 = vmatmul.f32.gmra.mxu0 %v1695
  %v1752 = vpop.f32.mrf.mxu0
  %v1753 = vadd.f32 0.0, %v1752
  %1754 = vmatmul.f32.gmra.mxu0 %v1698
  %v1755 = vpop.f32.mrf.mxu0
  %v1756 = vadd.f32 0.0, %v1755
  %1757 = vmatmul.f32.gmra.mxu0 %v1701
  %v1758 = vpop.f32.mrf.mxu0
  %v1759 = vadd.f32 0.0, %v1758
  %1760 = vdwg.mxu0
  %v1761 = vadd.f32 %v1625, %v1721
  %v1762 = vadd.f32 %v1654, %v1750
  %v1763 = vadd.f32 %v1628, %v1724
  %v1764 = vadd.f32 %v1657, %v1753
  %v1765 = vadd.f32 %v1631, %v1727
  %v1766 = vadd.f32 %v1660, %v1756
  %v1767 = vadd.f32 %v1634, %v1730
  %v1768 = vadd.f32 %v1663, %v1759
  %1769 = vrot.lane.b32.xlu0 %v1469, 1
  %v1770 = vpop.permute.xlu0 %1769
  %1771 = vrot.lane.b32.xlu0 %v1471, 1
  %v1772 = vpop.permute.xlu0 %1771
  %1773 = vrot.lane.b32.xlu0 %v1470, 1
  %v1774 = vpop.permute.xlu0 %1773
  %1775 = vrot.lane.b32.xlu0 %v1472, 1
  %v1776 = vpop.permute.xlu0 %1775
  %v1777 = vsel %vm339, %v1770, %v1774
  %v1778 = vsel %vm339, %v1772, %v1776
  %v1779 = vsel %vm339, %v1774, %v1770
  %v1780 = vsel %vm339, %v1776, %v1772
  %v1781 = vld [vmem:[%s344] sm:$0x3]
  %v1783 = vperm.slane %v1781, 0
  %v1784 = vperm.slane %v1781, 1
  %v1787 = vmul.f32 %v1779, %v1783
  %v1788 = vmul.f32 %v1777, %v1784
  %v1789 = vmul.f32 %v1780, %v1783
  %v1790 = vmul.f32 %v1778, %v1784
  %v1791 = vld [vmem:[%s355] sm:$0xff]
  %v1792 = vld [vmem:[%s355 + $0x8] sm:$0xff]
  %v1793 = vld [vmem:[%s355 + $0x10] sm:$0xff]
  %v1794 = vld [vmem:[%s355 + $0x18] sm:$0xff]
  %v1796 = vsel %vm83, %v1791, 0
  %v1799 = vsel %vm83, %v1792, 0
  %v1802 = vsel %vm83, %v1793, 0
  %v1805 = vsel %vm83, %v1794, 0
  %1807 = vmatpush.msra.mxu0 0.0
  %1808 = vmatpush.msra.mxu0 0.0
  %1809 = vmatpush.msra.mxu0 0.0
  %1810 = vmatpush.msra.mxu0 0.0
  %1811 = vmatpush.msra.mxu0 0.0
  %1812 = vmatpush.msra.mxu0 0.0
  %1813 = vmatpush.msra.mxu0 0.0
  %1814 = vmatpush.msra.mxu0 0.0
  %1815 = vmatpush.msra.mxu0 0.0
  %1816 = vmatpush.msra.mxu0 0.0
  %1817 = vmatpush.msra.mxu0 0.0
  %1818 = vmatpush.msra.mxu0 0.0
  %1819 = vmatpush.msra.mxu0 0.0
  %1820 = vmatpush.msra.mxu0 0.0
  %1821 = vmatpush.msra.mxu0 %v1789
  %1822 = vmatpush.msra.mxu0 %v1787
  %1823 = vmatmul.f32.gmra.mxu0 %v1796
  %v1824 = vpop.f32.mrf.mxu0
  %v1825 = vadd.f32 0.0, %v1824
  %1826 = vmatmul.f32.gmra.mxu0 %v1799
  %v1827 = vpop.f32.mrf.mxu0
  %v1828 = vadd.f32 0.0, %v1827
  %1829 = vmatmul.f32.gmra.mxu0 %v1802
  %v1830 = vpop.f32.mrf.mxu0
  %v1831 = vadd.f32 0.0, %v1830
  %1832 = vmatmul.f32.gmra.mxu0 %v1805
  %v1833 = vpop.f32.mrf.mxu0
  %v1834 = vadd.f32 0.0, %v1833
  %1835 = vdwg.mxu0
  %1836 = vmatpush.msra.mxu0 0.0
  %1837 = vmatpush.msra.mxu0 0.0
  %1838 = vmatpush.msra.mxu0 0.0
  %1839 = vmatpush.msra.mxu0 0.0
  %1840 = vmatpush.msra.mxu0 0.0
  %1841 = vmatpush.msra.mxu0 0.0
  %1842 = vmatpush.msra.mxu0 0.0
  %1843 = vmatpush.msra.mxu0 0.0
  %1844 = vmatpush.msra.mxu0 0.0
  %1845 = vmatpush.msra.mxu0 0.0
  %1846 = vmatpush.msra.mxu0 0.0
  %1847 = vmatpush.msra.mxu0 0.0
  %1848 = vmatpush.msra.mxu0 0.0
  %1849 = vmatpush.msra.mxu0 0.0
  %1850 = vmatpush.msra.mxu0 %v1790
  %1851 = vmatpush.msra.mxu0 %v1788
  %1852 = vmatmul.f32.gmra.mxu0 %v1796
  %v1853 = vpop.f32.mrf.mxu0
  %v1854 = vadd.f32 0.0, %v1853
  %1855 = vmatmul.f32.gmra.mxu0 %v1799
  %v1856 = vpop.f32.mrf.mxu0
  %v1857 = vadd.f32 0.0, %v1856
  %1858 = vmatmul.f32.gmra.mxu0 %v1802
  %v1859 = vpop.f32.mrf.mxu0
  %v1860 = vadd.f32 0.0, %v1859
  %1861 = vmatmul.f32.gmra.mxu0 %v1805
  %v1862 = vpop.f32.mrf.mxu0
  %v1863 = vadd.f32 0.0, %v1862
  %1864 = vdwg.mxu0
  %v1865 = vadd.f32 %v1761, %v1825
  %v1866 = vadd.f32 %v1762, %v1854
  %v1867 = vadd.f32 %v1763, %v1828
  %v1868 = vadd.f32 %v1764, %v1857
  %v1869 = vadd.f32 %v1765, %v1831
  %v1870 = vadd.f32 %v1766, %v1860
  %v1871 = vadd.f32 %v1767, %v1834
  %v1872 = vadd.f32 %v1768, %v1863
  %v1873 = vld [vmem:[%s438] sm:$0xff]
  %v1874 = vld [vmem:[%s438 + $0x8] sm:$0xff]
  %v1875 = vld [vmem:[%s438 + $0x10] sm:$0xff]
  %v1876 = vld [vmem:[%s438 + $0x18] sm:$0xff]
  %v1878 = vsel %vm83, %v1873, 0
  %v1881 = vsel %vm83, %v1874, 0
  %v1884 = vsel %vm83, %v1875, 0
  %v1887 = vsel %vm83, %v1876, 0
  %1889 = vmatpush.msra.mxu0 0.0
  %1890 = vmatpush.msra.mxu0 0.0
  %1891 = vmatpush.msra.mxu0 0.0
  %1892 = vmatpush.msra.mxu0 0.0
  %1893 = vmatpush.msra.mxu0 0.0
  %1894 = vmatpush.msra.mxu0 0.0
  %1895 = vmatpush.msra.mxu0 0.0
  %1896 = vmatpush.msra.mxu0 0.0
  %1897 = vmatpush.msra.mxu0 0.0
  %1898 = vmatpush.msra.mxu0 0.0
  %1899 = vmatpush.msra.mxu0 0.0
  %1900 = vmatpush.msra.mxu0 0.0
  %1901 = vmatpush.msra.mxu0 0.0
  %1902 = vmatpush.msra.mxu0 0.0
  %1903 = vmatpush.msra.mxu0 %v1471
  %1904 = vmatpush.msra.mxu0 %v1469
  %1905 = vmatmul.f32.gmra.mxu0 %v1878
  %v1906 = vpop.f32.mrf.mxu0
  %v1907 = vadd.f32 0.0, %v1906
  %1908 = vmatmul.f32.gmra.mxu0 %v1881
  %v1909 = vpop.f32.mrf.mxu0
  %v1910 = vadd.f32 0.0, %v1909
  %1911 = vmatmul.f32.gmra.mxu0 %v1884
  %v1912 = vpop.f32.mrf.mxu0
  %v1913 = vadd.f32 0.0, %v1912
  %1914 = vmatmul.f32.gmra.mxu0 %v1887
  %v1915 = vpop.f32.mrf.mxu0
  %v1916 = vadd.f32 0.0, %v1915
  %1917 = vdwg.mxu0
  %1918 = vmatpush.msra.mxu0 0.0
  %1919 = vmatpush.msra.mxu0 0.0
  %1920 = vmatpush.msra.mxu0 0.0
  %1921 = vmatpush.msra.mxu0 0.0
  %1922 = vmatpush.msra.mxu0 0.0
  %1923 = vmatpush.msra.mxu0 0.0
  %1924 = vmatpush.msra.mxu0 0.0
  %1925 = vmatpush.msra.mxu0 0.0
  %1926 = vmatpush.msra.mxu0 0.0
  %1927 = vmatpush.msra.mxu0 0.0
  %1928 = vmatpush.msra.mxu0 0.0
  %1929 = vmatpush.msra.mxu0 0.0
  %1930 = vmatpush.msra.mxu0 0.0
  %1931 = vmatpush.msra.mxu0 0.0
  %1932 = vmatpush.msra.mxu0 %v1472
  %1933 = vmatpush.msra.mxu0 %v1470
  %1934 = vmatmul.f32.gmra.mxu0 %v1878
  %v1935 = vpop.f32.mrf.mxu0
  %v1936 = vadd.f32 0.0, %v1935
  %1937 = vmatmul.f32.gmra.mxu0 %v1881
  %v1938 = vpop.f32.mrf.mxu0
  %v1939 = vadd.f32 0.0, %v1938
  %1940 = vmatmul.f32.gmra.mxu0 %v1884
  %v1941 = vpop.f32.mrf.mxu0
  %v1942 = vadd.f32 0.0, %v1941
  %1943 = vmatmul.f32.gmra.mxu0 %v1887
  %v1944 = vpop.f32.mrf.mxu0
  %v1945 = vadd.f32 0.0, %v1944
  %1946 = vdwg.mxu0
  %v1947 = vadd.f32 %v1865, %v1907
  %v1948 = vadd.f32 %v1866, %v1936
  %v1949 = vadd.f32 %v1867, %v1910
  %v1950 = vadd.f32 %v1868, %v1939
  %v1951 = vadd.f32 %v1869, %v1913
  %v1952 = vadd.f32 %v1870, %v1942
  %v1953 = vadd.f32 %v1871, %v1916
  %v1954 = vadd.f32 %v1872, %v1945
  %1955 = vrot.lane.b32.xlu0 %v1469, 127
  %v1956 = vpop.permute.xlu0 %1955
  %1957 = vrot.lane.b32.xlu0 %v1471, 127
  %v1958 = vpop.permute.xlu0 %1957
  %1959 = vrot.lane.b32.xlu0 %v1470, 127
  %v1960 = vpop.permute.xlu0 %1959
  %1961 = vrot.lane.b32.xlu0 %v1472, 127
  %v1962 = vpop.permute.xlu0 %1961
  %v1963 = vsel %vm529, %v1956, %v1960
  %v1964 = vsel %vm529, %v1958, %v1962
  %v1965 = vsel %vm529, %v1960, %v1956
  %v1966 = vsel %vm529, %v1962, %v1958
  %v1967 = vld [vmem:[%s534] sm:$0x3]
  %v1969 = vperm.slane %v1967, 0
  %v1970 = vperm.slane %v1967, 1
  %v1973 = vmul.f32 %v1963, %v1969
  %v1974 = vmul.f32 %v1965, %v1970
  %v1975 = vmul.f32 %v1964, %v1969
  %v1976 = vmul.f32 %v1966, %v1970
  %v1977 = vld [vmem:[%s545] sm:$0xff]
  %v1978 = vld [vmem:[%s545 + $0x8] sm:$0xff]
  %v1979 = vld [vmem:[%s545 + $0x10] sm:$0xff]
  %v1980 = vld [vmem:[%s545 + $0x18] sm:$0xff]
  %v1982 = vsel %vm83, %v1977, 0
  %v1985 = vsel %vm83, %v1978, 0
  %v1988 = vsel %vm83, %v1979, 0
  %v1991 = vsel %vm83, %v1980, 0
  %1993 = vmatpush.msra.mxu0 0.0
  %1994 = vmatpush.msra.mxu0 0.0
  %1995 = vmatpush.msra.mxu0 0.0
  %1996 = vmatpush.msra.mxu0 0.0
  %1997 = vmatpush.msra.mxu0 0.0
  %1998 = vmatpush.msra.mxu0 0.0
  %1999 = vmatpush.msra.mxu0 0.0
  %2000 = vmatpush.msra.mxu0 0.0
  %2001 = vmatpush.msra.mxu0 0.0
  %2002 = vmatpush.msra.mxu0 0.0
  %2003 = vmatpush.msra.mxu0 0.0
  %2004 = vmatpush.msra.mxu0 0.0
  %2005 = vmatpush.msra.mxu0 0.0
  %2006 = vmatpush.msra.mxu0 0.0
  %2007 = vmatpush.msra.mxu0 %v1975
  %2008 = vmatpush.msra.mxu0 %v1973
  %2009 = vmatmul.f32.gmra.mxu0 %v1982
  %v2010 = vpop.f32.mrf.mxu0
  %v2011 = vadd.f32 0.0, %v2010
  %2012 = vmatmul.f32.gmra.mxu0 %v1985
  %v2013 = vpop.f32.mrf.mxu0
  %v2014 = vadd.f32 0.0, %v2013
  %2015 = vmatmul.f32.gmra.mxu0 %v1988
  %v2016 = vpop.f32.mrf.mxu0
  %v2017 = vadd.f32 0.0, %v2016
  %2018 = vmatmul.f32.gmra.mxu0 %v1991
  %v2019 = vpop.f32.mrf.mxu0
  %v2020 = vadd.f32 0.0, %v2019
  %2021 = vdwg.mxu0
  %2022 = vmatpush.msra.mxu0 0.0
  %2023 = vmatpush.msra.mxu0 0.0
  %2024 = vmatpush.msra.mxu0 0.0
  %2025 = vmatpush.msra.mxu0 0.0
  %2026 = vmatpush.msra.mxu0 0.0
  %2027 = vmatpush.msra.mxu0 0.0
  %2028 = vmatpush.msra.mxu0 0.0
  %2029 = vmatpush.msra.mxu0 0.0
  %2030 = vmatpush.msra.mxu0 0.0
  %2031 = vmatpush.msra.mxu0 0.0
  %2032 = vmatpush.msra.mxu0 0.0
  %2033 = vmatpush.msra.mxu0 0.0
  %2034 = vmatpush.msra.mxu0 0.0
  %2035 = vmatpush.msra.mxu0 0.0
  %2036 = vmatpush.msra.mxu0 %v1976
  %2037 = vmatpush.msra.mxu0 %v1974
  %2038 = vmatmul.f32.gmra.mxu0 %v1982
  %v2039 = vpop.f32.mrf.mxu0
  %v2040 = vadd.f32 0.0, %v2039
  %2041 = vmatmul.f32.gmra.mxu0 %v1985
  %v2042 = vpop.f32.mrf.mxu0
  %v2043 = vadd.f32 0.0, %v2042
  %2044 = vmatmul.f32.gmra.mxu0 %v1988
  %v2045 = vpop.f32.mrf.mxu0
  %v2046 = vadd.f32 0.0, %v2045
  %2047 = vmatmul.f32.gmra.mxu0 %v1991
  %v2048 = vpop.f32.mrf.mxu0
  %v2049 = vadd.f32 0.0, %v2048
  %2050 = vdwg.mxu0
  %v2051 = vadd.f32 %v1947, %v2011
  %v2052 = vadd.f32 %v1948, %v2040
  %v2053 = vadd.f32 %v1949, %v2014
  %v2054 = vadd.f32 %v1950, %v2043
  %v2055 = vadd.f32 %v1951, %v2017
  %v2056 = vadd.f32 %v1952, %v2046
  %v2057 = vadd.f32 %v1953, %v2020
  %v2058 = vadd.f32 %v1954, %v2049
  %2059 = vrot.lane.b32.xlu0 %v1469, 113
  %v2060 = vpop.permute.xlu0 %2059
  %2061 = vrot.lane.b32.xlu0 %v1471, 113
  %v2062 = vpop.permute.xlu0 %2061
  %2063 = vrot.lane.b32.xlu0 %v1470, 113
  %v2064 = vpop.permute.xlu0 %2063
  %2065 = vrot.lane.b32.xlu0 %v1472, 113
  %v2066 = vpop.permute.xlu0 %2065
  %v2067 = vsel %vm636, %v2060, %v2064
  %v2068 = vsel %vm636, %v2062, %v2066
  %v2069 = vsel %vm636, %v2064, %v2060
  %v2070 = vsel %vm636, %v2066, %v2062
  %v2071 = vld [vmem:[%s641] sm:$0x3]
  %v2073 = vperm.slane %v2071, 0
  %v2074 = vperm.slane %v2071, 1
  %v2077 = vmul.f32 %v2067, %v2073
  %v2078 = vmul.f32 %v2069, %v2074
  %v2079 = vmul.f32 %v2068, %v2073
  %v2080 = vmul.f32 %v2070, %v2074
  %v2081 = vld [vmem:[%s652] sm:$0xff]
  %v2082 = vld [vmem:[%s652 + $0x8] sm:$0xff]
  %v2083 = vld [vmem:[%s652 + $0x10] sm:$0xff]
  %v2084 = vld [vmem:[%s652 + $0x18] sm:$0xff]
  %v2086 = vsel %vm83, %v2081, 0
  %v2089 = vsel %vm83, %v2082, 0
  %v2092 = vsel %vm83, %v2083, 0
  %v2095 = vsel %vm83, %v2084, 0
  %2097 = vmatpush.msra.mxu0 0.0
  %2098 = vmatpush.msra.mxu0 0.0
  %2099 = vmatpush.msra.mxu0 0.0
  %2100 = vmatpush.msra.mxu0 0.0
  %2101 = vmatpush.msra.mxu0 0.0
  %2102 = vmatpush.msra.mxu0 0.0
  %2103 = vmatpush.msra.mxu0 0.0
  %2104 = vmatpush.msra.mxu0 0.0
  %2105 = vmatpush.msra.mxu0 0.0
  %2106 = vmatpush.msra.mxu0 0.0
  %2107 = vmatpush.msra.mxu0 0.0
  %2108 = vmatpush.msra.mxu0 0.0
  %2109 = vmatpush.msra.mxu0 0.0
  %2110 = vmatpush.msra.mxu0 0.0
  %2111 = vmatpush.msra.mxu0 %v2079
  %2112 = vmatpush.msra.mxu0 %v2077
  %2113 = vmatmul.f32.gmra.mxu0 %v2086
  %v2114 = vpop.f32.mrf.mxu0
  %v2115 = vadd.f32 0.0, %v2114
  %2116 = vmatmul.f32.gmra.mxu0 %v2089
  %v2117 = vpop.f32.mrf.mxu0
  %v2118 = vadd.f32 0.0, %v2117
  %2119 = vmatmul.f32.gmra.mxu0 %v2092
  %v2120 = vpop.f32.mrf.mxu0
  %v2121 = vadd.f32 0.0, %v2120
  %2122 = vmatmul.f32.gmra.mxu0 %v2095
  %v2123 = vpop.f32.mrf.mxu0
  %v2124 = vadd.f32 0.0, %v2123
  %2125 = vdwg.mxu0
  %2126 = vmatpush.msra.mxu0 0.0
  %2127 = vmatpush.msra.mxu0 0.0
  %2128 = vmatpush.msra.mxu0 0.0
  %2129 = vmatpush.msra.mxu0 0.0
  %2130 = vmatpush.msra.mxu0 0.0
  %2131 = vmatpush.msra.mxu0 0.0
  %2132 = vmatpush.msra.mxu0 0.0
  %2133 = vmatpush.msra.mxu0 0.0
  %2134 = vmatpush.msra.mxu0 0.0
  %2135 = vmatpush.msra.mxu0 0.0
  %2136 = vmatpush.msra.mxu0 0.0
  %2137 = vmatpush.msra.mxu0 0.0
  %2138 = vmatpush.msra.mxu0 0.0
  %2139 = vmatpush.msra.mxu0 0.0
  %2140 = vmatpush.msra.mxu0 %v2080
  %2141 = vmatpush.msra.mxu0 %v2078
  %2142 = vmatmul.f32.gmra.mxu0 %v2086
  %v2143 = vpop.f32.mrf.mxu0
  %v2144 = vadd.f32 0.0, %v2143
  %2145 = vmatmul.f32.gmra.mxu0 %v2089
  %v2146 = vpop.f32.mrf.mxu0
  %v2147 = vadd.f32 0.0, %v2146
  %2148 = vmatmul.f32.gmra.mxu0 %v2092
  %v2149 = vpop.f32.mrf.mxu0
  %v2150 = vadd.f32 0.0, %v2149
  %2151 = vmatmul.f32.gmra.mxu0 %v2095
  %v2152 = vpop.f32.mrf.mxu0
  %v2153 = vadd.f32 0.0, %v2152
  %2154 = vdwg.mxu0
  %v2155 = vadd.f32 %v2051, %v2115
  %v2156 = vadd.f32 %v2052, %v2144
  %v2157 = vadd.f32 %v2053, %v2118
  %v2158 = vadd.f32 %v2054, %v2147
  %v2159 = vadd.f32 %v2055, %v2121
  %v2160 = vadd.f32 %v2056, %v2150
  %v2161 = vadd.f32 %v2057, %v2124
  %v2162 = vadd.f32 %v2058, %v2153
  %2163 = vrot.lane.b32.xlu0 %v1469, 112
  %v2164 = vpop.permute.xlu0 %2163
  %2165 = vrot.lane.b32.xlu0 %v1471, 112
  %v2166 = vpop.permute.xlu0 %2165
  %2167 = vrot.lane.b32.xlu0 %v1470, 112
  %v2168 = vpop.permute.xlu0 %2167
  %2169 = vrot.lane.b32.xlu0 %v1472, 112
  %v2170 = vpop.permute.xlu0 %2169
  %v2171 = vsel %vm743, %v2164, %v2168
  %v2172 = vsel %vm743, %v2166, %v2170
  %v2173 = vsel %vm743, %v2168, %v2164
  %v2174 = vsel %vm743, %v2170, %v2166
  %v2175 = vld [vmem:[%s748] sm:$0x3]
  %v2177 = vperm.slane %v2175, 0
  %v2178 = vperm.slane %v2175, 1
  %v2181 = vmul.f32 %v2171, %v2177
  %v2182 = vmul.f32 %v2173, %v2178
  %v2183 = vmul.f32 %v2172, %v2177
  %v2184 = vmul.f32 %v2174, %v2178
  %v2185 = vld [vmem:[%s759] sm:$0xff]
  %v2186 = vld [vmem:[%s759 + $0x8] sm:$0xff]
  %v2187 = vld [vmem:[%s759 + $0x10] sm:$0xff]
  %v2188 = vld [vmem:[%s759 + $0x18] sm:$0xff]
  %v2190 = vsel %vm83, %v2185, 0
  %v2193 = vsel %vm83, %v2186, 0
  %v2196 = vsel %vm83, %v2187, 0
  %v2199 = vsel %vm83, %v2188, 0
  %2201 = vmatpush.msra.mxu0 0.0
  %2202 = vmatpush.msra.mxu0 0.0
  %2203 = vmatpush.msra.mxu0 0.0
  %2204 = vmatpush.msra.mxu0 0.0
  %2205 = vmatpush.msra.mxu0 0.0
  %2206 = vmatpush.msra.mxu0 0.0
  %2207 = vmatpush.msra.mxu0 0.0
  %2208 = vmatpush.msra.mxu0 0.0
  %2209 = vmatpush.msra.mxu0 0.0
  %2210 = vmatpush.msra.mxu0 0.0
  %2211 = vmatpush.msra.mxu0 0.0
  %2212 = vmatpush.msra.mxu0 0.0
  %2213 = vmatpush.msra.mxu0 0.0
  %2214 = vmatpush.msra.mxu0 0.0
  %2215 = vmatpush.msra.mxu0 %v2183
  %2216 = vmatpush.msra.mxu0 %v2181
  %2217 = vmatmul.f32.gmra.mxu0 %v2190
  %v2218 = vpop.f32.mrf.mxu0
  %v2219 = vadd.f32 0.0, %v2218
  %2220 = vmatmul.f32.gmra.mxu0 %v2193
  %v2221 = vpop.f32.mrf.mxu0
  %v2222 = vadd.f32 0.0, %v2221
  %2223 = vmatmul.f32.gmra.mxu0 %v2196
  %v2224 = vpop.f32.mrf.mxu0
  %v2225 = vadd.f32 0.0, %v2224
  %2226 = vmatmul.f32.gmra.mxu0 %v2199
  %v2227 = vpop.f32.mrf.mxu0
  %v2228 = vadd.f32 0.0, %v2227
  %2229 = vdwg.mxu0
  %2230 = vmatpush.msra.mxu0 0.0
  %2231 = vmatpush.msra.mxu0 0.0
  %2232 = vmatpush.msra.mxu0 0.0
  %2233 = vmatpush.msra.mxu0 0.0
  %2234 = vmatpush.msra.mxu0 0.0
  %2235 = vmatpush.msra.mxu0 0.0
  %2236 = vmatpush.msra.mxu0 0.0
  %2237 = vmatpush.msra.mxu0 0.0
  %2238 = vmatpush.msra.mxu0 0.0
  %2239 = vmatpush.msra.mxu0 0.0
  %2240 = vmatpush.msra.mxu0 0.0
  %2241 = vmatpush.msra.mxu0 0.0
  %2242 = vmatpush.msra.mxu0 0.0
  %2243 = vmatpush.msra.mxu0 0.0
  %2244 = vmatpush.msra.mxu0 %v2184
  %2245 = vmatpush.msra.mxu0 %v2182
  %2246 = vmatmul.f32.gmra.mxu0 %v2190
  %v2247 = vpop.f32.mrf.mxu0
  %v2248 = vadd.f32 0.0, %v2247
  %2249 = vmatmul.f32.gmra.mxu0 %v2193
  %v2250 = vpop.f32.mrf.mxu0
  %v2251 = vadd.f32 0.0, %v2250
  %2252 = vmatmul.f32.gmra.mxu0 %v2196
  %v2253 = vpop.f32.mrf.mxu0
  %v2254 = vadd.f32 0.0, %v2253
  %2255 = vmatmul.f32.gmra.mxu0 %v2199
  %v2256 = vpop.f32.mrf.mxu0
  %v2257 = vadd.f32 0.0, %v2256
  %2258 = vdwg.mxu0
  %v2259 = vadd.f32 %v2155, %v2219
  %v2260 = vadd.f32 %v2156, %v2248
  %v2261 = vadd.f32 %v2157, %v2222
  %v2262 = vadd.f32 %v2158, %v2251
  %v2263 = vadd.f32 %v2159, %v2225
  %v2264 = vadd.f32 %v2160, %v2254
  %v2265 = vadd.f32 %v2161, %v2228
  %v2266 = vadd.f32 %v2162, %v2257
  %2267 = vrot.lane.b32.xlu0 %v1469, 111
  %v2268 = vpop.permute.xlu0 %2267
  %2269 = vrot.lane.b32.xlu0 %v1471, 111
  %v2270 = vpop.permute.xlu0 %2269
  %2271 = vrot.lane.b32.xlu0 %v1470, 111
  %v2272 = vpop.permute.xlu0 %2271
  %2273 = vrot.lane.b32.xlu0 %v1472, 111
  %v2274 = vpop.permute.xlu0 %2273
  %v2275 = vsel %vm850, %v2268, %v2272
  %v2276 = vsel %vm850, %v2270, %v2274
  %v2277 = vsel %vm850, %v2272, %v2268
  %v2278 = vsel %vm850, %v2274, %v2270
  %v2279 = vld [vmem:[%s855] sm:$0x3]
  %v2281 = vperm.slane %v2279, 0
  %v2282 = vperm.slane %v2279, 1
  %v2285 = vmul.f32 %v2275, %v2281
  %v2286 = vmul.f32 %v2277, %v2282
  %v2287 = vmul.f32 %v2276, %v2281
  %v2288 = vmul.f32 %v2278, %v2282
  %v2289 = vld [vmem:[%s866] sm:$0xff]
  %v2290 = vld [vmem:[%s866 + $0x8] sm:$0xff]
  %v2291 = vld [vmem:[%s866 + $0x10] sm:$0xff]
  %v2292 = vld [vmem:[%s866 + $0x18] sm:$0xff]
  %v2294 = vsel %vm83, %v2289, 0
  %v2297 = vsel %vm83, %v2290, 0
  %v2300 = vsel %vm83, %v2291, 0
  %v2303 = vsel %vm83, %v2292, 0
  %2305 = vmatpush.msra.mxu0 0.0
  %2306 = vmatpush.msra.mxu0 0.0
  %2307 = vmatpush.msra.mxu0 0.0
  %2308 = vmatpush.msra.mxu0 0.0
  %2309 = vmatpush.msra.mxu0 0.0
  %2310 = vmatpush.msra.mxu0 0.0
  %2311 = vmatpush.msra.mxu0 0.0
  %2312 = vmatpush.msra.mxu0 0.0
  %2313 = vmatpush.msra.mxu0 0.0
  %2314 = vmatpush.msra.mxu0 0.0
  %2315 = vmatpush.msra.mxu0 0.0
  %2316 = vmatpush.msra.mxu0 0.0
  %2317 = vmatpush.msra.mxu0 0.0
  %2318 = vmatpush.msra.mxu0 0.0
  %2319 = vmatpush.msra.mxu0 %v2287
  %2320 = vmatpush.msra.mxu0 %v2285
  %2321 = vmatmul.f32.gmra.mxu0 %v2294
  %v2322 = vpop.f32.mrf.mxu0
  %v2323 = vadd.f32 0.0, %v2322
  %2324 = vmatmul.f32.gmra.mxu0 %v2297
  %v2325 = vpop.f32.mrf.mxu0
  %v2326 = vadd.f32 0.0, %v2325
  %2327 = vmatmul.f32.gmra.mxu0 %v2300
  %v2328 = vpop.f32.mrf.mxu0
  %v2329 = vadd.f32 0.0, %v2328
  %2330 = vmatmul.f32.gmra.mxu0 %v2303
  %v2331 = vpop.f32.mrf.mxu0
  %v2332 = vadd.f32 0.0, %v2331
  %2333 = vdwg.mxu0
  %2334 = vmatpush.msra.mxu0 0.0
  %2335 = vmatpush.msra.mxu0 0.0
  %2336 = vmatpush.msra.mxu0 0.0
  %2337 = vmatpush.msra.mxu0 0.0
  %2338 = vmatpush.msra.mxu0 0.0
  %2339 = vmatpush.msra.mxu0 0.0
  %2340 = vmatpush.msra.mxu0 0.0
  %2341 = vmatpush.msra.mxu0 0.0
  %2342 = vmatpush.msra.mxu0 0.0
  %2343 = vmatpush.msra.mxu0 0.0
  %2344 = vmatpush.msra.mxu0 0.0
  %2345 = vmatpush.msra.mxu0 0.0
  %2346 = vmatpush.msra.mxu0 0.0
  %2347 = vmatpush.msra.mxu0 0.0
  %2348 = vmatpush.msra.mxu0 %v2288
  %2349 = vmatpush.msra.mxu0 %v2286
  %2350 = vmatmul.f32.gmra.mxu0 %v2294
  %v2351 = vpop.f32.mrf.mxu0
  %v2352 = vadd.f32 0.0, %v2351
  %2353 = vmatmul.f32.gmra.mxu0 %v2297
  %v2354 = vpop.f32.mrf.mxu0
  %v2355 = vadd.f32 0.0, %v2354
  %2356 = vmatmul.f32.gmra.mxu0 %v2300
  %v2357 = vpop.f32.mrf.mxu0
  %v2358 = vadd.f32 0.0, %v2357
  %2359 = vmatmul.f32.gmra.mxu0 %v2303
  %v2360 = vpop.f32.mrf.mxu0
  %v2361 = vadd.f32 0.0, %v2360
  %2362 = vdwg.mxu0
  %v2363 = vadd.f32 %v2259, %v2323
  %v2364 = vadd.f32 %v2260, %v2352
  %v2365 = vadd.f32 %v2261, %v2326
  %v2366 = vadd.f32 %v2262, %v2355
  %v2367 = vadd.f32 %v2263, %v2329
  %v2368 = vadd.f32 %v2264, %v2358
  %v2369 = vadd.f32 %v2265, %v2332
  %v2370 = vadd.f32 %v2266, %v2361
  %v2371 = vadd.f32 %v2363, %v2364
  %2372 = vadd.xlane.f32.xlu0 %v2371
  %v2373 = vpop.xlane.xlu0 %2372
  %v2374 = vadd.f32 %v2365, %v2366
  %2375 = vadd.xlane.f32.xlu0 %v2374
  %v2376 = vpop.xlane.xlu0 %2375
  %v2377 = vadd.f32 %v2367, %v2368
  %2378 = vadd.xlane.f32.xlu0 %v2377
  %v2379 = vpop.xlane.xlu0 %2378
  %v2380 = vadd.f32 %v2369, %v2370
  %2381 = vadd.xlane.f32.xlu0 %v2380
  %v2382 = vpop.xlane.xlu0 %2381
  %v2383 = vadd.f32 %v2373, %v961
  %v2384 = vadd.f32 %v2376, %v962
  %v2385 = vadd.f32 %v2379, %v963
  %v2386 = vadd.f32 %v2382, %v964
  %v2387 = vsel %vm969, %v2383, 0.0
  %v2388 = vsel %vm969, %v2384, 0.0
  %v2389 = vadd.f32 %v2387, %v2388
  %v2390 = vrot.slane %v2389, 4
  %v2391 = vadd.f32 %v2389, %v2390
  %v2392 = vrot.slane %v2391, 2
  %v2393 = vadd.f32 %v2391, %v2392
  %v2394 = vrot.slane %v2393, 1
  %v2395 = vadd.f32 %v2393, %v2394
  %v2396 = vsel %vm969, %v2385, 0.0
  %v2397 = vsel %vm969, %v2386, 0.0
  %v2398 = vadd.f32 %v2396, %v2397
  %v2399 = vrot.slane %v2398, 4
  %v2400 = vadd.f32 %v2398, %v2399
  %v2401 = vrot.slane %v2400, 2
  %v2402 = vadd.f32 %v2400, %v2401
  %v2403 = vrot.slane %v2402, 1
  %v2404 = vadd.f32 %v2402, %v2403
  %v2405 = vmul.f32 %v2395, 0.00024414063
  %v2406 = vmul.f32 %v2404, 0.00024414063
  %v2407 = vsub.f32 %v2405, %v17
  %v2408 = vsub.f32 %v2405, %v18
  %v2409 = vsub.f32 %v2406, %v19
  %v2410 = vsub.f32 %v2406, %v20
  %2412 = vset.pattern.permute.xlu0 0
  %2413 = vperm.xlu0 %2412, %v2407
  %v2414 = vpop.permute.xlu0 %2413
  %2417 = vset.pattern.permute.xlu0 0
  %2418 = vperm.xlu0 %2417, %v2408
  %v2419 = vpop.permute.xlu0 %2418
  %2422 = vset.pattern.permute.xlu0 0
  %2423 = vperm.xlu0 %2422, %v2409
  %v2424 = vpop.permute.xlu0 %2423
  %2427 = vset.pattern.permute.xlu0 0
  %2428 = vperm.xlu0 %2427, %v2410
  %v2429 = vpop.permute.xlu0 %2428
  %v2431 = vsub.f32 %v2363, %v2414
  %v2432 = vsub.f32 %v2364, %v2414
  %v2433 = vsub.f32 %v2365, %v2419
  %v2434 = vsub.f32 %v2366, %v2419
  %v2435 = vsub.f32 %v2367, %v2424
  %v2436 = vsub.f32 %v2368, %v2424
  %v2437 = vsub.f32 %v2369, %v2429
  %v2438 = vsub.f32 %v2370, %v2429
  %v2439 = vmul.f32 %v2431, %v2431
  %v2440 = vmul.f32 %v2432, %v2432
  %v2441 = vmul.f32 %v2433, %v2433
  %v2442 = vmul.f32 %v2434, %v2434
  %v2443 = vmul.f32 %v2435, %v2435
  %v2444 = vmul.f32 %v2436, %v2436
  %v2445 = vmul.f32 %v2437, %v2437
  %v2446 = vmul.f32 %v2438, %v2438
  %v2447 = vadd.f32 %v2439, %v2440
  %2448 = vadd.xlane.f32.xlu0 %v2447
  %v2449 = vpop.xlane.xlu0 %2448
  %v2450 = vadd.f32 %v2441, %v2442
  %2451 = vadd.xlane.f32.xlu0 %v2450
  %v2452 = vpop.xlane.xlu0 %2451
  %v2453 = vadd.f32 %v2443, %v2444
  %2454 = vadd.xlane.f32.xlu0 %v2453
  %v2455 = vpop.xlane.xlu0 %2454
  %v2456 = vadd.f32 %v2445, %v2446
  %2457 = vadd.xlane.f32.xlu0 %v2456
  %v2458 = vpop.xlane.xlu0 %2457
  %v2459 = vadd.f32 %v2449, %v2452
  %v2460 = vrot.slane %v2459, 4
  %v2461 = vadd.f32 %v2459, %v2460
  %v2462 = vrot.slane %v2461, 2
  %v2463 = vadd.f32 %v2461, %v2462
  %v2464 = vrot.slane %v2463, 1
  %v2465 = vadd.f32 %v2463, %v2464
  %v2466 = vadd.f32 %v2455, %v2458
  %v2467 = vrot.slane %v2466, 4
  %v2468 = vadd.f32 %v2466, %v2467
  %v2469 = vrot.slane %v2468, 2
  %v2470 = vadd.f32 %v2468, %v2469
  %v2471 = vrot.slane %v2470, 1
  %v2472 = vadd.f32 %v2470, %v2471
  %v2473 = vmul.f32 %v2465, 0.00024414063
  %v2474 = vmul.f32 %v2472, 0.00024414063
  %v2475 = vadd.f32 %v2473, 1e-05
  %v2476 = vadd.f32 %v2474, 1e-05
  %v2477 = vrsqrt.pop %v2475
  %v2478 = vmul.f32 %v2477, %v2475
  %v2479 = vmul.f32 %v2478, %v2477
  %v2480 = vmul.f32 0.5, %v2479
  %v2481 = vsub.f32 1.5, %v2480
  %v2482 = vmul.f32 %v2477, %v2481
  %vm2483 = vweird.f32 %v2475
  %vm2484 = vweird.f32 %v2477
  %vm2485 = vmor %vm2483, %vm2484
  %v2486 = vsel %vm2485, %v2477, %v2482
  %v2487 = vrsqrt.pop %v2476
  %v2488 = vmul.f32 %v2487, %v2476
  %v2489 = vmul.f32 %v2488, %v2487
  %v2490 = vmul.f32 0.5, %v2489
  %v2491 = vsub.f32 1.5, %v2490
  %v2492 = vmul.f32 %v2487, %v2491
  %vm2493 = vweird.f32 %v2476
  %vm2494 = vweird.f32 %v2487
  %vm2495 = vmor %vm2493, %vm2494
  %v2496 = vsel %vm2495, %v2487, %v2492
  %v2497 = vmul.f32 %v2486, %v17
  %v2498 = vmul.f32 %v2486, %v18
  %v2499 = vmul.f32 %v2496, %v19
  %v2500 = vmul.f32 %v2496, %v20
  %2502 = vset.pattern.permute.xlu0 1
  %2503 = vperm.xlu0 %2502, %v2497
  %v2504 = vpop.permute.xlu0 %2503
  %2507 = vset.pattern.permute.xlu0 1
  %2508 = vperm.xlu0 %2507, %v2498
  %v2509 = vpop.permute.xlu0 %2508
  %2512 = vset.pattern.permute.xlu0 1
  %2513 = vperm.xlu0 %2512, %v2499
  %v2514 = vpop.permute.xlu0 %2513
  %2517 = vset.pattern.permute.xlu0 1
  %2518 = vperm.xlu0 %2517, %v2500
  %v2519 = vpop.permute.xlu0 %2518
  %v2521 = vmul.f32 %v2431, %v2504
  %v2522 = vmul.f32 %v2432, %v2504
  %v2523 = vmul.f32 %v2433, %v2509
  %v2524 = vmul.f32 %v2434, %v2509
  %v2525 = vmul.f32 %v2435, %v2514
  %v2526 = vmul.f32 %v2436, %v2514
  %v2527 = vmul.f32 %v2437, %v2519
  %v2528 = vmul.f32 %v2438, %v2519
  %v2529 = vadd.f32 %v2521, %v1115
  %v2530 = vadd.f32 %v2522, %v1115
  %v2531 = vadd.f32 %v2523, %v1120
  %v2532 = vadd.f32 %v2524, %v1120
  %v2533 = vadd.f32 %v2525, %v1125
  %v2534 = vadd.f32 %v2526, %v1125
  %v2535 = vadd.f32 %v2527, %v1130
  %v2536 = vadd.f32 %v2528, %v1130
  %v2537 = vmul.f32 %v2529, 0.5
  %v2538 = vmul.f32 %v2530, 0.5
  %v2539 = vmul.f32 %v2531, 0.5
  %v2540 = vmul.f32 %v2532, 0.5
  %v2541 = vmul.f32 %v2533, 0.5
  %v2542 = vmul.f32 %v2534, 0.5
  %v2543 = vmul.f32 %v2535, 0.5
  %v2544 = vmul.f32 %v2536, 0.5
  %v2545 = vmul.f32 %v2529, 0.70710677
  %v2546 = vmul.f32 %v2530, 0.70710677
  %v2547 = vmul.f32 %v2531, 0.70710677
  %v2548 = vmul.f32 %v2532, 0.70710677
  %v2549 = vmul.f32 %v2533, 0.70710677
  %v2550 = vmul.f32 %v2534, 0.70710677
  %v2551 = vmul.f32 %v2535, 0.70710677
  %v2552 = vmul.f32 %v2536, 0.70710677
  %vm2553 = vcmp.ge.f32.partialorder %v2545, 0.0
  %vm2554 = vcmp.ge.f32.partialorder %v2546, 0.0
  %vm2555 = vcmp.ge.f32.partialorder %v2547, 0.0
  %vm2556 = vcmp.ge.f32.partialorder %v2548, 0.0
  %vm2557 = vcmp.ge.f32.partialorder %v2549, 0.0
  %vm2558 = vcmp.ge.f32.partialorder %v2550, 0.0
  %vm2559 = vcmp.ge.f32.partialorder %v2551, 0.0
  %vm2560 = vcmp.ge.f32.partialorder %v2552, 0.0
  %v2561 = vsel %vm2553, 1.0, -1.0
  %v2562 = vsel %vm2554, 1.0, -1.0
  %v2563 = vsel %vm2555, 1.0, -1.0
  %v2564 = vsel %vm2556, 1.0, -1.0
  %v2565 = vsel %vm2557, 1.0, -1.0
  %v2566 = vsel %vm2558, 1.0, -1.0
  %v2567 = vsel %vm2559, 1.0, -1.0
  %v2568 = vsel %vm2560, 1.0, -1.0
  %v2569 = vand.u32 2147483647, %v2545
  %v2570 = vand.u32 2147483647, %v2546
  %v2571 = vand.u32 2147483647, %v2547
  %v2572 = vand.u32 2147483647, %v2548
  %v2573 = vand.u32 2147483647, %v2549
  %v2574 = vand.u32 2147483647, %v2550
  %v2575 = vand.u32 2147483647, %v2551
  %v2576 = vand.u32 2147483647, %v2552
  %v2577 = vmul.f32 %v2569, 0.3275911
  %v2578 = vmul.f32 %v2570, 0.3275911
  %v2579 = vmul.f32 %v2571, 0.3275911
  %v2580 = vmul.f32 %v2572, 0.3275911
  %v2581 = vmul.f32 %v2573, 0.3275911
  %v2582 = vmul.f32 %v2574, 0.3275911
  %v2583 = vmul.f32 %v2575, 0.3275911
  %v2584 = vmul.f32 %v2576, 0.3275911
  %v2585 = vadd.f32 %v2577, 1.0
  %v2586 = vadd.f32 %v2578, 1.0
  %v2587 = vadd.f32 %v2579, 1.0
  %v2588 = vadd.f32 %v2580, 1.0
  %v2589 = vadd.f32 %v2581, 1.0
  %v2590 = vadd.f32 %v2582, 1.0
  %v2591 = vadd.f32 %v2583, 1.0
  %v2592 = vadd.f32 %v2584, 1.0
  %v2593 = vrcp.pop %v2585
  %v2594 = vmul.f32 %v2585, %v2593
  %v2595 = vsub.f32 1.0, %v2594
  %v2596 = vmul.f32 %v2593, %v2595
  %v2597 = vadd.f32 %v2593, %v2596
  %vm2598 = vweird.f32 %v2585
  %vm2599 = vweird.f32 %v2593
  %vm2600 = vmor %vm2598, %vm2599
  %v2601 = vsel %vm2600, %v2593, %v2597
  %v2602 = vand.u32 2147483647, %v2585
  %vm2603 = vcmp.eq.f32.partialorder %v2602, 8.507059e+37
  %v2604 = vand.u32 %v2585, 2147483648
  %v2605 = vor.u32 1.1754944e-38, %v2604
  %v2606 = vsel %vm2603, %v2605, %v2601
  %v2607 = vmul.f32 1.0, %v2606
  %v2608 = vrcp.pop %v2586
  %v2609 = vmul.f32 %v2586, %v2608
  %v2610 = vsub.f32 1.0, %v2609
  %v2611 = vmul.f32 %v2608, %v2610
  %v2612 = vadd.f32 %v2608, %v2611
  %vm2613 = vweird.f32 %v2586
  %vm2614 = vweird.f32 %v2608
  %vm2615 = vmor %vm2613, %vm2614
  %v2616 = vsel %vm2615, %v2608, %v2612
  %v2617 = vand.u32 2147483647, %v2586
  %vm2618 = vcmp.eq.f32.partialorder %v2617, 8.507059e+37
  %v2619 = vand.u32 %v2586, 2147483648
  %v2620 = vor.u32 1.1754944e-38, %v2619
  %v2621 = vsel %vm2618, %v2620, %v2616
  %v2622 = vmul.f32 1.0, %v2621
  %v2623 = vrcp.pop %v2587
  %v2624 = vmul.f32 %v2587, %v2623
  %v2625 = vsub.f32 1.0, %v2624
  %v2626 = vmul.f32 %v2623, %v2625
  %v2627 = vadd.f32 %v2623, %v2626
  %vm2628 = vweird.f32 %v2587
  %vm2629 = vweird.f32 %v2623
  %vm2630 = vmor %vm2628, %vm2629
  %v2631 = vsel %vm2630, %v2623, %v2627
  %v2632 = vand.u32 2147483647, %v2587
  %vm2633 = vcmp.eq.f32.partialorder %v2632, 8.507059e+37
  %v2634 = vand.u32 %v2587, 2147483648
  %v2635 = vor.u32 1.1754944e-38, %v2634
  %v2636 = vsel %vm2633, %v2635, %v2631
  %v2637 = vmul.f32 1.0, %v2636
  %v2638 = vrcp.pop %v2588
  %v2639 = vmul.f32 %v2588, %v2638
  %v2640 = vsub.f32 1.0, %v2639
  %v2641 = vmul.f32 %v2638, %v2640
  %v2642 = vadd.f32 %v2638, %v2641
  %vm2643 = vweird.f32 %v2588
  %vm2644 = vweird.f32 %v2638
  %vm2645 = vmor %vm2643, %vm2644
  %v2646 = vsel %vm2645, %v2638, %v2642
  %v2647 = vand.u32 2147483647, %v2588
  %vm2648 = vcmp.eq.f32.partialorder %v2647, 8.507059e+37
  %v2649 = vand.u32 %v2588, 2147483648
  %v2650 = vor.u32 1.1754944e-38, %v2649
  %v2651 = vsel %vm2648, %v2650, %v2646
  %v2652 = vmul.f32 1.0, %v2651
  %v2653 = vrcp.pop %v2589
  %v2654 = vmul.f32 %v2589, %v2653
  %v2655 = vsub.f32 1.0, %v2654
  %v2656 = vmul.f32 %v2653, %v2655
  %v2657 = vadd.f32 %v2653, %v2656
  %vm2658 = vweird.f32 %v2589
  %vm2659 = vweird.f32 %v2653
  %vm2660 = vmor %vm2658, %vm2659
  %v2661 = vsel %vm2660, %v2653, %v2657
  %v2662 = vand.u32 2147483647, %v2589
  %vm2663 = vcmp.eq.f32.partialorder %v2662, 8.507059e+37
  %v2664 = vand.u32 %v2589, 2147483648
  %v2665 = vor.u32 1.1754944e-38, %v2664
  %v2666 = vsel %vm2663, %v2665, %v2661
  %v2667 = vmul.f32 1.0, %v2666
  %v2668 = vrcp.pop %v2590
  %v2669 = vmul.f32 %v2590, %v2668
  %v2670 = vsub.f32 1.0, %v2669
  %v2671 = vmul.f32 %v2668, %v2670
  %v2672 = vadd.f32 %v2668, %v2671
  %vm2673 = vweird.f32 %v2590
  %vm2674 = vweird.f32 %v2668
  %vm2675 = vmor %vm2673, %vm2674
  %v2676 = vsel %vm2675, %v2668, %v2672
  %v2677 = vand.u32 2147483647, %v2590
  %vm2678 = vcmp.eq.f32.partialorder %v2677, 8.507059e+37
  %v2679 = vand.u32 %v2590, 2147483648
  %v2680 = vor.u32 1.1754944e-38, %v2679
  %v2681 = vsel %vm2678, %v2680, %v2676
  %v2682 = vmul.f32 1.0, %v2681
  %v2683 = vrcp.pop %v2591
  %v2684 = vmul.f32 %v2591, %v2683
  %v2685 = vsub.f32 1.0, %v2684
  %v2686 = vmul.f32 %v2683, %v2685
  %v2687 = vadd.f32 %v2683, %v2686
  %vm2688 = vweird.f32 %v2591
  %vm2689 = vweird.f32 %v2683
  %vm2690 = vmor %vm2688, %vm2689
  %v2691 = vsel %vm2690, %v2683, %v2687
  %v2692 = vand.u32 2147483647, %v2591
  %vm2693 = vcmp.eq.f32.partialorder %v2692, 8.507059e+37
  %v2694 = vand.u32 %v2591, 2147483648
  %v2695 = vor.u32 1.1754944e-38, %v2694
  %v2696 = vsel %vm2693, %v2695, %v2691
  %v2697 = vmul.f32 1.0, %v2696
  %v2698 = vrcp.pop %v2592
  %v2699 = vmul.f32 %v2592, %v2698
  %v2700 = vsub.f32 1.0, %v2699
  %v2701 = vmul.f32 %v2698, %v2700
  %v2702 = vadd.f32 %v2698, %v2701
  %vm2703 = vweird.f32 %v2592
  %vm2704 = vweird.f32 %v2698
  %vm2705 = vmor %vm2703, %vm2704
  %v2706 = vsel %vm2705, %v2698, %v2702
  %v2707 = vand.u32 2147483647, %v2592
  %vm2708 = vcmp.eq.f32.partialorder %v2707, 8.507059e+37
  %v2709 = vand.u32 %v2592, 2147483648
  %v2710 = vor.u32 1.1754944e-38, %v2709
  %v2711 = vsel %vm2708, %v2710, %v2706
  %v2712 = vmul.f32 1.0, %v2711
  %v2713 = vmul.f32 %v2607, 1.0614054
  %v2714 = vmul.f32 %v2622, 1.0614054
  %v2715 = vmul.f32 %v2637, 1.0614054
  %v2716 = vmul.f32 %v2652, 1.0614054
  %v2717 = vmul.f32 %v2667, 1.0614054
  %v2718 = vmul.f32 %v2682, 1.0614054
  %v2719 = vmul.f32 %v2697, 1.0614054
  %v2720 = vmul.f32 %v2712, 1.0614054
  %v2721 = vadd.f32 %v2713, -1.4531521
  %v2722 = vadd.f32 %v2714, -1.4531521
  %v2723 = vadd.f32 %v2715, -1.4531521
  %v2724 = vadd.f32 %v2716, -1.4531521
  %v2725 = vadd.f32 %v2717, -1.4531521
  %v2726 = vadd.f32 %v2718, -1.4531521
  %v2727 = vadd.f32 %v2719, -1.4531521
  %v2728 = vadd.f32 %v2720, -1.4531521
  %v2729 = vmul.f32 %v2721, %v2607
  %v2730 = vmul.f32 %v2722, %v2622
  %v2731 = vmul.f32 %v2723, %v2637
  %v2732 = vmul.f32 %v2724, %v2652
  %v2733 = vmul.f32 %v2725, %v2667
  %v2734 = vmul.f32 %v2726, %v2682
  %v2735 = vmul.f32 %v2727, %v2697
  %v2736 = vmul.f32 %v2728, %v2712
  %v2737 = vadd.f32 %v2729, 1.4214138
  %v2738 = vadd.f32 %v2730, 1.4214138
  %v2739 = vadd.f32 %v2731, 1.4214138
  %v2740 = vadd.f32 %v2732, 1.4214138
  %v2741 = vadd.f32 %v2733, 1.4214138
  %v2742 = vadd.f32 %v2734, 1.4214138
  %v2743 = vadd.f32 %v2735, 1.4214138
  %v2744 = vadd.f32 %v2736, 1.4214138
  %v2745 = vmul.f32 %v2737, %v2607
  %v2746 = vmul.f32 %v2738, %v2622
  %v2747 = vmul.f32 %v2739, %v2637
  %v2748 = vmul.f32 %v2740, %v2652
  %v2749 = vmul.f32 %v2741, %v2667
  %v2750 = vmul.f32 %v2742, %v2682
  %v2751 = vmul.f32 %v2743, %v2697
  %v2752 = vmul.f32 %v2744, %v2712
  %v2753 = vadd.f32 %v2745, -0.28449672
  %v2754 = vadd.f32 %v2746, -0.28449672
  %v2755 = vadd.f32 %v2747, -0.28449672
  %v2756 = vadd.f32 %v2748, -0.28449672
  %v2757 = vadd.f32 %v2749, -0.28449672
  %v2758 = vadd.f32 %v2750, -0.28449672
  %v2759 = vadd.f32 %v2751, -0.28449672
  %v2760 = vadd.f32 %v2752, -0.28449672
  %v2761 = vmul.f32 %v2753, %v2607
  %v2762 = vmul.f32 %v2754, %v2622
  %v2763 = vmul.f32 %v2755, %v2637
  %v2764 = vmul.f32 %v2756, %v2652
  %v2765 = vmul.f32 %v2757, %v2667
  %v2766 = vmul.f32 %v2758, %v2682
  %v2767 = vmul.f32 %v2759, %v2697
  %v2768 = vmul.f32 %v2760, %v2712
  %v2769 = vadd.f32 %v2761, 0.2548296
  %v2770 = vadd.f32 %v2762, 0.2548296
  %v2771 = vadd.f32 %v2763, 0.2548296
  %v2772 = vadd.f32 %v2764, 0.2548296
  %v2773 = vadd.f32 %v2765, 0.2548296
  %v2774 = vadd.f32 %v2766, 0.2548296
  %v2775 = vadd.f32 %v2767, 0.2548296
  %v2776 = vadd.f32 %v2768, 0.2548296
  %v2777 = vmul.f32 %v2769, %v2607
  %v2778 = vmul.f32 %v2770, %v2622
  %v2779 = vmul.f32 %v2771, %v2637
  %v2780 = vmul.f32 %v2772, %v2652
  %v2781 = vmul.f32 %v2773, %v2667
  %v2782 = vmul.f32 %v2774, %v2682
  %v2783 = vmul.f32 %v2775, %v2697
  %v2784 = vmul.f32 %v2776, %v2712
  %v2785 = vsub.f32 0.0, %v2569
  %v2786 = vsub.f32 0.0, %v2570
  %v2787 = vsub.f32 0.0, %v2571
  %v2788 = vsub.f32 0.0, %v2572
  %v2789 = vsub.f32 0.0, %v2573
  %v2790 = vsub.f32 0.0, %v2574
  %v2791 = vsub.f32 0.0, %v2575
  %v2792 = vsub.f32 0.0, %v2576
  %v2793 = vmul.f32 %v2785, %v2569
  %v2794 = vmul.f32 %v2786, %v2570
  %v2795 = vmul.f32 %v2787, %v2571
  %v2796 = vmul.f32 %v2788, %v2572
  %v2797 = vmul.f32 %v2789, %v2573
  %v2798 = vmul.f32 %v2790, %v2574
  %v2799 = vmul.f32 %v2791, %v2575
  %v2800 = vmul.f32 %v2792, %v2576
  %v2801 = vmul.f32 %v2793, 1.442695
  %v2802 = vpow.pop %v2801
  %v2803 = vmul.f32 %v2794, 1.442695
  %v2804 = vpow.pop %v2803
  %v2805 = vmul.f32 %v2795, 1.442695
  %v2806 = vpow.pop %v2805
  %v2807 = vmul.f32 %v2796, 1.442695
  %v2808 = vpow.pop %v2807
  %v2809 = vmul.f32 %v2797, 1.442695
  %v2810 = vpow.pop %v2809
  %v2811 = vmul.f32 %v2798, 1.442695
  %v2812 = vpow.pop %v2811
  %v2813 = vmul.f32 %v2799, 1.442695
  %v2814 = vpow.pop %v2813
  %v2815 = vmul.f32 %v2800, 1.442695
  %v2816 = vpow.pop %v2815
  %v2817 = vmul.f32 %v2777, %v2802
  %v2818 = vmul.f32 %v2778, %v2804
  %v2819 = vmul.f32 %v2779, %v2806
  %v2820 = vmul.f32 %v2780, %v2808
  %v2821 = vmul.f32 %v2781, %v2810
  %v2822 = vmul.f32 %v2782, %v2812
  %v2823 = vmul.f32 %v2783, %v2814
  %v2824 = vmul.f32 %v2784, %v2816
  %v2825 = vsub.f32 1.0, %v2817
  %v2826 = vsub.f32 1.0, %v2818
  %v2827 = vsub.f32 1.0, %v2819
  %v2828 = vsub.f32 1.0, %v2820
  %v2829 = vsub.f32 1.0, %v2821
  %v2830 = vsub.f32 1.0, %v2822
  %v2831 = vsub.f32 1.0, %v2823
  %v2832 = vsub.f32 1.0, %v2824
  %v2833 = vmul.f32 %v2561, %v2825
  %v2834 = vmul.f32 %v2562, %v2826
  %v2835 = vmul.f32 %v2563, %v2827
  %v2836 = vmul.f32 %v2564, %v2828
  %v2837 = vmul.f32 %v2565, %v2829
  %v2838 = vmul.f32 %v2566, %v2830
  %v2839 = vmul.f32 %v2567, %v2831
  %v2840 = vmul.f32 %v2568, %v2832
  %v2841 = vadd.f32 %v2833, 1.0
  %v2842 = vadd.f32 %v2834, 1.0
  %v2843 = vadd.f32 %v2835, 1.0
  %v2844 = vadd.f32 %v2836, 1.0
  %v2845 = vadd.f32 %v2837, 1.0
  %v2846 = vadd.f32 %v2838, 1.0
  %v2847 = vadd.f32 %v2839, 1.0
  %v2848 = vadd.f32 %v2840, 1.0
  %v2849 = vmul.f32 %v2537, %v2841
  %v2850 = vmul.f32 %v2538, %v2842
  %v2851 = vmul.f32 %v2539, %v2843
  %v2852 = vmul.f32 %v2540, %v2844
  %v2853 = vmul.f32 %v2541, %v2845
  %v2854 = vmul.f32 %v2542, %v2846
  %v2855 = vmul.f32 %v2543, %v2847
  %v2856 = vmul.f32 %v2544, %v2848
  %s2857 = scalar_lea.vmem %s4, 64
  %2858 = vst [vmem:[%s2857] sm:$0xff] %v2849
  %2859 = vst [vmem:[%s2857 + $0x8] sm:$0xff] %v2850
  %2860 = vst [vmem:[%s2857 + $0x10] sm:$0xff] %v2851
  %2861 = vst [vmem:[%s2857 + $0x18] sm:$0xff] %v2852
  %2862 = vst [vmem:[%s2857 + $0x20] sm:$0xff] %v2853
  %2863 = vst [vmem:[%s2857 + $0x28] sm:$0xff] %v2854
  %2864 = vst [vmem:[%s2857 + $0x30] sm:$0xff] %v2855
  %2865 = vst [vmem:[%s2857 + $0x38] sm:$0xff] %v2856
  // Predicated region
  $region18: #{_conv_forward_impl.1} parent=0 // pred_check
    _
  $region19: #{_conv_forward_impl.1} parent=0 // pred_check_branch
    %2867 = sbr.rel (0) target = $region21
  $region20: #{_conv_forward_impl.1} parent=0 // pred_region
    _
  $region21: #{_conv_forward_impl.1} parent=0 // pred_fallthru
    _
  // Predicated region
  $region22: #{_conv_forward_impl.1} parent=0 // pred_check
    _
  $region23: #{_conv_forward_impl.1} parent=0 // pred_check_branch
    %2869 = sbr.rel (0) target = $region25
  $region24: #{_conv_forward_impl.1} parent=0 // pred_region
    _
  $region25: #{_conv_forward_impl.1} parent=0 // pred_fallthru
    _

</llo_original>
